<compile_context>
chip_gen: v6e
topology: v6e:2x2x1
jax: 0.10.0
libtpu: 0.0.40
codegen_flags: <defaults>
</compile_context>

<pallas_src>
import functools

import jax
import jax.numpy as jnp
import numpy as np
from jax.experimental import pallas as pl
from jax.experimental.pallas import tpu as pltpu

EPS = 1e-5
EXPANSION = 4
LANE = 128


def _round_up(x, m):
    return (x + m - 1) // m * m


@functools.lru_cache(maxsize=1)
def _hw_budget():
    """(m_tile_target, vmem_limit_bytes) picked per TPU generation."""
    vmem_phys = 64 * 1024 * 1024
    try:
        info = pltpu.get_tpu_info()
        vmem_phys = int(getattr(info, "vmem_capacity_bytes", vmem_phys))
    except Exception:
        pass
    if vmem_phys >= 96 * 1024 * 1024:      # v5e / v6e: 128 MiB physical VMEM
        return 1024, 96 * 1024 * 1024
    return 512, 32 * 1024 * 1024           # v7x: 64 MiB physical VMEM


def _pick_m_tile(m):
    """Largest tile <= target that divides m and is a multiple of 8."""
    # TODO(synk): ragged M (not a multiple of 8) would need masked tail tiles.
    assert m % 8 == 0, "M = N*H*W must be a multiple of 8"
    target, _ = _hw_budget()
    t = min(target, m)
    t -= t % 8
    while t > 8 and m % t:
        t -= 8
    return t


# ---------------------------------------------------------------------------
# Pallas kernels
# ---------------------------------------------------------------------------
def _emit_packed_stats(y_f32, stats_ref):
    # Per-tile partial BN statistics packed into ONE full (8, C) block:
    # sublanes 0-3 hold sum(y), sublanes 4-7 hold sum(y*y).  Single unmasked
    # store per tile; reduced across tiles in cheap JAX glue.
    c = y_f32.shape[-1]
    s = jnp.sum(y_f32, axis=0, keepdims=True)
    ss = jnp.sum(y_f32 * y_f32, axis=0, keepdims=True)
    stats_ref[0] = jnp.concatenate(
        [jnp.broadcast_to(s, (4, c)), jnp.broadcast_to(ss, (4, c))], axis=0)


def mm_stats_kernel(x_ref, w_ref, y_ref, stats_ref):
    # conv1 (1x1): y = x @ w (bf16 operands, f32 accumulate).  The slab that
    # goes back to HBM is bf16; BN partial stats come from the f32 accumulator
    # before the cast, so stats precision is unaffected.
    y = jnp.dot(x_ref[...], w_ref[...], preferred_element_type=jnp.float32)
    y_ref[...] = y.astype(y_ref.dtype)
    _emit_packed_stats(y, stats_ref)


def bnrelu_mm_stats_kernel(scale_ref, shift_ref, x_ref, w_ref, y_ref,
                           stats_ref):
    # conv3 (1x1) with the previous stage's folded BN + ReLU fused on the
    # (bf16) input read.
    h = jnp.maximum(x_ref[...] * scale_ref[...] + shift_ref[...], 0.0)
    y = jnp.dot(h.astype(jnp.bfloat16), w_ref[...],
                preferred_element_type=jnp.float32)
    y_ref[...] = y.astype(y_ref.dtype)
    _emit_packed_stats(y, stats_ref)


def conv3x3_kernel(scale_ref, shift_ref, y1_ref, w_ref, y2_ref, stats_ref):
    # conv2 (3x3, pad=1, stride=1), one image per grid step.  BN1+ReLU is
    # applied on the fly, the image is zero-padded in VMEM, and the conv is
    # 3 accumulated (H*W, 3C) x (3C, C) MXU matmuls: the 3 kw taps are fused
    # along K, filling the 256-deep MXU on v6e/v7x and cutting the number of
    # matmuls / accumulator sweeps / patch materializations 3x vs 9 taps.
    _, H, W, C = y1_ref.shape
    scale = scale_ref[...].reshape(1, 1, C)
    shift = shift_ref[...].reshape(1, 1, C)
    h = jnp.maximum(y1_ref[0] * scale + shift, 0.0).astype(jnp.bfloat16)

    zc = jnp.zeros((H, 1, C), jnp.bfloat16)
    hp = jnp.concatenate([zc, h, zc], axis=1)          # (H, W+2, C)
    zr = jnp.zeros((1, W + 2, C), jnp.bfloat16)
    hp = jnp.concatenate([zr, hp, zr], axis=0)         # (H+2, W+2, C)

    # TODO(synk): for real ResNet H*W (56^2+) on v7x, tile by output rows with
    # a halo (manual DMA of a row strip) instead of one whole image per step.
    acc = jnp.zeros((H * W, C), jnp.float32)
    for kh in range(3):
        rows = hp[kh:kh + H]                           # (H, W+2, C)
        patch = jnp.concatenate(
            [rows[:, 0:W], rows[:, 1:W + 1], rows[:, 2:W + 2]],
            axis=-1).reshape(H * W, 3 * C)             # (H*W, 3C)
        acc = acc + jnp.dot(patch, w_ref[kh],
                            preferred_element_type=jnp.float32)
    y2_ref[...] = acc.astype(y2_ref.dtype)
    _emit_packed_stats(acc, stats_ref)


def bn_add_relu_kernel(scale_ref, shift_ref, y_ref, id_ref, o_ref):
    # Finalize: BN3 (folded) + residual add + ReLU.  y3 / identity arrive as
    # bf16 slabs; the math is carried out in f32.
    y = y_ref[...].astype(jnp.float32)
    ident = id_ref[...].astype(jnp.float32)
    o_ref[...] = jnp.maximum(y * scale_ref[...] + shift_ref[...] + ident, 0.0)


# ---------------------------------------------------------------------------
# pallas_call wrappers
# ---------------------------------------------------------------------------
def _cparams():
    _, vmem_limit = _hw_budget()
    return pltpu.CompilerParams(dimension_semantics=("parallel",),
                                vmem_limit_bytes=vmem_limit)


def _vec_spec(c):
    # TODO(synk): grid-constant operands (scale/shift/weights) could be
    # single-buffered (pipeline_mode=pl.Buffered(1)) to save VMEM on v7x.
    return pl.BlockSpec((1, c), lambda i: (0, 0))


def _stats_out(n_blocks, c):
    return (jax.ShapeDtypeStruct((n_blocks, 8, c), jnp.float32),
            pl.BlockSpec((1, 8, c), lambda i: (i, 0, 0)))


def _mm_stats(x, w, tm):
    m, k = x.shape
    c = w.shape[1]
    nt = m // tm
    st_shape, st_spec = _stats_out(nt, c)
    return pl.pallas_call(
        mm_stats_kernel,
        out_shape=(jax.ShapeDtypeStruct((m, c), jnp.bfloat16), st_shape),
        grid_spec=pltpu.PrefetchScalarGridSpec(
            num_scalar_prefetch=0, grid=(nt,),
            in_specs=[pl.BlockSpec((tm, k), lambda i: (i, 0)),
                      pl.BlockSpec((k, c), lambda i: (0, 0))],
            out_specs=(pl.BlockSpec((tm, c), lambda i: (i, 0)), st_spec)),
        compiler_params=_cparams(),
    )(x, w)


def _bnrelu_mm_stats(scale, shift, x, w, tm):
    m, k = x.shape
    c = w.shape[1]
    nt = m // tm
    st_shape, st_spec = _stats_out(nt, c)
    return pl.pallas_call(
        bnrelu_mm_stats_kernel,
        out_shape=(jax.ShapeDtypeStruct((m, c), jnp.bfloat16), st_shape),
        grid_spec=pltpu.PrefetchScalarGridSpec(
            num_scalar_prefetch=0, grid=(nt,),
            in_specs=[_vec_spec(k), _vec_spec(k),
                      pl.BlockSpec((tm, k), lambda i: (i, 0)),
                      pl.BlockSpec((k, c), lambda i: (0, 0))],
            out_specs=(pl.BlockSpec((tm, c), lambda i: (i, 0)), st_spec)),
        compiler_params=_cparams(),
    )(scale, shift, x, w)


def _conv3x3(scale, shift, y1_img, w2_k):
    # w2_k: (3, 3*C, C) — kw folded into the contraction dimension.
    n, h, w, c = y1_img.shape
    m2 = n * h * w
    st_shape, st_spec = _stats_out(n, c)
    return pl.pallas_call(
        conv3x3_kernel,
        out_shape=(jax.ShapeDtypeStruct((m2, c), jnp.bfloat16), st_shape),
        grid_spec=pltpu.PrefetchScalarGridSpec(
            num_scalar_prefetch=0, grid=(n,),
            in_specs=[_vec_spec(c), _vec_spec(c),
                      pl.BlockSpec((1, h, w, c), lambda i: (i, 0, 0, 0)),
                      pl.BlockSpec((3, 3 * c, c), lambda i: (0, 0, 0))],
            out_specs=(pl.BlockSpec((h * w, c), lambda i: (i, 0)), st_spec)),
        compiler_params=_cparams(),
    )(scale, shift, y1_img, w2_k)


def _bn_add_relu(scale, shift, y, identity, tm):
    m, c = y.shape
    nt = m // tm
    return pl.pallas_call(
        bn_add_relu_kernel,
        out_shape=jax.ShapeDtypeStruct((m, c), jnp.float32),
        grid_spec=pltpu.PrefetchScalarGridSpec(
            num_scalar_prefetch=0, grid=(nt,),
            in_specs=[_vec_spec(c), _vec_spec(c),
                      pl.BlockSpec((tm, c), lambda i: (i, 0)),
                      pl.BlockSpec((tm, c), lambda i: (i, 0))],
            out_specs=pl.BlockSpec((tm, c), lambda i: (i, 0))),
        compiler_params=_cparams(),
    )(scale, shift, y, identity)


# ---------------------------------------------------------------------------
# JAX glue
# ---------------------------------------------------------------------------
def _fold_bn(stats, gamma, beta, count):
    # Reduce packed per-tile partials (sum in sublane 0, ssq in sublane 4) and
    # fold BN into a single per-channel scale/shift.
    s = jnp.sum(stats[:, 0, :], axis=0)
    ss = jnp.sum(stats[:, 4, :], axis=0)
    mean = s / count
    var = jnp.maximum(ss / count - mean * mean, 0.0)
    scale = gamma.reshape(-1) * jax.lax.rsqrt(var + EPS)
    shift = beta.reshape(-1) - mean * scale
    return scale.reshape(1, -1), shift.reshape(1, -1)


def _pad_last(a, target):
    pad = target - a.shape[-1]
    if pad == 0:
        return a
    widths = [(0, 0)] * (a.ndim - 1) + [(0, pad)]
    return jnp.pad(a, widths)


def init_params(key, in_channels, out_channels):
    # NOTE: conv biases omitted — they cancel exactly under training-mode BN.
    c1 = out_channels
    c3 = out_channels * EXPANSION
    ks = jax.random.split(key, 9)

    def w_init(k, shape, fan_in):
        return jax.random.normal(k, shape, jnp.float32) / np.sqrt(fan_in)

    p = {}
    p["w1"] = w_init(ks[0], (in_channels, c1), in_channels)
    p["g1"] = 1.0 + 0.1 * jax.random.normal(ks[1], (c1,), jnp.float32)
    p["bt1"] = 0.1 * jax.random.normal(ks[2], (c1,), jnp.float32)
    p["w2"] = w_init(ks[3], (3, 3, c1, c1), 9 * c1)
    p["g2"] = 1.0 + 0.1 * jax.random.normal(ks[4], (c1,), jnp.float32)
    p["bt2"] = 0.1 * jax.random.normal(ks[5], (c1,), jnp.float32)
    p["w3"] = w_init(ks[6], (c1, c3), c1)
    p["g3"] = 1.0 + 0.1 * jax.random.normal(ks[7], (c3,), jnp.float32)
    p["bt3"] = 0.1 * jax.random.normal(ks[8], (c3,), jnp.float32)
    return p


def bottleneck_forward(x_nchw, params, stride=1):
    # TODO(synk): i_downsample is None here; the identity skip requires
    # stride == 1 and in_channels == out_channels * expansion.  A strided
    # conv2 / downsample path is not implemented.
    assert stride == 1
    n, cin, h, w = x_nchw.shape
    c1 = params["w1"].shape[1]
    c3 = params["w3"].shape[1]
    assert cin == c3

    cin_p = _round_up(cin, LANE)
    c1_p = _round_up(c1, LANE)
    c3_p = _round_up(c3, LANE)
    assert cin_p == c3_p
    m = n * h * w
    tm = _pick_m_tile(m)

    # NCHW -> NHWC -> (M, C) slab, channels zero-padded lane-dense, bf16.
    # The same bf16 slab doubles as the residual input of the final kernel,
    # so no separate f32 identity slab is materialized.
    # TODO(synk): when chaining blocks, keep the (M, C) slab layout between
    # blocks to avoid the NCHW<->NHWC transposes at the boundaries.
    x2d = jnp.transpose(x_nchw, (0, 2, 3, 1)).reshape(m, cin)
    x_p = _pad_last(x2d, cin_p).astype(jnp.bfloat16)

    # Padded weights (bf16 MXU operands); padded gamma/beta are zero so padded
    # channels stay exactly zero through every folded-BN + ReLU.
    w1_p = jnp.pad(params["w1"],
                   ((0, cin_p - cin), (0, c1_p - c1))).astype(jnp.bfloat16)
    w2_p = jnp.pad(params["w2"],
                   ((0, 0), (0, 0), (0, c1_p - c1), (0, c1_p - c1))
                   ).astype(jnp.bfloat16)
    w2_k = w2_p.reshape(3, 3 * c1_p, c1_p)       # fold kw into K for conv2
    w3_p = jnp.pad(params["w3"],
                   ((0, c1_p - c1), (0, c3_p - c3))).astype(jnp.bfloat16)
    g1_p, b1_p = _pad_last(params["g1"], c1_p), _pad_last(params["bt1"], c1_p)
    g2_p, b2_p = _pad_last(params["g2"], c1_p), _pad_last(params["bt2"], c1_p)
    g3_p, b3_p = _pad_last(params["g3"], c3_p), _pad_last(params["bt3"], c3_p)

    # conv1 (1x1) -> bf16 pre-BN slab + packed BN1 partial stats
    y1, st1 = _mm_stats(x_p, w1_p, tm)
    scale1, shift1 = _fold_bn(st1, g1_p, b1_p, m)

    # conv2 (3x3, pad=1), BN1+ReLU fused into the conv input read
    y1_img = y1.reshape(n, h, w, c1_p)
    y2, st2 = _conv3x3(scale1, shift1, y1_img, w2_k)
    scale2, shift2 = _fold_bn(st2, g2_p, b2_p, m)

    # conv3 (1x1), BN2+ReLU fused into the matmul input read
    y3, st3 = _bnrelu_mm_stats(scale2, shift2, y2, w3_p, tm)
    scale3, shift3 = _fold_bn(st3, g3_p, b3_p, m)

    # BN3 (folded) + residual add + ReLU; residual is the bf16 x_p slab.
    out_p = _bn_add_relu(scale3, shift3, y3, x_p, tm)

    out = out_p[:, :c3].reshape(n, h, w, c3)
    return jnp.transpose(out, (0, 3, 1, 2))


# ---------------------------------------------------------------------------
# Pure-JAX reference (f32 intermediates, bf16 MXU operands, f32 accumulation)
# ---------------------------------------------------------------------------
def bottleneck_reference(x_nchw, params, stride=1):
    assert stride == 1
    n, cin, h, w = x_nchw.shape
    c1 = params["w1"].shape[1]
    c3 = params["w3"].shape[1]
    m = n * h * w
    x2d = jnp.transpose(x_nchw, (0, 2, 3, 1)).reshape(m, cin)
    identity = x2d

    def bn(y, gamma, beta):
        mean = jnp.mean(y, axis=0)
        var = jnp.maximum(jnp.mean(y * y, axis=0) - mean * mean, 0.0)
        scale = gamma * jax.lax.rsqrt(var + EPS)
        shift = beta - mean * scale
        return y * scale + shift

    y1 = jnp.dot(x2d.astype(jnp.bfloat16), params["w1"].astype(jnp.bfloat16),
                 preferred_element_type=jnp.float32)
    h1 = jnp.maximum(bn(y1, params["g1"], params["bt1"]), 0.0)
    h1p = jnp.pad(h1.reshape(n, h, w, c1),
                  ((0, 0), (1, 1), (1, 1), (0, 0))).astype(jnp.bfloat16)
    w2b = params["w2"].astype(jnp.bfloat16)
    y2 = jnp.zeros((n, h, w, c1), jnp.float32)
    for kh in range(3):
        for kw in range(3):
            y2 = y2 + jnp.dot(h1p[:, kh:kh + h, kw:kw + w, :], w2b[kh, kw],
                              preferred_element_type=jnp.float32)
    y2 = y2.reshape(m, c1)
    h2 = jnp.maximum(bn(y2, params["g2"], params["bt2"]), 0.0)
    y3 = jnp.dot(h2.astype(jnp.bfloat16), params["w3"].astype(jnp.bfloat16),
                 preferred_element_type=jnp.float32)
    out = jnp.maximum(bn(y3, params["g3"], params["bt3"]) + identity, 0.0)
    return jnp.transpose(out.reshape(n, h, w, c3), (0, 3, 1, 2))


if __name__ == "__main__":
    key = jax.random.PRNGKey(0)
    kx, kp = jax.random.split(key)

    # Small config; i_downsample=None => stride=1, in_channels == out*expansion.
    # out_channels=32 keeps c3 = 128 lane-dense without padding waste on the
    # widest (output) stream.
    batch, out_channels, spatial = 2, 32, 16
    in_channels = out_channels * EXPANSION            # 128
    x = jax.random.normal(kx, (batch, in_channels, spatial, spatial),
                          jnp.float32)
    params = init_params(kp, in_channels, out_channels)

    fwd = jax.jit(functools.partial(bottleneck_forward, stride=1))
    out = jax.block_until_ready(fwd(x, params))

    ref = bottleneck_reference(x, params, stride=1)
    assert out.shape == (batch, out_channels * EXPANSION, spatial, spatial)
    # Tolerance covers bf16 inter-kernel activation/residual slabs vs the f32
    # reference intermediates.
    np.testing.assert_allclose(np.asarray(out), np.asarray(ref),
                               atol=3e-2, rtol=2e-2)

    print("KERNEL_OK")
</pallas_src>

<mosaic_0001>
module attributes {stable_mosaic.version = 11 : i64} {
  func.func @mm_stats_kernel(%arg0: i32, %arg1: memref<512x128xbf16, #tpu.memory_space<vmem>>, %arg2: memref<128x128xbf16, #tpu.memory_space<vmem>>, %arg3: memref<512x128xbf16, #tpu.memory_space<vmem>>, %arg4: memref<1x8x128xf32, #tpu.memory_space<vmem>>) attributes {dimension_semantics = [#tpu.dimension_semantics<parallel>], iteration_bounds = array<i64: 1>, scalar_prefetch = 0 : i64, scratch_operands = 0 : i64, tpu.core_type = #tpu.core_type<tc>, window_params = [{transform_indices = @transform_0, window_bounds = array<i64: 512, 128>}, {pipeline_mode = #tpu.pipeline_mode<synchronous>, transform_indices = @transform_1, window_bounds = array<i64: 128, 128>}, {transform_indices = @transform_2, window_bounds = array<i64: 512, 128>}, {transform_indices = @transform_3, window_bounds = array<i64: 1, 8, 128>}]} {
    %c0 = arith.constant 0 : index
    %c0_0 = arith.constant 0 : index
    %0 = vector.load %arg1[%c0, %c0_0] : memref<512x128xbf16, #tpu.memory_space<vmem>>, vector<512x128xbf16>
    %c0_1 = arith.constant 0 : index
    %c0_2 = arith.constant 0 : index
    %1 = vector.load %arg2[%c0_1, %c0_2] : memref<128x128xbf16, #tpu.memory_space<vmem>>, vector<128x128xbf16>
    %cst = arith.constant dense<0.000000e+00> : vector<512x128xf32>
    %2 = tpu.matmul %0, %1, %cst {dimension_numbers = #tpu.dot_dimension_numbers<[1], [0], [0], [1], [0, 0, 1, 1], [], []>} : vector<512x128xbf16>, vector<128x128xbf16>, vector<512x128xf32> -> vector<512x128xf32>
    %3 = arith.truncf %2 : vector<512x128xf32> to vector<512x128xbf16>
    %c0_3 = arith.constant 0 : index
    %c0_4 = arith.constant 0 : index
    %4 = vector.load %arg3[%c0_3, %c0_4] : memref<512x128xbf16, #tpu.memory_space<vmem>>, vector<512x128xbf16>
    tpu.vector_store %arg3[%c0_3, %c0_4], %3 {strides = array<i32>} : memref<512x128xbf16, #tpu.memory_space<vmem>>, vector<512x128xbf16>,
    %cst_5 = arith.constant dense<0.000000e+00> : vector<128xf32>
    %5 = vector.multi_reduction <add>, %2, %cst_5 [0] : vector<512x128xf32> to vector<128xf32>
    %6 = vector.shape_cast %5 : vector<128xf32> to vector<1x128xf32>
    %7 = arith.mulf %2, %2 : vector<512x128xf32>
    %cst_6 = arith.constant dense<0.000000e+00> : vector<128xf32>
    %8 = vector.multi_reduction <add>, %7, %cst_6 [0] : vector<512x128xf32> to vector<128xf32>
    %9 = vector.shape_cast %8 : vector<128xf32> to vector<1x128xf32>
    %10 = vector.shape_cast %6 : vector<1x128xf32> to vector<1x128xf32>
    %11 = vector.broadcast %10 : vector<1x128xf32> to vector<4x128xf32>
    %12 = vector.shape_cast %9 : vector<1x128xf32> to vector<1x128xf32>
    %13 = vector.broadcast %12 : vector<1x128xf32> to vector<4x128xf32>
    %14 = tpu.concatenate %11, %13 in 0 : vector<4x128xf32>, vector<4x128xf32> -> vector<8x128xf32>
    %c0_7 = arith.constant 0 : index
    %c0_8 = arith.constant 0 : index
    %c0_9 = arith.constant 0 : index
    %15 = vector.load %arg4[%c0_7, %c0_8, %c0_9] : memref<1x8x128xf32, #tpu.memory_space<vmem>>, vector<1x8x128xf32>
    %16 = vector.shape_cast %15 : vector<1x8x128xf32> to vector<8x128xf32>
    %17 = vector.shape_cast %14 : vector<8x128xf32> to vector<1x8x128xf32>
    tpu.vector_store %arg4[%c0_7, %c0_8, %c0_9], %17 {strides = array<i32>} : memref<1x8x128xf32, #tpu.memory_space<vmem>>, vector<1x8x128xf32>,
    return
  }
  func.func @transform_0(%arg0: i32) -> (i32, i32) {
    %c0_i32 = arith.constant 0 : i32
    %c0_i32_0 = arith.constant 0 : i32
    return %arg0, %c0_i32 : i32, i32
  }
  func.func @transform_1(%arg0: i32) -> (i32, i32) {
    %c0_i32 = arith.constant 0 : i32
    %c0_i32_0 = arith.constant 0 : i32
    %c0_i32_1 = arith.constant 0 : i32
    return %c0_i32, %c0_i32_0 : i32, i32
  }
  func.func @transform_2(%arg0: i32) -> (i32, i32) {
    %c0_i32 = arith.constant 0 : i32
    %c0_i32_0 = arith.constant 0 : i32
    return %arg0, %c0_i32 : i32, i32
  }
  func.func @transform_3(%arg0: i32) -> (i32, i32, i32) {
    %c0_i32 = arith.constant 0 : i32
    %c0_i32_0 = arith.constant 0 : i32
    %c0_i32_1 = arith.constant 0 : i32
    return %arg0, %c0_i32, %c0_i32_0 : i32, i32, i32
  }
}

module attributes {stable_mosaic.version = 11 : i64} {
  func.func @conv3x3_kernel(%arg0: i32, %arg1: memref<1x128xf32, #tpu.memory_space<vmem>>, %arg2: memref<1x128xf32, #tpu.memory_space<vmem>>, %arg3: memref<1x16x16x128xbf16, #tpu.memory_space<vmem>>, %arg4: memref<3x384x128xbf16, #tpu.memory_space<vmem>>, %arg5: memref<256x128xbf16, #tpu.memory_space<vmem>>, %arg6: memref<1x8x128xf32, #tpu.memory_space<vmem>>) attributes {dimension_semantics = [#tpu.dimension_semantics<parallel>], iteration_bounds = array<i64: 2>, scalar_prefetch = 0 : i64, scratch_operands = 0 : i64, tpu.core_type = #tpu.core_type<tc>, window_params = [{pipeline_mode = #tpu.pipeline_mode<synchronous>, transform_indices = @transform_0, window_bounds = array<i64: 1, 128>}, {pipeline_mode = #tpu.pipeline_mode<synchronous>, transform_indices = @transform_1, window_bounds = array<i64: 1, 128>}, {transform_indices = @transform_2, window_bounds = array<i64: 1, 16, 16, 128>}, {pipeline_mode = #tpu.pipeline_mode<synchronous>, transform_indices = @transform_3, window_bounds = array<i64: 3, 384, 128>}, {transform_indices = @transform_4, window_bounds = array<i64: 256, 128>}, {transform_indices = @transform_5, window_bounds = array<i64: 1, 8, 128>}]} {
    %c0 = arith.constant 0 : index
    %c0_0 = arith.constant 0 : index
    %0 = vector.load %arg1[%c0, %c0_0] : memref<1x128xf32, #tpu.memory_space<vmem>>, vector<1x128xf32>
    %1 = vector.shape_cast %0 : vector<1x128xf32> to vector<1x1x128xf32>
    %c0_1 = arith.constant 0 : index
    %c0_2 = arith.constant 0 : index
    %2 = vector.load %arg2[%c0_1, %c0_2] : memref<1x128xf32, #tpu.memory_space<vmem>>, vector<1x128xf32>
    %3 = vector.shape_cast %2 : vector<1x128xf32> to vector<1x1x128xf32>
    %c0_3 = arith.constant 0 : index
    %c0_4 = arith.constant 0 : index
    %c0_5 = arith.constant 0 : index
    %c0_6 = arith.constant 0 : index
    %4 = vector.load %arg3[%c0_3, %c0_4, %c0_5, %c0_6] : memref<1x16x16x128xbf16, #tpu.memory_space<vmem>>, vector<1x16x16x128xbf16>
    %5 = vector.shape_cast %4 : vector<1x16x16x128xbf16> to vector<16x16x128xbf16>
    %6 = arith.extf %5 : vector<16x16x128xbf16> to vector<16x16x128xf32>
    %7 = vector.broadcast %1 : vector<1x1x128xf32> to vector<16x16x128xf32>
    %8 = arith.mulf %6, %7 : vector<16x16x128xf32>
    %9 = vector.broadcast %3 : vector<1x1x128xf32> to vector<16x16x128xf32>
    %10 = arith.addf %8, %9 : vector<16x16x128xf32>
    %cst = arith.constant 0.000000e+00 : f32
    %11 = vector.broadcast %cst : f32 to vector<16x16x128xf32>
    %12 = arith.maximumf %10, %11 : vector<16x16x128xf32>
    %13 = arith.truncf %12 : vector<16x16x128xf32> to vector<16x16x128xbf16>
    %cst_7 = arith.constant 0.000000e+00 : bf16
    %14 = vector.broadcast %cst_7 : bf16 to vector<16x1x128xbf16>
    %15 = tpu.concatenate %14, %13, %14 in 1 : vector<16x1x128xbf16>, vector<16x16x128xbf16>, vector<16x1x128xbf16> -> vector<16x18x128xbf16>
    %cst_8 = arith.constant 0.000000e+00 : bf16
    %16 = vector.broadcast %cst_8 : bf16 to vector<1x18x128xbf16>
    %17 = tpu.concatenate %16, %15, %16 in 0 : vector<1x18x128xbf16>, vector<16x18x128xbf16>, vector<1x18x128xbf16> -> vector<18x18x128xbf16>
    %cst_9 = arith.constant 0.000000e+00 : f32
    %18 = vector.broadcast %cst_9 : f32 to vector<256x128xf32>
    %19 = vector.extract_strided_slice %17 {offsets = [0, 0, 0], sizes = [16, 18, 128], strides = [1, 1, 1]} : vector<18x18x128xbf16> to vector<16x18x128xbf16>
    %20 = vector.extract_strided_slice %19 {offsets = [0, 0, 0], sizes = [16, 16, 128], strides = [1, 1, 1]} : vector<16x18x128xbf16> to vector<16x16x128xbf16>
    %21 = vector.extract_strided_slice %19 {offsets = [0, 1, 0], sizes = [16, 16, 128], strides = [1, 1, 1]} : vector<16x18x128xbf16> to vector<16x16x128xbf16>
    %22 = vector.extract_strided_slice %19 {offsets = [0, 2, 0], sizes = [16, 16, 128], strides = [1, 1, 1]} : vector<16x18x128xbf16> to vector<16x16x128xbf16>
    %23 = tpu.concatenate %20, %21, %22 in 2 : vector<16x16x128xbf16>, vector<16x16x128xbf16>, vector<16x16x128xbf16> -> vector<16x16x384xbf16>
    %24 = vector.shape_cast %23 : vector<16x16x384xbf16> to vector<256x384xbf16>
    %c0_10 = arith.constant 0 : index
    %c0_11 = arith.constant 0 : index
    %c0_12 = arith.constant 0 : index
    %25 = vector.load %arg4[%c0_10, %c0_11, %c0_12] : memref<3x384x128xbf16, #tpu.memory_space<vmem>>, vector<1x384x128xbf16>
    %26 = vector.shape_cast %25 : vector<1x384x128xbf16> to vector<384x128xbf16>
    %cst_13 = arith.constant dense<0.000000e+00> : vector<256x128xf32>
    %27 = tpu.matmul %24, %26, %cst_13 {dimension_numbers = #tpu.dot_dimension_numbers<[1], [0], [0], [1], [0, 0, 1, 1], [], []>} : vector<256x384xbf16>, vector<384x128xbf16>, vector<256x128xf32> -> vector<256x128xf32>
    %28 = arith.addf %18, %27 : vector<256x128xf32>
    %29 = vector.extract_strided_slice %17 {offsets = [1, 0, 0], sizes = [16, 18, 128], strides = [1, 1, 1]} : vector<18x18x128xbf16> to vector<16x18x128xbf16>
    %30 = vector.extract_strided_slice %29 {offsets = [0, 0, 0], sizes = [16, 16, 128], strides = [1, 1, 1]} : vector<16x18x128xbf16> to vector<16x16x128xbf16>
    %31 = vector.extract_strided_slice %29 {offsets = [0, 1, 0], sizes = [16, 16, 128], strides = [1, 1, 1]} : vector<16x18x128xbf16> to vector<16x16x128xbf16>
    %32 = vector.extract_strided_slice %29 {offsets = [0, 2, 0], sizes = [16, 16, 128], strides = [1, 1, 1]} : vector<16x18x128xbf16> to vector<16x16x128xbf16>
    %33 = tpu.concatenate %30, %31, %32 in 2 : vector<16x16x128xbf16>, vector<16x16x128xbf16>, vector<16x16x128xbf16> -> vector<16x16x384xbf16>
    %34 = vector.shape_cast %33 : vector<16x16x384xbf16> to vector<256x384xbf16>
    %c1 = arith.constant 1 : index
    %c0_14 = arith.constant 0 : index
    %c0_15 = arith.constant 0 : index
    %35 = vector.load %arg4[%c1, %c0_14, %c0_15] : memref<3x384x128xbf16, #tpu.memory_space<vmem>>, vector<1x384x128xbf16>
    %36 = vector.shape_cast %35 : vector<1x384x128xbf16> to vector<384x128xbf16>
    %cst_16 = arith.constant dense<0.000000e+00> : vector<256x128xf32>
    %37 = tpu.matmul %34, %36, %cst_16 {dimension_numbers = #tpu.dot_dimension_numbers<[1], [0], [0], [1], [0, 0, 1, 1], [], []>} : vector<256x384xbf16>, vector<384x128xbf16>, vector<256x128xf32> -> vector<256x128xf32>
    %38 = arith.addf %28, %37 : vector<256x128xf32>
    %39 = vector.extract_strided_slice %17 {offsets = [2, 0, 0], sizes = [16, 18, 128], strides = [1, 1, 1]} : vector<18x18x128xbf16> to vector<16x18x128xbf16>
    %40 = vector.extract_strided_slice %39 {offsets = [0, 0, 0], sizes = [16, 16, 128], strides = [1, 1, 1]} : vector<16x18x128xbf16> to vector<16x16x128xbf16>
    %41 = vector.extract_strided_slice %39 {offsets = [0, 1, 0], sizes = [16, 16, 128], strides = [1, 1, 1]} : vector<16x18x128xbf16> to vector<16x16x128xbf16>
    %42 = vector.extract_strided_slice %39 {offsets = [0, 2, 0], sizes = [16, 16, 128], strides = [1, 1, 1]} : vector<16x18x128xbf16> to vector<16x16x128xbf16>
    %43 = tpu.concatenate %40, %41, %42 in 2 : vector<16x16x128xbf16>, vector<16x16x128xbf16>, vector<16x16x128xbf16> -> vector<16x16x384xbf16>
    %44 = vector.shape_cast %43 : vector<16x16x384xbf16> to vector<256x384xbf16>
    %c2 = arith.constant 2 : index
    %c0_17 = arith.constant 0 : index
    %c0_18 = arith.constant 0 : index
    %45 = vector.load %arg4[%c2, %c0_17, %c0_18] : memref<3x384x128xbf16, #tpu.memory_space<vmem>>, vector<1x384x128xbf16>
    %46 = vector.shape_cast %45 : vector<1x384x128xbf16> to vector<384x128xbf16>
    %cst_19 = arith.constant dense<0.000000e+00> : vector<256x128xf32>
    %47 = tpu.matmul %44, %46, %cst_19 {dimension_numbers = #tpu.dot_dimension_numbers<[1], [0], [0], [1], [0, 0, 1, 1], [], []>} : vector<256x384xbf16>, vector<384x128xbf16>, vector<256x128xf32> -> vector<256x128xf32>
    %48 = arith.addf %38, %47 : vector<256x128xf32>
    %49 = arith.truncf %48 : vector<256x128xf32> to vector<256x128xbf16>
    %c0_20 = arith.constant 0 : index
    %c0_21 = arith.constant 0 : index
    %50 = vector.load %arg5[%c0_20, %c0_21] : memref<256x128xbf16, #tpu.memory_space<vmem>>, vector<256x128xbf16>
    tpu.vector_store %arg5[%c0_20, %c0_21], %49 {strides = array<i32>} : memref<256x128xbf16, #tpu.memory_space<vmem>>, vector<256x128xbf16>,
    %cst_22 = arith.constant dense<0.000000e+00> : vector<128xf32>
    %51 = vector.multi_reduction <add>, %48, %cst_22 [0] : vector<256x128xf32> to vector<128xf32>
    %52 = vector.shape_cast %51 : vector<128xf32> to vector<1x128xf32>
    %53 = arith.mulf %48, %48 : vector<256x128xf32>
    %cst_23 = arith.constant dense<0.000000e+00> : vector<128xf32>
    %54 = vector.multi_reduction <add>, %53, %cst_23 [0] : vector<256x128xf32> to vector<128xf32>
    %55 = vector.shape_cast %54 : vector<128xf32> to vector<1x128xf32>
    %56 = vector.shape_cast %52 : vector<1x128xf32> to vector<1x128xf32>
    %57 = vector.broadcast %56 : vector<1x128xf32> to vector<4x128xf32>
    %58 = vector.shape_cast %55 : vector<1x128xf32> to vector<1x128xf32>
    %59 = vector.broadcast %58 : vector<1x128xf32> to vector<4x128xf32>
    %60 = tpu.concatenate %57, %59 in 0 : vector<4x128xf32>, vector<4x128xf32> -> vector<8x128xf32>
    %c0_24 = arith.constant 0 : index
    %c0_25 = arith.constant 0 : index
    %c0_26 = arith.constant 0 : index
    %61 = vector.load %arg6[%c0_24, %c0_25, %c0_26] : memref<1x8x128xf32, #tpu.memory_space<vmem>>, vector<1x8x128xf32>
    %62 = vector.shape_cast %61 : vector<1x8x128xf32> to vector<8x128xf32>
    %63 = vector.shape_cast %60 : vector<8x128xf32> to vector<1x8x128xf32>
    tpu.vector_store %arg6[%c0_24, %c0_25, %c0_26], %63 {strides = array<i32>} : memref<1x8x128xf32, #tpu.memory_space<vmem>>, vector<1x8x128xf32>,
    return
  }
  func.func @transform_0(%arg0: i32) -> (i32, i32) {
    %c0_i32 = arith.constant 0 : i32
    %c0_i32_0 = arith.constant 0 : i32
    %c0_i32_1 = arith.constant 0 : i32
    return %c0_i32, %c0_i32_0 : i32, i32
  }
  func.func @transform_1(%arg0: i32) -> (i32, i32) {
    %c0_i32 = arith.constant 0 : i32
    %c0_i32_0 = arith.constant 0 : i32
    %c0_i32_1 = arith.constant 0 : i32
    return %c0_i32, %c0_i32_0 : i32, i32
  }
  func.func @transform_2(%arg0: i32) -> (i32, i32, i32, i32) {
    %c0_i32 = arith.constant 0 : i32
    %c0_i32_0 = arith.constant 0 : i32
    %c0_i32_1 = arith.constant 0 : i32
    %c0_i32_2 = arith.constant 0 : i32
    return %arg0, %c0_i32, %c0_i32_0, %c0_i32_1 : i32, i32, i32, i32
  }
  func.func @transform_3(%arg0: i32) -> (i32, i32, i32) {
    %c0_i32 = arith.constant 0 : i32
    %c0_i32_0 = arith.constant 0 : i32
    %c0_i32_1 = arith.constant 0 : i32
    %c0_i32_2 = arith.constant 0 : i32
    return %c0_i32, %c0_i32_0, %c0_i32_1 : i32, i32, i32
  }
  func.func @transform_4(%arg0: i32) -> (i32, i32) {
    %c0_i32 = arith.constant 0 : i32
    %c0_i32_0 = arith.constant 0 : i32
    return %arg0, %c0_i32 : i32, i32
  }
  func.func @transform_5(%arg0: i32) -> (i32, i32, i32) {
    %c0_i32 = arith.constant 0 : i32
    %c0_i32_0 = arith.constant 0 : i32
    %c0_i32_1 = arith.constant 0 : i32
    return %arg0, %c0_i32, %c0_i32_0 : i32, i32, i32
  }
}

module attributes {stable_mosaic.version = 11 : i64} {
  func.func @bnrelu_mm_stats_kernel(%arg0: i32, %arg1: memref<1x128xf32, #tpu.memory_space<vmem>>, %arg2: memref<1x128xf32, #tpu.memory_space<vmem>>, %arg3: memref<512x128xbf16, #tpu.memory_space<vmem>>, %arg4: memref<128x128xbf16, #tpu.memory_space<vmem>>, %arg5: memref<512x128xbf16, #tpu.memory_space<vmem>>, %arg6: memref<1x8x128xf32, #tpu.memory_space<vmem>>) attributes {dimension_semantics = [#tpu.dimension_semantics<parallel>], iteration_bounds = array<i64: 1>, scalar_prefetch = 0 : i64, scratch_operands = 0 : i64, tpu.core_type = #tpu.core_type<tc>, window_params = [{pipeline_mode = #tpu.pipeline_mode<synchronous>, transform_indices = @transform_0, window_bounds = array<i64: 1, 128>}, {pipeline_mode = #tpu.pipeline_mode<synchronous>, transform_indices = @transform_1, window_bounds = array<i64: 1, 128>}, {transform_indices = @transform_2, window_bounds = array<i64: 512, 128>}, {pipeline_mode = #tpu.pipeline_mode<synchronous>, transform_indices = @transform_3, window_bounds = array<i64: 128, 128>}, {transform_indices = @transform_4, window_bounds = array<i64: 512, 128>}, {transform_indices = @transform_5, window_bounds = array<i64: 1, 8, 128>}]} {
    %c0 = arith.constant 0 : index
    %c0_0 = arith.constant 0 : index
    %0 = vector.load %arg3[%c0, %c0_0] : memref<512x128xbf16, #tpu.memory_space<vmem>>, vector<512x128xbf16>
    %c0_1 = arith.constant 0 : index
    %c0_2 = arith.constant 0 : index
    %1 = vector.load %arg1[%c0_1, %c0_2] : memref<1x128xf32, #tpu.memory_space<vmem>>, vector<1x128xf32>
    %2 = arith.extf %0 : vector<512x128xbf16> to vector<512x128xf32>
    %3 = vector.broadcast %1 : vector<1x128xf32> to vector<512x128xf32>
    %4 = arith.mulf %2, %3 : vector<512x128xf32>
    %c0_3 = arith.constant 0 : index
    %c0_4 = arith.constant 0 : index
    %5 = vector.load %arg2[%c0_3, %c0_4] : memref<1x128xf32, #tpu.memory_space<vmem>>, vector<1x128xf32>
    %6 = vector.broadcast %5 : vector<1x128xf32> to vector<512x128xf32>
    %7 = arith.addf %4, %6 : vector<512x128xf32>
    %cst = arith.constant 0.000000e+00 : f32
    %8 = vector.broadcast %cst : f32 to vector<512x128xf32>
    %9 = arith.maximumf %7, %8 : vector<512x128xf32>
    %10 = arith.truncf %9 : vector<512x128xf32> to vector<512x128xbf16>
    %c0_5 = arith.constant 0 : index
    %c0_6 = arith.constant 0 : index
    %11 = vector.load %arg4[%c0_5, %c0_6] : memref<128x128xbf16, #tpu.memory_space<vmem>>, vector<128x128xbf16>
    %cst_7 = arith.constant dense<0.000000e+00> : vector<512x128xf32>
    %12 = tpu.matmul %10, %11, %cst_7 {dimension_numbers = #tpu.dot_dimension_numbers<[1], [0], [0], [1], [0, 0, 1, 1], [], []>} : vector<512x128xbf16>, vector<128x128xbf16>, vector<512x128xf32> -> vector<512x128xf32>
    %13 = arith.truncf %12 : vector<512x128xf32> to vector<512x128xbf16>
    %c0_8 = arith.constant 0 : index
    %c0_9 = arith.constant 0 : index
    %14 = vector.load %arg5[%c0_8, %c0_9] : memref<512x128xbf16, #tpu.memory_space<vmem>>, vector<512x128xbf16>
    tpu.vector_store %arg5[%c0_8, %c0_9], %13 {strides = array<i32>} : memref<512x128xbf16, #tpu.memory_space<vmem>>, vector<512x128xbf16>,
    %cst_10 = arith.constant dense<0.000000e+00> : vector<128xf32>
    %15 = vector.multi_reduction <add>, %12, %cst_10 [0] : vector<512x128xf32> to vector<128xf32>
    %16 = vector.shape_cast %15 : vector<128xf32> to vector<1x128xf32>
    %17 = arith.mulf %12, %12 : vector<512x128xf32>
    %cst_11 = arith.constant dense<0.000000e+00> : vector<128xf32>
    %18 = vector.multi_reduction <add>, %17, %cst_11 [0] : vector<512x128xf32> to vector<128xf32>
    %19 = vector.shape_cast %18 : vector<128xf32> to vector<1x128xf32>
    %20 = vector.shape_cast %16 : vector<1x128xf32> to vector<1x128xf32>
    %21 = vector.broadcast %20 : vector<1x128xf32> to vector<4x128xf32>
    %22 = vector.shape_cast %19 : vector<1x128xf32> to vector<1x128xf32>
    %23 = vector.broadcast %22 : vector<1x128xf32> to vector<4x128xf32>
    %24 = tpu.concatenate %21, %23 in 0 : vector<4x128xf32>, vector<4x128xf32> -> vector<8x128xf32>
    %c0_12 = arith.constant 0 : index
    %c0_13 = arith.constant 0 : index
    %c0_14 = arith.constant 0 : index
    %25 = vector.load %arg6[%c0_12, %c0_13, %c0_14] : memref<1x8x128xf32, #tpu.memory_space<vmem>>, vector<1x8x128xf32>
    %26 = vector.shape_cast %25 : vector<1x8x128xf32> to vector<8x128xf32>
    %27 = vector.shape_cast %24 : vector<8x128xf32> to vector<1x8x128xf32>
    tpu.vector_store %arg6[%c0_12, %c0_13, %c0_14], %27 {strides = array<i32>} : memref<1x8x128xf32, #tpu.memory_space<vmem>>, vector<1x8x128xf32>,
    return
  }
  func.func @transform_0(%arg0: i32) -> (i32, i32) {
    %c0_i32 = arith.constant 0 : i32
    %c0_i32_0 = arith.constant 0 : i32
    %c0_i32_1 = arith.constant 0 : i32
    return %c0_i32, %c0_i32_0 : i32, i32
  }
  func.func @transform_1(%arg0: i32) -> (i32, i32) {
    %c0_i32 = arith.constant 0 : i32
    %c0_i32_0 = arith.constant 0 : i32
    %c0_i32_1 = arith.constant 0 : i32
    return %c0_i32, %c0_i32_0 : i32, i32
  }
  func.func @transform_2(%arg0: i32) -> (i32, i32) {
    %c0_i32 = arith.constant 0 : i32
    %c0_i32_0 = arith.constant 0 : i32
    return %arg0, %c0_i32 : i32, i32
  }
  func.func @transform_3(%arg0: i32) -> (i32, i32) {
    %c0_i32 = arith.constant 0 : i32
    %c0_i32_0 = arith.constant 0 : i32
    %c0_i32_1 = arith.constant 0 : i32
    return %c0_i32, %c0_i32_0 : i32, i32
  }
  func.func @transform_4(%arg0: i32) -> (i32, i32) {
    %c0_i32 = arith.constant 0 : i32
    %c0_i32_0 = arith.constant 0 : i32
    return %arg0, %c0_i32 : i32, i32
  }
  func.func @transform_5(%arg0: i32) -> (i32, i32, i32) {
    %c0_i32 = arith.constant 0 : i32
    %c0_i32_0 = arith.constant 0 : i32
    %c0_i32_1 = arith.constant 0 : i32
    return %arg0, %c0_i32, %c0_i32_0 : i32, i32, i32
  }
}

module attributes {stable_mosaic.version = 11 : i64} {
  func.func @bn_add_relu_kernel(%arg0: i32, %arg1: memref<1x128xf32, #tpu.memory_space<vmem>>, %arg2: memref<1x128xf32, #tpu.memory_space<vmem>>, %arg3: memref<512x128xbf16, #tpu.memory_space<vmem>>, %arg4: memref<512x128xbf16, #tpu.memory_space<vmem>>, %arg5: memref<512x128xf32, #tpu.memory_space<vmem>>) attributes {dimension_semantics = [#tpu.dimension_semantics<parallel>], iteration_bounds = array<i64: 1>, scalar_prefetch = 0 : i64, scratch_operands = 0 : i64, tpu.core_type = #tpu.core_type<tc>, window_params = [{pipeline_mode = #tpu.pipeline_mode<synchronous>, transform_indices = @transform_0, window_bounds = array<i64: 1, 128>}, {pipeline_mode = #tpu.pipeline_mode<synchronous>, transform_indices = @transform_1, window_bounds = array<i64: 1, 128>}, {transform_indices = @transform_2, window_bounds = array<i64: 512, 128>}, {transform_indices = @transform_3, window_bounds = array<i64: 512, 128>}, {transform_indices = @transform_4, window_bounds = array<i64: 512, 128>}]} {
    %c0 = arith.constant 0 : index
    %c0_0 = arith.constant 0 : index
    %0 = vector.load %arg3[%c0, %c0_0] : memref<512x128xbf16, #tpu.memory_space<vmem>>, vector<512x128xbf16>
    %1 = arith.extf %0 : vector<512x128xbf16> to vector<512x128xf32>
    %c0_1 = arith.constant 0 : index
    %c0_2 = arith.constant 0 : index
    %2 = vector.load %arg4[%c0_1, %c0_2] : memref<512x128xbf16, #tpu.memory_space<vmem>>, vector<512x128xbf16>
    %3 = arith.extf %2 : vector<512x128xbf16> to vector<512x128xf32>
    %c0_3 = arith.constant 0 : index
    %c0_4 = arith.constant 0 : index
    %4 = vector.load %arg1[%c0_3, %c0_4] : memref<1x128xf32, #tpu.memory_space<vmem>>, vector<1x128xf32>
    %5 = vector.broadcast %4 : vector<1x128xf32> to vector<512x128xf32>
    %6 = arith.mulf %1, %5 : vector<512x128xf32>
    %c0_5 = arith.constant 0 : index
    %c0_6 = arith.constant 0 : index
    %7 = vector.load %arg2[%c0_5, %c0_6] : memref<1x128xf32, #tpu.memory_space<vmem>>, vector<1x128xf32>
    %8 = vector.broadcast %7 : vector<1x128xf32> to vector<512x128xf32>
    %9 = arith.addf %6, %8 : vector<512x128xf32>
    %10 = arith.addf %9, %3 : vector<512x128xf32>
    %cst = arith.constant 0.000000e+00 : f32
    %11 = vector.broadcast %cst : f32 to vector<512x128xf32>
    %12 = arith.maximumf %10, %11 : vector<512x128xf32>
    %c0_7 = arith.constant 0 : index
    %c0_8 = arith.constant 0 : index
    %13 = vector.load %arg5[%c0_7, %c0_8] : memref<512x128xf32, #tpu.memory_space<vmem>>, vector<512x128xf32>
    tpu.vector_store %arg5[%c0_7, %c0_8], %12 {strides = array<i32>} : memref<512x128xf32, #tpu.memory_space<vmem>>, vector<512x128xf32>,
    return
  }
  func.func @transform_0(%arg0: i32) -> (i32, i32) {
    %c0_i32 = arith.constant 0 : i32
    %c0_i32_0 = arith.constant 0 : i32
    %c0_i32_1 = arith.constant 0 : i32
    return %c0_i32, %c0_i32_0 : i32, i32
  }
  func.func @transform_1(%arg0: i32) -> (i32, i32) {
    %c0_i32 = arith.constant 0 : i32
    %c0_i32_0 = arith.constant 0 : i32
    %c0_i32_1 = arith.constant 0 : i32
    return %c0_i32, %c0_i32_0 : i32, i32
  }
  func.func @transform_2(%arg0: i32) -> (i32, i32) {
    %c0_i32 = arith.constant 0 : i32
    %c0_i32_0 = arith.constant 0 : i32
    return %arg0, %c0_i32 : i32, i32
  }
  func.func @transform_3(%arg0: i32) -> (i32, i32) {
    %c0_i32 = arith.constant 0 : i32
    %c0_i32_0 = arith.constant 0 : i32
    return %arg0, %c0_i32 : i32, i32
  }
  func.func @transform_4(%arg0: i32) -> (i32, i32) {
    %c0_i32 = arith.constant 0 : i32
    %c0_i32_0 = arith.constant 0 : i32
    return %arg0, %c0_i32 : i32, i32
  }
}

</mosaic_0001>

<llo_original>
// kernel: bottleneck_forward.7
$region0: #{bottleneck_forward.7}
  #allocation0 [shape = 'u32[]', space=smem, size = 0x4, offset = 0x4, fixed_abs, tag = 'smem constant byte address 0x4 - core index']
  #allocation1 [shape = 'u32[144,128]{1,0:T(1,128)}', space=vmem, size = 0x12000, scoped, tag = 'internal scratch']
  %s0 = inlined_call_operand.vmem [shape: f32[1,128], index: 0, kind: input, shape index: {}]
  %s1 = inlined_call_operand.vmem [shape: f32[1,128], index: 1, kind: input, shape index: {}]
  %s2 = inlined_call_operand.vmem [shape: bf16[512,128], index: 2, kind: input, shape index: {}]
  %s3 = inlined_call_operand.vmem [shape: bf16[512,128], index: 3, kind: input, shape index: {}]
  %s4 = inlined_call_operand.hbm [shape: f32[512,128], index: 4, kind: output, shape index: {}]
  %s5 = sld [smem:[#allocation0]]
  $region26: #{bottleneck_forward.7} parent=0
    _
  %s7 = ssub.s32 1, %s5
  %s8 = scalar_select 0, %s7, %s5
  $region1: #{bottleneck_forward.7} parent=0
    #allocation2 [shape = 'u8[262144]{0}', space=vmem, size = 0x40000, scoped, tag = 'output window, operand 0, single buffered']
    #allocation3 [shape = 's32[1]{0}', space=sflag, size = 0x4, scoped, tag = 'scoped memory for bottleneck_forward.7']
    %9 = vsyncpa [#allocation3], 0
    // Predicated region
    $region2: #{bottleneck_forward.7} parent=1 // pred_check
      _
    $region3: #{bottleneck_forward.7} parent=1 // pred_check_branch
      %11 = sbr.rel (0) target = $region5
    $region4: #{bottleneck_forward.7} parent=1 // pred_region
      _
    $region5: #{bottleneck_forward.7} parent=1 // pred_fallthru
      _
    // Predicated region
    $region6: #{bottleneck_forward.7} parent=1 // pred_check
      _
    $region7: #{bottleneck_forward.7} parent=1 // pred_check_branch
      %13 = sbr.rel (0) target = $region9
    $region8: #{bottleneck_forward.7} parent=1 // pred_region
      _
    $region9: #{bottleneck_forward.7} parent=1 // pred_fallthru
      _
    // Predicated region
    $region10: #{bottleneck_forward.7} parent=1 // pred_check
      _
    $region11: #{bottleneck_forward.7} parent=1 // pred_check_branch
      %15 = sbr.rel (0) target = $region13
    $region12: #{bottleneck_forward.7} parent=1 // pred_region
      _
    $region13: #{bottleneck_forward.7} parent=1 // pred_fallthru
      _
    // Predicated region
    $region14: #{bottleneck_forward.7} parent=1 // pred_check
      _
    $region15: #{bottleneck_forward.7} parent=1 // pred_check_branch
      %17 = sbr.rel (0) target = $region17
    $region16: #{bottleneck_forward.7} parent=1 // pred_region
      _
    $region17: #{bottleneck_forward.7} parent=1 // pred_fallthru
      _
    %v18 = vld [vmem:[%s2] sm:$0xf]
    %v19 = vld [vmem:[%s2 + $0x4] sm:$0xf]
    %v20 = vld [vmem:[%s2 + $0x8] sm:$0xf]
    %v21 = vld [vmem:[%s2 + $0xc] sm:$0xf]
    %v22 = vld [vmem:[%s2 + $0x10] sm:$0xf]
    %v23 = vld [vmem:[%s2 + $0x14] sm:$0xf]
    %v24 = vld [vmem:[%s2 + $0x18] sm:$0xf]
    %v25 = vld [vmem:[%s2 + $0x1c] sm:$0xf]
    %v26 = vld [vmem:[%s2 + $0x20] sm:$0xf]
    %v27 = vld [vmem:[%s2 + $0x24] sm:$0xf]
    %v28 = vld [vmem:[%s2 + $0x28] sm:$0xf]
    %v29 = vld [vmem:[%s2 + $0x2c] sm:$0xf]
    %v30 = vld [vmem:[%s2 + $0x30] sm:$0xf]
    %v31 = vld [vmem:[%s2 + $0x34] sm:$0xf]
    %v32 = vld [vmem:[%s2 + $0x38] sm:$0xf]
    %v33 = vld [vmem:[%s2 + $0x3c] sm:$0xf]
    %v34 = vld [vmem:[%s2 + $0x40] sm:$0xf]
    %v35 = vld [vmem:[%s2 + $0x44] sm:$0xf]
    %v36 = vld [vmem:[%s2 + $0x48] sm:$0xf]
    %v37 = vld [vmem:[%s2 + $0x4c] sm:$0xf]
    %v38 = vld [vmem:[%s2 + $0x50] sm:$0xf]
    %v39 = vld [vmem:[%s2 + $0x54] sm:$0xf]
    %v40 = vld [vmem:[%s2 + $0x58] sm:$0xf]
    %v41 = vld [vmem:[%s2 + $0x5c] sm:$0xf]
    %v42 = vld [vmem:[%s2 + $0x60] sm:$0xf]
    %v43 = vld [vmem:[%s2 + $0x64] sm:$0xf]
    %v44 = vld [vmem:[%s2 + $0x68] sm:$0xf]
    %v45 = vld [vmem:[%s2 + $0x6c] sm:$0xf]
    %v46 = vld [vmem:[%s2 + $0x70] sm:$0xf]
    %v47 = vld [vmem:[%s2 + $0x74] sm:$0xf]
    %v48 = vld [vmem:[%s2 + $0x78] sm:$0xf]
    %v49 = vld [vmem:[%s2 + $0x7c] sm:$0xf]
    %v50 = vld [vmem:[%s2 + $0x80] sm:$0xf]
    %v51 = vld [vmem:[%s2 + $0x84] sm:$0xf]
    %v52 = vld [vmem:[%s2 + $0x88] sm:$0xf]
    %v53 = vld [vmem:[%s2 + $0x8c] sm:$0xf]
    %v54 = vld [vmem:[%s2 + $0x90] sm:$0xf]
    %v55 = vld [vmem:[%s2 + $0x94] sm:$0xf]
    %v56 = vld [vmem:[%s2 + $0x98] sm:$0xf]
    %v57 = vld [vmem:[%s2 + $0x9c] sm:$0xf]
    %v58 = vld [vmem:[%s2 + $0xa0] sm:$0xf]
    %v59 = vld [vmem:[%s2 + $0xa4] sm:$0xf]
    %v60 = vld [vmem:[%s2 + $0xa8] sm:$0xf]
    %v61 = vld [vmem:[%s2 + $0xac] sm:$0xf]
    %v62 = vld [vmem:[%s2 + $0xb0] sm:$0xf]
    %v63 = vld [vmem:[%s2 + $0xb4] sm:$0xf]
    %v64 = vld [vmem:[%s2 + $0xb8] sm:$0xf]
    %v65 = vld [vmem:[%s2 + $0xbc] sm:$0xf]
    %v66 = vld [vmem:[%s2 + $0xc0] sm:$0xf]
    %v67 = vld [vmem:[%s2 + $0xc4] sm:$0xf]
    %v68 = vld [vmem:[%s2 + $0xc8] sm:$0xf]
    %v69 = vld [vmem:[%s2 + $0xcc] sm:$0xf]
    %v70 = vld [vmem:[%s2 + $0xd0] sm:$0xf]
    %v71 = vld [vmem:[%s2 + $0xd4] sm:$0xf]
    %v72 = vld [vmem:[%s2 + $0xd8] sm:$0xf]
    %v73 = vld [vmem:[%s2 + $0xdc] sm:$0xf]
    %v74 = vld [vmem:[%s2 + $0xe0] sm:$0xf]
    %v75 = vld [vmem:[%s2 + $0xe4] sm:$0xf]
    %v76 = vld [vmem:[%s2 + $0xe8] sm:$0xf]
    %v77 = vld [vmem:[%s2 + $0xec] sm:$0xf]
    %v78 = vld [vmem:[%s2 + $0xf0] sm:$0xf]
    %v79 = vld [vmem:[%s2 + $0xf4] sm:$0xf]
    %v80 = vld [vmem:[%s2 + $0xf8] sm:$0xf]
    %v81 = vld [vmem:[%s2 + $0xfc] sm:$0xf]
    %v82 = vunpack.c.l.bf16 %v18
    %v83 = vunpack.c.l.bf16 %v19
    %v84 = vunpack.c.l.bf16 %v20
    %v85 = vunpack.c.l.bf16 %v21
    %v86 = vunpack.c.l.bf16 %v22
    %v87 = vunpack.c.l.bf16 %v23
    %v88 = vunpack.c.l.bf16 %v24
    %v89 = vunpack.c.l.bf16 %v25
    %v90 = vunpack.c.l.bf16 %v26
    %v91 = vunpack.c.l.bf16 %v27
    %v92 = vunpack.c.l.bf16 %v28
    %v93 = vunpack.c.l.bf16 %v29
    %v94 = vunpack.c.l.bf16 %v30
    %v95 = vunpack.c.l.bf16 %v31
    %v96 = vunpack.c.l.bf16 %v32
    %v97 = vunpack.c.l.bf16 %v33
    %v98 = vunpack.c.l.bf16 %v34
    %v99 = vunpack.c.l.bf16 %v35
    %v100 = vunpack.c.l.bf16 %v36
    %v101 = vunpack.c.l.bf16 %v37
    %v102 = vunpack.c.l.bf16 %v38
    %v103 = vunpack.c.l.bf16 %v39
    %v104 = vunpack.c.l.bf16 %v40
    %v105 = vunpack.c.l.bf16 %v41
    %v106 = vunpack.c.l.bf16 %v42
    %v107 = vunpack.c.l.bf16 %v43
    %v108 = vunpack.c.l.bf16 %v44
    %v109 = vunpack.c.l.bf16 %v45
    %v110 = vunpack.c.l.bf16 %v46
    %v111 = vunpack.c.l.bf16 %v47
    %v112 = vunpack.c.l.bf16 %v48
    %v113 = vunpack.c.l.bf16 %v49
    %v114 = vunpack.c.l.bf16 %v50
    %v115 = vunpack.c.l.bf16 %v51
    %v116 = vunpack.c.l.bf16 %v52
    %v117 = vunpack.c.l.bf16 %v53
    %v118 = vunpack.c.l.bf16 %v54
    %v119 = vunpack.c.l.bf16 %v55
    %v120 = vunpack.c.l.bf16 %v56
    %v121 = vunpack.c.l.bf16 %v57
    %v122 = vunpack.c.l.bf16 %v58
    %v123 = vunpack.c.l.bf16 %v59
    %v124 = vunpack.c.l.bf16 %v60
    %v125 = vunpack.c.l.bf16 %v61
    %v126 = vunpack.c.l.bf16 %v62
    %v127 = vunpack.c.l.bf16 %v63
    %v128 = vunpack.c.l.bf16 %v64
    %v129 = vunpack.c.l.bf16 %v65
    %v130 = vunpack.c.l.bf16 %v66
    %v131 = vunpack.c.l.bf16 %v67
    %v132 = vunpack.c.l.bf16 %v68
    %v133 = vunpack.c.l.bf16 %v69
    %v134 = vunpack.c.l.bf16 %v70
    %v135 = vunpack.c.l.bf16 %v71
    %v136 = vunpack.c.l.bf16 %v72
    %v137 = vunpack.c.l.bf16 %v73
    %v138 = vunpack.c.l.bf16 %v74
    %v139 = vunpack.c.l.bf16 %v75
    %v140 = vunpack.c.l.bf16 %v76
    %v141 = vunpack.c.l.bf16 %v77
    %v142 = vunpack.c.l.bf16 %v78
    %v143 = vunpack.c.l.bf16 %v79
    %v144 = vunpack.c.l.bf16 %v80
    %v145 = vunpack.c.l.bf16 %v81
    %v146 = vld [vmem:[%s3] sm:$0xf]
    %v147 = vld [vmem:[%s3 + $0x4] sm:$0xf]
    %v148 = vld [vmem:[%s3 + $0x8] sm:$0xf]
    %v149 = vld [vmem:[%s3 + $0xc] sm:$0xf]
    %v150 = vld [vmem:[%s3 + $0x10] sm:$0xf]
    %v151 = vld [vmem:[%s3 + $0x14] sm:$0xf]
    %v152 = vld [vmem:[%s3 + $0x18] sm:$0xf]
    %v153 = vld [vmem:[%s3 + $0x1c] sm:$0xf]
    %v154 = vld [vmem:[%s3 + $0x20] sm:$0xf]
    %v155 = vld [vmem:[%s3 + $0x24] sm:$0xf]
    %v156 = vld [vmem:[%s3 + $0x28] sm:$0xf]
    %v157 = vld [vmem:[%s3 + $0x2c] sm:$0xf]
    %v158 = vld [vmem:[%s3 + $0x30] sm:$0xf]
    %v159 = vld [vmem:[%s3 + $0x34] sm:$0xf]
    %v160 = vld [vmem:[%s3 + $0x38] sm:$0xf]
    %v161 = vld [vmem:[%s3 + $0x3c] sm:$0xf]
    %v162 = vld [vmem:[%s3 + $0x40] sm:$0xf]
    %v163 = vld [vmem:[%s3 + $0x44] sm:$0xf]
    %v164 = vld [vmem:[%s3 + $0x48] sm:$0xf]
    %v165 = vld [vmem:[%s3 + $0x4c] sm:$0xf]
    %v166 = vld [vmem:[%s3 + $0x50] sm:$0xf]
    %v167 = vld [vmem:[%s3 + $0x54] sm:$0xf]
    %v168 = vld [vmem:[%s3 + $0x58] sm:$0xf]
    %v169 = vld [vmem:[%s3 + $0x5c] sm:$0xf]
    %v170 = vld [vmem:[%s3 + $0x60] sm:$0xf]
    %v171 = vld [vmem:[%s3 + $0x64] sm:$0xf]
    %v172 = vld [vmem:[%s3 + $0x68] sm:$0xf]
    %v173 = vld [vmem:[%s3 + $0x6c] sm:$0xf]
    %v174 = vld [vmem:[%s3 + $0x70] sm:$0xf]
    %v175 = vld [vmem:[%s3 + $0x74] sm:$0xf]
    %v176 = vld [vmem:[%s3 + $0x78] sm:$0xf]
    %v177 = vld [vmem:[%s3 + $0x7c] sm:$0xf]
    %v178 = vld [vmem:[%s3 + $0x80] sm:$0xf]
    %v179 = vld [vmem:[%s3 + $0x84] sm:$0xf]
    %v180 = vld [vmem:[%s3 + $0x88] sm:$0xf]
    %v181 = vld [vmem:[%s3 + $0x8c] sm:$0xf]
    %v182 = vld [vmem:[%s3 + $0x90] sm:$0xf]
    %v183 = vld [vmem:[%s3 + $0x94] sm:$0xf]
    %v184 = vld [vmem:[%s3 + $0x98] sm:$0xf]
    %v185 = vld [vmem:[%s3 + $0x9c] sm:$0xf]
    %v186 = vld [vmem:[%s3 + $0xa0] sm:$0xf]
    %v187 = vld [vmem:[%s3 + $0xa4] sm:$0xf]
    %v188 = vld [vmem:[%s3 + $0xa8] sm:$0xf]
    %v189 = vld [vmem:[%s3 + $0xac] sm:$0xf]
    %v190 = vld [vmem:[%s3 + $0xb0] sm:$0xf]
    %v191 = vld [vmem:[%s3 + $0xb4] sm:$0xf]
    %v192 = vld [vmem:[%s3 + $0xb8] sm:$0xf]
    %v193 = vld [vmem:[%s3 + $0xbc] sm:$0xf]
    %v194 = vld [vmem:[%s3 + $0xc0] sm:$0xf]
    %v195 = vld [vmem:[%s3 + $0xc4] sm:$0xf]
    %v196 = vld [vmem:[%s3 + $0xc8] sm:$0xf]
    %v197 = vld [vmem:[%s3 + $0xcc] sm:$0xf]
    %v198 = vld [vmem:[%s3 + $0xd0] sm:$0xf]
    %v199 = vld [vmem:[%s3 + $0xd4] sm:$0xf]
    %v200 = vld [vmem:[%s3 + $0xd8] sm:$0xf]
    %v201 = vld [vmem:[%s3 + $0xdc] sm:$0xf]
    %v202 = vld [vmem:[%s3 + $0xe0] sm:$0xf]
    %v203 = vld [vmem:[%s3 + $0xe4] sm:$0xf]
    %v204 = vld [vmem:[%s3 + $0xe8] sm:$0xf]
    %v205 = vld [vmem:[%s3 + $0xec] sm:$0xf]
    %v206 = vld [vmem:[%s3 + $0xf0] sm:$0xf]
    %v207 = vld [vmem:[%s3 + $0xf4] sm:$0xf]
    %v208 = vld [vmem:[%s3 + $0xf8] sm:$0xf]
    %v209 = vld [vmem:[%s3 + $0xfc] sm:$0xf]
    %v210 = vunpack.c.l.bf16 %v146
    %v211 = vunpack.c.l.bf16 %v147
    %v212 = vunpack.c.l.bf16 %v148
    %v213 = vunpack.c.l.bf16 %v149
    %v214 = vunpack.c.l.bf16 %v150
    %v215 = vunpack.c.l.bf16 %v151
    %v216 = vunpack.c.l.bf16 %v152
    %v217 = vunpack.c.l.bf16 %v153
    %v218 = vunpack.c.l.bf16 %v154
    %v219 = vunpack.c.l.bf16 %v155
    %v220 = vunpack.c.l.bf16 %v156
    %v221 = vunpack.c.l.bf16 %v157
    %v222 = vunpack.c.l.bf16 %v158
    %v223 = vunpack.c.l.bf16 %v159
    %v224 = vunpack.c.l.bf16 %v160
    %v225 = vunpack.c.l.bf16 %v161
    %v226 = vunpack.c.l.bf16 %v162
    %v227 = vunpack.c.l.bf16 %v163
    %v228 = vunpack.c.l.bf16 %v164
    %v229 = vunpack.c.l.bf16 %v165
    %v230 = vunpack.c.l.bf16 %v166
    %v231 = vunpack.c.l.bf16 %v167
    %v232 = vunpack.c.l.bf16 %v168
    %v233 = vunpack.c.l.bf16 %v169
    %v234 = vunpack.c.l.bf16 %v170
    %v235 = vunpack.c.l.bf16 %v171
    %v236 = vunpack.c.l.bf16 %v172
    %v237 = vunpack.c.l.bf16 %v173
    %v238 = vunpack.c.l.bf16 %v174
    %v239 = vunpack.c.l.bf16 %v175
    %v240 = vunpack.c.l.bf16 %v176
    %v241 = vunpack.c.l.bf16 %v177
    %v242 = vunpack.c.l.bf16 %v178
    %v243 = vunpack.c.l.bf16 %v179
    %v244 = vunpack.c.l.bf16 %v180
    %v245 = vunpack.c.l.bf16 %v181
    %v246 = vunpack.c.l.bf16 %v182
    %v247 = vunpack.c.l.bf16 %v183
    %v248 = vunpack.c.l.bf16 %v184
    %v249 = vunpack.c.l.bf16 %v185
    %v250 = vunpack.c.l.bf16 %v186
    %v251 = vunpack.c.l.bf16 %v187
    %v252 = vunpack.c.l.bf16 %v188
    %v253 = vunpack.c.l.bf16 %v189
    %v254 = vunpack.c.l.bf16 %v190
    %v255 = vunpack.c.l.bf16 %v191
    %v256 = vunpack.c.l.bf16 %v192
    %v257 = vunpack.c.l.bf16 %v193
    %v258 = vunpack.c.l.bf16 %v194
    %v259 = vunpack.c.l.bf16 %v195
    %v260 = vunpack.c.l.bf16 %v196
    %v261 = vunpack.c.l.bf16 %v197
    %v262 = vunpack.c.l.bf16 %v198
    %v263 = vunpack.c.l.bf16 %v199
    %v264 = vunpack.c.l.bf16 %v200
    %v265 = vunpack.c.l.bf16 %v201
    %v266 = vunpack.c.l.bf16 %v202
    %v267 = vunpack.c.l.bf16 %v203
    %v268 = vunpack.c.l.bf16 %v204
    %v269 = vunpack.c.l.bf16 %v205
    %v270 = vunpack.c.l.bf16 %v206
    %v271 = vunpack.c.l.bf16 %v207
    %v272 = vunpack.c.l.bf16 %v208
    %v273 = vunpack.c.l.bf16 %v209
    %v274 = vld [vmem:[%s0] sm:$0x1]
    %v276 = vlaneseq
    %v277 = vshrl.u32 %v276, 7
    %v278 = vsub.s32 0, %v277
    %v279 = vrot.slane %v274, %v278
    %v281 = vmul.f32 %v82, %v279
    %v282 = vmul.f32 %v83, %v279
    %v283 = vmul.f32 %v84, %v279
    %v284 = vmul.f32 %v85, %v279
    %v285 = vmul.f32 %v86, %v279
    %v286 = vmul.f32 %v87, %v279
    %v287 = vmul.f32 %v88, %v279
    %v288 = vmul.f32 %v89, %v279
    %v289 = vmul.f32 %v90, %v279
    %v290 = vmul.f32 %v91, %v279
    %v291 = vmul.f32 %v92, %v279
    %v292 = vmul.f32 %v93, %v279
    %v293 = vmul.f32 %v94, %v279
    %v294 = vmul.f32 %v95, %v279
    %v295 = vmul.f32 %v96, %v279
    %v296 = vmul.f32 %v97, %v279
    %v297 = vmul.f32 %v98, %v279
    %v298 = vmul.f32 %v99, %v279
    %v299 = vmul.f32 %v100, %v279
    %v300 = vmul.f32 %v101, %v279
    %v301 = vmul.f32 %v102, %v279
    %v302 = vmul.f32 %v103, %v279
    %v303 = vmul.f32 %v104, %v279
    %v304 = vmul.f32 %v105, %v279
    %v305 = vmul.f32 %v106, %v279
    %v306 = vmul.f32 %v107, %v279
    %v307 = vmul.f32 %v108, %v279
    %v308 = vmul.f32 %v109, %v279
    %v309 = vmul.f32 %v110, %v279
    %v310 = vmul.f32 %v111, %v279
    %v311 = vmul.f32 %v112, %v279
    %v312 = vmul.f32 %v113, %v279
    %v313 = vmul.f32 %v114, %v279
    %v314 = vmul.f32 %v115, %v279
    %v315 = vmul.f32 %v116, %v279
    %v316 = vmul.f32 %v117, %v279
    %v317 = vmul.f32 %v118, %v279
    %v318 = vmul.f32 %v119, %v279
    %v319 = vmul.f32 %v120, %v279
    %v320 = vmul.f32 %v121, %v279
    %v321 = vmul.f32 %v122, %v279
    %v322 = vmul.f32 %v123, %v279
    %v323 = vmul.f32 %v124, %v279
    %v324 = vmul.f32 %v125, %v279
    %v325 = vmul.f32 %v126, %v279
    %v326 = vmul.f32 %v127, %v279
    %v327 = vmul.f32 %v128, %v279
    %v328 = vmul.f32 %v129, %v279
    %v329 = vmul.f32 %v130, %v279
    %v330 = vmul.f32 %v131, %v279
    %v331 = vmul.f32 %v132, %v279
    %v332 = vmul.f32 %v133, %v279
    %v333 = vmul.f32 %v134, %v279
    %v334 = vmul.f32 %v135, %v279
    %v335 = vmul.f32 %v136, %v279
    %v336 = vmul.f32 %v137, %v279
    %v337 = vmul.f32 %v138, %v279
    %v338 = vmul.f32 %v139, %v279
    %v339 = vmul.f32 %v140, %v279
    %v340 = vmul.f32 %v141, %v279
    %v341 = vmul.f32 %v142, %v279
    %v342 = vmul.f32 %v143, %v279
    %v343 = vmul.f32 %v144, %v279
    %v344 = vmul.f32 %v145, %v279
    %v345 = vld [vmem:[%s1] sm:$0x1]
    %v347 = vlaneseq
    %v348 = vshrl.u32 %v347, 7
    %v349 = vsub.s32 0, %v348
    %v350 = vrot.slane %v345, %v349
    %v352 = vadd.f32 %v281, %v350
    %v353 = vadd.f32 %v282, %v350
    %v354 = vadd.f32 %v283, %v350
    %v355 = vadd.f32 %v284, %v350
    %v356 = vadd.f32 %v285, %v350
    %v357 = vadd.f32 %v286, %v350
    %v358 = vadd.f32 %v287, %v350
    %v359 = vadd.f32 %v288, %v350
    %v360 = vadd.f32 %v289, %v350
    %v361 = vadd.f32 %v290, %v350
    %v362 = vadd.f32 %v291, %v350
    %v363 = vadd.f32 %v292, %v350
    %v364 = vadd.f32 %v293, %v350
    %v365 = vadd.f32 %v294, %v350
    %v366 = vadd.f32 %v295, %v350
    %v367 = vadd.f32 %v296, %v350
    %v368 = vadd.f32 %v297, %v350
    %v369 = vadd.f32 %v298, %v350
    %v370 = vadd.f32 %v299, %v350
    %v371 = vadd.f32 %v300, %v350
    %v372 = vadd.f32 %v301, %v350
    %v373 = vadd.f32 %v302, %v350
    %v374 = vadd.f32 %v303, %v350
    %v375 = vadd.f32 %v304, %v350
    %v376 = vadd.f32 %v305, %v350
    %v377 = vadd.f32 %v306, %v350
    %v378 = vadd.f32 %v307, %v350
    %v379 = vadd.f32 %v308, %v350
    %v380 = vadd.f32 %v309, %v350
    %v381 = vadd.f32 %v310, %v350
    %v382 = vadd.f32 %v311, %v350
    %v383 = vadd.f32 %v312, %v350
    %v384 = vadd.f32 %v313, %v350
    %v385 = vadd.f32 %v314, %v350
    %v386 = vadd.f32 %v315, %v350
    %v387 = vadd.f32 %v316, %v350
    %v388 = vadd.f32 %v317, %v350
    %v389 = vadd.f32 %v318, %v350
    %v390 = vadd.f32 %v319, %v350
    %v391 = vadd.f32 %v320, %v350
    %v392 = vadd.f32 %v321, %v350
    %v393 = vadd.f32 %v322, %v350
    %v394 = vadd.f32 %v323, %v350
    %v395 = vadd.f32 %v324, %v350
    %v396 = vadd.f32 %v325, %v350
    %v397 = vadd.f32 %v326, %v350
    %v398 = vadd.f32 %v327, %v350
    %v399 = vadd.f32 %v328, %v350
    %v400 = vadd.f32 %v329, %v350
    %v401 = vadd.f32 %v330, %v350
    %v402 = vadd.f32 %v331, %v350
    %v403 = vadd.f32 %v332, %v350
    %v404 = vadd.f32 %v333, %v350
    %v405 = vadd.f32 %v334, %v350
    %v406 = vadd.f32 %v335, %v350
    %v407 = vadd.f32 %v336, %v350
    %v408 = vadd.f32 %v337, %v350
    %v409 = vadd.f32 %v338, %v350
    %v410 = vadd.f32 %v339, %v350
    %v411 = vadd.f32 %v340, %v350
    %v412 = vadd.f32 %v341, %v350
    %v413 = vadd.f32 %v342, %v350
    %v414 = vadd.f32 %v343, %v350
    %v415 = vadd.f32 %v344, %v350
    %v416 = vadd.f32 %v352, %v210
    %v417 = vadd.f32 %v353, %v211
    %v418 = vadd.f32 %v354, %v212
    %v419 = vadd.f32 %v355, %v213
    %v420 = vadd.f32 %v356, %v214
    %v421 = vadd.f32 %v357, %v215
    %v422 = vadd.f32 %v358, %v216
    %v423 = vadd.f32 %v359, %v217
    %v424 = vadd.f32 %v360, %v218
    %v425 = vadd.f32 %v361, %v219
    %v426 = vadd.f32 %v362, %v220
    %v427 = vadd.f32 %v363, %v221
    %v428 = vadd.f32 %v364, %v222
    %v429 = vadd.f32 %v365, %v223
    %v430 = vadd.f32 %v366, %v224
    %v431 = vadd.f32 %v367, %v225
    %v432 = vadd.f32 %v368, %v226
    %v433 = vadd.f32 %v369, %v227
    %v434 = vadd.f32 %v370, %v228
    %v435 = vadd.f32 %v371, %v229
    %v436 = vadd.f32 %v372, %v230
    %v437 = vadd.f32 %v373, %v231
    %v438 = vadd.f32 %v374, %v232
    %v439 = vadd.f32 %v375, %v233
    %v440 = vadd.f32 %v376, %v234
    %v441 = vadd.f32 %v377, %v235
    %v442 = vadd.f32 %v378, %v236
    %v443 = vadd.f32 %v379, %v237
    %v444 = vadd.f32 %v380, %v238
    %v445 = vadd.f32 %v381, %v239
    %v446 = vadd.f32 %v382, %v240
    %v447 = vadd.f32 %v383, %v241
    %v448 = vadd.f32 %v384, %v242
    %v449 = vadd.f32 %v385, %v243
    %v450 = vadd.f32 %v386, %v244
    %v451 = vadd.f32 %v387, %v245
    %v452 = vadd.f32 %v388, %v246
    %v453 = vadd.f32 %v389, %v247
    %v454 = vadd.f32 %v390, %v248
    %v455 = vadd.f32 %v391, %v249
    %v456 = vadd.f32 %v392, %v250
    %v457 = vadd.f32 %v393, %v251
    %v458 = vadd.f32 %v394, %v252
    %v459 = vadd.f32 %v395, %v253
    %v460 = vadd.f32 %v396, %v254
    %v461 = vadd.f32 %v397, %v255
    %v462 = vadd.f32 %v398, %v256
    %v463 = vadd.f32 %v399, %v257
    %v464 = vadd.f32 %v400, %v258
    %v465 = vadd.f32 %v401, %v259
    %v466 = vadd.f32 %v402, %v260
    %v467 = vadd.f32 %v403, %v261
    %v468 = vadd.f32 %v404, %v262
    %v469 = vadd.f32 %v405, %v263
    %v470 = vadd.f32 %v406, %v264
    %v471 = vadd.f32 %v407, %v265
    %v472 = vadd.f32 %v408, %v266
    %v473 = vadd.f32 %v409, %v267
    %v474 = vadd.f32 %v410, %v268
    %v475 = vadd.f32 %v411, %v269
    %v476 = vadd.f32 %v412, %v270
    %v477 = vadd.f32 %v413, %v271
    %v478 = vadd.f32 %v414, %v272
    %v479 = vadd.f32 %v415, %v273
    %v480 = vmax.f32 %v416, 0.0
    %v481 = vmax.f32 %v417, 0.0
    %v482 = vmax.f32 %v418, 0.0
    %v483 = vmax.f32 %v419, 0.0
    %v484 = vmax.f32 %v420, 0.0
    %v485 = vmax.f32 %v421, 0.0
    %v486 = vmax.f32 %v422, 0.0
    %v487 = vmax.f32 %v423, 0.0
    %v488 = vmax.f32 %v424, 0.0
    %v489 = vmax.f32 %v425, 0.0
    %v490 = vmax.f32 %v426, 0.0
    %v491 = vmax.f32 %v427, 0.0
    %v492 = vmax.f32 %v428, 0.0
    %v493 = vmax.f32 %v429, 0.0
    %v494 = vmax.f32 %v430, 0.0
    %v495 = vmax.f32 %v431, 0.0
    %v496 = vmax.f32 %v432, 0.0
    %v497 = vmax.f32 %v433, 0.0
    %v498 = vmax.f32 %v434, 0.0
    %v499 = vmax.f32 %v435, 0.0
    %v500 = vmax.f32 %v436, 0.0
    %v501 = vmax.f32 %v437, 0.0
    %v502 = vmax.f32 %v438, 0.0
    %v503 = vmax.f32 %v439, 0.0
    %v504 = vmax.f32 %v440, 0.0
    %v505 = vmax.f32 %v441, 0.0
    %v506 = vmax.f32 %v442, 0.0
    %v507 = vmax.f32 %v443, 0.0
    %v508 = vmax.f32 %v444, 0.0
    %v509 = vmax.f32 %v445, 0.0
    %v510 = vmax.f32 %v446, 0.0
    %v511 = vmax.f32 %v447, 0.0
    %v512 = vmax.f32 %v448, 0.0
    %v513 = vmax.f32 %v449, 0.0
    %v514 = vmax.f32 %v450, 0.0
    %v515 = vmax.f32 %v451, 0.0
    %v516 = vmax.f32 %v452, 0.0
    %v517 = vmax.f32 %v453, 0.0
    %v518 = vmax.f32 %v454, 0.0
    %v519 = vmax.f32 %v455, 0.0
    %v520 = vmax.f32 %v456, 0.0
    %v521 = vmax.f32 %v457, 0.0
    %v522 = vmax.f32 %v458, 0.0
    %v523 = vmax.f32 %v459, 0.0
    %v524 = vmax.f32 %v460, 0.0
    %v525 = vmax.f32 %v461, 0.0
    %v526 = vmax.f32 %v462, 0.0
    %v527 = vmax.f32 %v463, 0.0
    %v528 = vmax.f32 %v464, 0.0
    %v529 = vmax.f32 %v465, 0.0
    %v530 = vmax.f32 %v466, 0.0
    %v531 = vmax.f32 %v467, 0.0
    %v532 = vmax.f32 %v468, 0.0
    %v533 = vmax.f32 %v469, 0.0
    %v534 = vmax.f32 %v470, 0.0
    %v535 = vmax.f32 %v471, 0.0
    %v536 = vmax.f32 %v472, 0.0
    %v537 = vmax.f32 %v473, 0.0
    %v538 = vmax.f32 %v474, 0.0
    %v539 = vmax.f32 %v475, 0.0
    %v540 = vmax.f32 %v476, 0.0
    %v541 = vmax.f32 %v477, 0.0
    %v542 = vmax.f32 %v478, 0.0
    %v543 = vmax.f32 %v479, 0.0
    %544 = vst [vmem:[#allocation2] sm:$0xff] %v480
    %545 = vst [vmem:[#allocation2 + $0x8] sm:$0xff] %v481
    %546 = vst [vmem:[#allocation2 + $0x10] sm:$0xff] %v482
    %547 = vst [vmem:[#allocation2 + $0x18] sm:$0xff] %v483
    %548 = vst [vmem:[#allocation2 + $0x20] sm:$0xff] %v484
    %549 = vst [vmem:[#allocation2 + $0x28] sm:$0xff] %v485
    %550 = vst [vmem:[#allocation2 + $0x30] sm:$0xff] %v486
    %551 = vst [vmem:[#allocation2 + $0x38] sm:$0xff] %v487
    %552 = vst [vmem:[#allocation2 + $0x40] sm:$0xff] %v488
    %553 = vst [vmem:[#allocation2 + $0x48] sm:$0xff] %v489
    %554 = vst [vmem:[#allocation2 + $0x50] sm:$0xff] %v490
    %555 = vst [vmem:[#allocation2 + $0x58] sm:$0xff] %v491
    %556 = vst [vmem:[#allocation2 + $0x60] sm:$0xff] %v492
    %557 = vst [vmem:[#allocation2 + $0x68] sm:$0xff] %v493
    %558 = vst [vmem:[#allocation2 + $0x70] sm:$0xff] %v494
    %559 = vst [vmem:[#allocation2 + $0x78] sm:$0xff] %v495
    %560 = vst [vmem:[#allocation2 + $0x80] sm:$0xff] %v496
    %561 = vst [vmem:[#allocation2 + $0x88] sm:$0xff] %v497
    %562 = vst [vmem:[#allocation2 + $0x90] sm:$0xff] %v498
    %563 = vst [vmem:[#allocation2 + $0x98] sm:$0xff] %v499
    %564 = vst [vmem:[#allocation2 + $0xa0] sm:$0xff] %v500
    %565 = vst [vmem:[#allocation2 + $0xa8] sm:$0xff] %v501
    %566 = vst [vmem:[#allocation2 + $0xb0] sm:$0xff] %v502
    %567 = vst [vmem:[#allocation2 + $0xb8] sm:$0xff] %v503
    %568 = vst [vmem:[#allocation2 + $0xc0] sm:$0xff] %v504
    %569 = vst [vmem:[#allocation2 + $0xc8] sm:$0xff] %v505
    %570 = vst [vmem:[#allocation2 + $0xd0] sm:$0xff] %v506
    %571 = vst [vmem:[#allocation2 + $0xd8] sm:$0xff] %v507
    %572 = vst [vmem:[#allocation2 + $0xe0] sm:$0xff] %v508
    %573 = vst [vmem:[#allocation2 + $0xe8] sm:$0xff] %v509
    %574 = vst [vmem:[#allocation2 + $0xf0] sm:$0xff] %v510
    %575 = vst [vmem:[#allocation2 + $0xf8] sm:$0xff] %v511
    %576 = vst [vmem:[#allocation2 + $0x100] sm:$0xff] %v512
    %577 = vst [vmem:[#allocation2 + $0x108] sm:$0xff] %v513
    %578 = vst [vmem:[#allocation2 + $0x110] sm:$0xff] %v514
    %579 = vst [vmem:[#allocation2 + $0x118] sm:$0xff] %v515
    %580 = vst [vmem:[#allocation2 + $0x120] sm:$0xff] %v516
    %581 = vst [vmem:[#allocation2 + $0x128] sm:$0xff] %v517
    %582 = vst [vmem:[#allocation2 + $0x130] sm:$0xff] %v518
    %583 = vst [vmem:[#allocation2 + $0x138] sm:$0xff] %v519
    %584 = vst [vmem:[#allocation2 + $0x140] sm:$0xff] %v520
    %585 = vst [vmem:[#allocation2 + $0x148] sm:$0xff] %v521
    %586 = vst [vmem:[#allocation2 + $0x150] sm:$0xff] %v522
    %587 = vst [vmem:[#allocation2 + $0x158] sm:$0xff] %v523
    %588 = vst [vmem:[#allocation2 + $0x160] sm:$0xff] %v524
    %589 = vst [vmem:[#allocation2 + $0x168] sm:$0xff] %v525
    %590 = vst [vmem:[#allocation2 + $0x170] sm:$0xff] %v526
    %591 = vst [vmem:[#allocation2 + $0x178] sm:$0xff] %v527
    %592 = vst [vmem:[#allocation2 + $0x180] sm:$0xff] %v528
    %593 = vst [vmem:[#allocation2 + $0x188] sm:$0xff] %v529
    %594 = vst [vmem:[#allocation2 + $0x190] sm:$0xff] %v530
    %595 = vst [vmem:[#allocation2 + $0x198] sm:$0xff] %v531
    %596 = vst [vmem:[#allocation2 + $0x1a0] sm:$0xff] %v532
    %597 = vst [vmem:[#allocation2 + $0x1a8] sm:$0xff] %v533
    %598 = vst [vmem:[#allocation2 + $0x1b0] sm:$0xff] %v534
    %599 = vst [vmem:[#allocation2 + $0x1b8] sm:$0xff] %v535
    %600 = vst [vmem:[#allocation2 + $0x1c0] sm:$0xff] %v536
    %601 = vst [vmem:[#allocation2 + $0x1c8] sm:$0xff] %v537
    %602 = vst [vmem:[#allocation2 + $0x1d0] sm:$0xff] %v538
    %603 = vst [vmem:[#allocation2 + $0x1d8] sm:$0xff] %v539
    %604 = vst [vmem:[#allocation2 + $0x1e0] sm:$0xff] %v540
    %605 = vst [vmem:[#allocation2 + $0x1e8] sm:$0xff] %v541
    %606 = vst [vmem:[#allocation2 + $0x1f0] sm:$0xff] %v542
    %607 = vst [vmem:[#allocation2 + $0x1f8] sm:$0xff] %v543
    // Predicated region
    $region18: #{bottleneck_forward.7} parent=1 // pred_check
      _
    $region19: #{bottleneck_forward.7} parent=1 // pred_check_branch
      %609 = sbr.rel (0) target = $region21
    $region20: #{bottleneck_forward.7} parent=1 // pred_region
      %s611 = ssub.s32 8192, 8192
      %612 = vsyncadd [#allocation3], %s611
      %s613 = sshll.u32 [#allocation2], 4
      %s614 = int_to_ptr.vmem [resolvable:$true] %s613
      %619 = dma.vmem_to_hbm [thread:$0]  %s614, 8192, %s4, [#allocation3], 128, 128, 8
    $region21: #{bottleneck_forward.7} parent=1 // pred_fallthru
      _
    // Predicated region
    $region22: #{bottleneck_forward.7} parent=1 // pred_check
      _
    $region23: #{bottleneck_forward.7} parent=1 // pred_check_branch
      %621 = sbr.rel (0) target = $region25
    $region24: #{bottleneck_forward.7} parent=1 // pred_region
      %622 = dma.done [#allocation3], 8192
    $region25: #{bottleneck_forward.7} parent=1 // pred_fallthru
      _
    %623 = vsyncpa [#allocation3], 1

// kernel: bottleneck_forward.6
$region0: #{bottleneck_forward.6}
  #allocation0 [shape = 'u32[]', space=smem, size = 0x4, offset = 0x4, fixed_abs, tag = 'smem constant byte address 0x4 - core index']
  #allocation1 [shape = 'u32[144,128]{1,0:T(1,128)}', space=vmem, size = 0x12000, scoped, tag = 'internal scratch']
  %s0 = inlined_call_operand.vmem [shape: f32[1,128], index: 0, kind: input, shape index: {}]
  %s1 = inlined_call_operand.vmem [shape: f32[1,128], index: 1, kind: input, shape index: {}]
  %s2 = inlined_call_operand.vmem [shape: bf16[512,128], index: 2, kind: input, shape index: {}]
  %s3 = inlined_call_operand.vmem [shape: bf16[128,128], index: 3, kind: input, shape index: {}]
  %s4 = inlined_call_operand.vmem [shape: bf16[512,128], index: 4, kind: output, shape index: {0}]
  %s5 = inlined_call_operand.vmem [shape: f32[1,8,128], index: 5, kind: output, shape index: {1}]
  %6 = xla_tuple %s4, %s5
  %s7 = sld [smem:[#allocation0]]
  $region34: #{bottleneck_forward.6} parent=0
    _
  %s9 = ssub.s32 1, %s7
  %s10 = scalar_select 0, %s9, %s7
  // Predicated region
  $region2: #{bottleneck_forward.6} parent=0 // pred_check
    _
  $region3: #{bottleneck_forward.6} parent=0 // pred_check_branch
    %12 = sbr.rel (0) target = $region5
  $region4: #{bottleneck_forward.6} parent=0 // pred_region
    _
  $region5: #{bottleneck_forward.6} parent=0 // pred_fallthru
    _
  // Predicated region
  $region6: #{bottleneck_forward.6} parent=0 // pred_check
    _
  $region7: #{bottleneck_forward.6} parent=0 // pred_check_branch
    %14 = sbr.rel (0) target = $region9
  $region8: #{bottleneck_forward.6} parent=0 // pred_region
    _
  $region9: #{bottleneck_forward.6} parent=0 // pred_fallthru
    _
  // Predicated region
  $region10: #{bottleneck_forward.6} parent=0 // pred_check
    _
  $region11: #{bottleneck_forward.6} parent=0 // pred_check_branch
    %16 = sbr.rel (0) target = $region13
  $region12: #{bottleneck_forward.6} parent=0 // pred_region
    _
  $region13: #{bottleneck_forward.6} parent=0 // pred_fallthru
    _
  // Predicated region
  $region14: #{bottleneck_forward.6} parent=0 // pred_check
    _
  $region15: #{bottleneck_forward.6} parent=0 // pred_check_branch
    %18 = sbr.rel (0) target = $region17
  $region16: #{bottleneck_forward.6} parent=0 // pred_region
    _
  $region17: #{bottleneck_forward.6} parent=0 // pred_fallthru
    _
  %v20 = vld [vmem:[%s2] sm:$0xf]
  %v21 = vld [vmem:[%s2 + $0x4] sm:$0xf]
  %v22 = vld [vmem:[%s2 + $0x8] sm:$0xf]
  %v23 = vld [vmem:[%s2 + $0xc] sm:$0xf]
  %v24 = vld [vmem:[%s2 + $0x10] sm:$0xf]
  %v25 = vld [vmem:[%s2 + $0x14] sm:$0xf]
  %v26 = vld [vmem:[%s2 + $0x18] sm:$0xf]
  %v27 = vld [vmem:[%s2 + $0x1c] sm:$0xf]
  %v28 = vld [vmem:[%s2 + $0x20] sm:$0xf]
  %v29 = vld [vmem:[%s2 + $0x24] sm:$0xf]
  %v30 = vld [vmem:[%s2 + $0x28] sm:$0xf]
  %v31 = vld [vmem:[%s2 + $0x2c] sm:$0xf]
  %v32 = vld [vmem:[%s2 + $0x30] sm:$0xf]
  %v33 = vld [vmem:[%s2 + $0x34] sm:$0xf]
  %v34 = vld [vmem:[%s2 + $0x38] sm:$0xf]
  %v35 = vld [vmem:[%s2 + $0x3c] sm:$0xf]
  %v36 = vld [vmem:[%s2 + $0x40] sm:$0xf]
  %v37 = vld [vmem:[%s2 + $0x44] sm:$0xf]
  %v38 = vld [vmem:[%s2 + $0x48] sm:$0xf]
  %v39 = vld [vmem:[%s2 + $0x4c] sm:$0xf]
  %v40 = vld [vmem:[%s2 + $0x50] sm:$0xf]
  %v41 = vld [vmem:[%s2 + $0x54] sm:$0xf]
  %v42 = vld [vmem:[%s2 + $0x58] sm:$0xf]
  %v43 = vld [vmem:[%s2 + $0x5c] sm:$0xf]
  %v44 = vld [vmem:[%s2 + $0x60] sm:$0xf]
  %v45 = vld [vmem:[%s2 + $0x64] sm:$0xf]
  %v46 = vld [vmem:[%s2 + $0x68] sm:$0xf]
  %v47 = vld [vmem:[%s2 + $0x6c] sm:$0xf]
  %v48 = vld [vmem:[%s2 + $0x70] sm:$0xf]
  %v49 = vld [vmem:[%s2 + $0x74] sm:$0xf]
  %v50 = vld [vmem:[%s2 + $0x78] sm:$0xf]
  %v51 = vld [vmem:[%s2 + $0x7c] sm:$0xf]
  %v52 = vld [vmem:[%s2 + $0x80] sm:$0xf]
  %v53 = vld [vmem:[%s2 + $0x84] sm:$0xf]
  %v54 = vld [vmem:[%s2 + $0x88] sm:$0xf]
  %v55 = vld [vmem:[%s2 + $0x8c] sm:$0xf]
  %v56 = vld [vmem:[%s2 + $0x90] sm:$0xf]
  %v57 = vld [vmem:[%s2 + $0x94] sm:$0xf]
  %v58 = vld [vmem:[%s2 + $0x98] sm:$0xf]
  %v59 = vld [vmem:[%s2 + $0x9c] sm:$0xf]
  %v60 = vld [vmem:[%s2 + $0xa0] sm:$0xf]
  %v61 = vld [vmem:[%s2 + $0xa4] sm:$0xf]
  %v62 = vld [vmem:[%s2 + $0xa8] sm:$0xf]
  %v63 = vld [vmem:[%s2 + $0xac] sm:$0xf]
  %v64 = vld [vmem:[%s2 + $0xb0] sm:$0xf]
  %v65 = vld [vmem:[%s2 + $0xb4] sm:$0xf]
  %v66 = vld [vmem:[%s2 + $0xb8] sm:$0xf]
  %v67 = vld [vmem:[%s2 + $0xbc] sm:$0xf]
  %v68 = vld [vmem:[%s2 + $0xc0] sm:$0xf]
  %v69 = vld [vmem:[%s2 + $0xc4] sm:$0xf]
  %v70 = vld [vmem:[%s2 + $0xc8] sm:$0xf]
  %v71 = vld [vmem:[%s2 + $0xcc] sm:$0xf]
  %v72 = vld [vmem:[%s2 + $0xd0] sm:$0xf]
  %v73 = vld [vmem:[%s2 + $0xd4] sm:$0xf]
  %v74 = vld [vmem:[%s2 + $0xd8] sm:$0xf]
  %v75 = vld [vmem:[%s2 + $0xdc] sm:$0xf]
  %v76 = vld [vmem:[%s2 + $0xe0] sm:$0xf]
  %v77 = vld [vmem:[%s2 + $0xe4] sm:$0xf]
  %v78 = vld [vmem:[%s2 + $0xe8] sm:$0xf]
  %v79 = vld [vmem:[%s2 + $0xec] sm:$0xf]
  %v80 = vld [vmem:[%s2 + $0xf0] sm:$0xf]
  %v81 = vld [vmem:[%s2 + $0xf4] sm:$0xf]
  %v82 = vld [vmem:[%s2 + $0xf8] sm:$0xf]
  %v83 = vld [vmem:[%s2 + $0xfc] sm:$0xf]
  %v84 = vld [vmem:[%s0] sm:$0x1]
  %v85 = vunpack.c.l.bf16 %v20
  %v86 = vunpack.c.l.bf16 %v21
  %v87 = vunpack.c.l.bf16 %v22
  %v88 = vunpack.c.l.bf16 %v23
  %v89 = vunpack.c.l.bf16 %v24
  %v90 = vunpack.c.l.bf16 %v25
  %v91 = vunpack.c.l.bf16 %v26
  %v92 = vunpack.c.l.bf16 %v27
  %v93 = vunpack.c.l.bf16 %v28
  %v94 = vunpack.c.l.bf16 %v29
  %v95 = vunpack.c.l.bf16 %v30
  %v96 = vunpack.c.l.bf16 %v31
  %v97 = vunpack.c.l.bf16 %v32
  %v98 = vunpack.c.l.bf16 %v33
  %v99 = vunpack.c.l.bf16 %v34
  %v100 = vunpack.c.l.bf16 %v35
  %v101 = vunpack.c.l.bf16 %v36
  %v102 = vunpack.c.l.bf16 %v37
  %v103 = vunpack.c.l.bf16 %v38
  %v104 = vunpack.c.l.bf16 %v39
  %v105 = vunpack.c.l.bf16 %v40
  %v106 = vunpack.c.l.bf16 %v41
  %v107 = vunpack.c.l.bf16 %v42
  %v108 = vunpack.c.l.bf16 %v43
  %v109 = vunpack.c.l.bf16 %v44
  %v110 = vunpack.c.l.bf16 %v45
  %v111 = vunpack.c.l.bf16 %v46
  %v112 = vunpack.c.l.bf16 %v47
  %v113 = vunpack.c.l.bf16 %v48
  %v114 = vunpack.c.l.bf16 %v49
  %v115 = vunpack.c.l.bf16 %v50
  %v116 = vunpack.c.l.bf16 %v51
  %v117 = vunpack.c.l.bf16 %v52
  %v118 = vunpack.c.l.bf16 %v53
  %v119 = vunpack.c.l.bf16 %v54
  %v120 = vunpack.c.l.bf16 %v55
  %v121 = vunpack.c.l.bf16 %v56
  %v122 = vunpack.c.l.bf16 %v57
  %v123 = vunpack.c.l.bf16 %v58
  %v124 = vunpack.c.l.bf16 %v59
  %v125 = vunpack.c.l.bf16 %v60
  %v126 = vunpack.c.l.bf16 %v61
  %v127 = vunpack.c.l.bf16 %v62
  %v128 = vunpack.c.l.bf16 %v63
  %v129 = vunpack.c.l.bf16 %v64
  %v130 = vunpack.c.l.bf16 %v65
  %v131 = vunpack.c.l.bf16 %v66
  %v132 = vunpack.c.l.bf16 %v67
  %v133 = vunpack.c.l.bf16 %v68
  %v134 = vunpack.c.l.bf16 %v69
  %v135 = vunpack.c.l.bf16 %v70
  %v136 = vunpack.c.l.bf16 %v71
  %v137 = vunpack.c.l.bf16 %v72
  %v138 = vunpack.c.l.bf16 %v73
  %v139 = vunpack.c.l.bf16 %v74
  %v140 = vunpack.c.l.bf16 %v75
  %v141 = vunpack.c.l.bf16 %v76
  %v142 = vunpack.c.l.bf16 %v77
  %v143 = vunpack.c.l.bf16 %v78
  %v144 = vunpack.c.l.bf16 %v79
  %v145 = vunpack.c.l.bf16 %v80
  %v146 = vunpack.c.l.bf16 %v81
  %v147 = vunpack.c.l.bf16 %v82
  %v148 = vunpack.c.l.bf16 %v83
  %v150 = vlaneseq
  %v151 = vshrl.u32 %v150, 7
  %v152 = vsub.s32 0, %v151
  %v153 = vrot.slane %v84, %v152
  %v155 = vmul.f32 %v85, %v153
  %v156 = vmul.f32 %v86, %v153
  %v157 = vmul.f32 %v87, %v153
  %v158 = vmul.f32 %v88, %v153
  %v159 = vmul.f32 %v89, %v153
  %v160 = vmul.f32 %v90, %v153
  %v161 = vmul.f32 %v91, %v153
  %v162 = vmul.f32 %v92, %v153
  %v163 = vmul.f32 %v93, %v153
  %v164 = vmul.f32 %v94, %v153
  %v165 = vmul.f32 %v95, %v153
  %v166 = vmul.f32 %v96, %v153
  %v167 = vmul.f32 %v97, %v153
  %v168 = vmul.f32 %v98, %v153
  %v169 = vmul.f32 %v99, %v153
  %v170 = vmul.f32 %v100, %v153
  %v171 = vmul.f32 %v101, %v153
  %v172 = vmul.f32 %v102, %v153
  %v173 = vmul.f32 %v103, %v153
  %v174 = vmul.f32 %v104, %v153
  %v175 = vmul.f32 %v105, %v153
  %v176 = vmul.f32 %v106, %v153
  %v177 = vmul.f32 %v107, %v153
  %v178 = vmul.f32 %v108, %v153
  %v179 = vmul.f32 %v109, %v153
  %v180 = vmul.f32 %v110, %v153
  %v181 = vmul.f32 %v111, %v153
  %v182 = vmul.f32 %v112, %v153
  %v183 = vmul.f32 %v113, %v153
  %v184 = vmul.f32 %v114, %v153
  %v185 = vmul.f32 %v115, %v153
  %v186 = vmul.f32 %v116, %v153
  %v187 = vmul.f32 %v117, %v153
  %v188 = vmul.f32 %v118, %v153
  %v189 = vmul.f32 %v119, %v153
  %v190 = vmul.f32 %v120, %v153
  %v191 = vmul.f32 %v121, %v153
  %v192 = vmul.f32 %v122, %v153
  %v193 = vmul.f32 %v123, %v153
  %v194 = vmul.f32 %v124, %v153
  %v195 = vmul.f32 %v125, %v153
  %v196 = vmul.f32 %v126, %v153
  %v197 = vmul.f32 %v127, %v153
  %v198 = vmul.f32 %v128, %v153
  %v199 = vmul.f32 %v129, %v153
  %v200 = vmul.f32 %v130, %v153
  %v201 = vmul.f32 %v131, %v153
  %v202 = vmul.f32 %v132, %v153
  %v203 = vmul.f32 %v133, %v153
  %v204 = vmul.f32 %v134, %v153
  %v205 = vmul.f32 %v135, %v153
  %v206 = vmul.f32 %v136, %v153
  %v207 = vmul.f32 %v137, %v153
  %v208 = vmul.f32 %v138, %v153
  %v209 = vmul.f32 %v139, %v153
  %v210 = vmul.f32 %v140, %v153
  %v211 = vmul.f32 %v141, %v153
  %v212 = vmul.f32 %v142, %v153
  %v213 = vmul.f32 %v143, %v153
  %v214 = vmul.f32 %v144, %v153
  %v215 = vmul.f32 %v145, %v153
  %v216 = vmul.f32 %v146, %v153
  %v217 = vmul.f32 %v147, %v153
  %v218 = vmul.f32 %v148, %v153
  %v219 = vld [vmem:[%s1] sm:$0x1]
  %v221 = vlaneseq
  %v222 = vshrl.u32 %v221, 7
  %v223 = vsub.s32 0, %v222
  %v224 = vrot.slane %v219, %v223
  %v226 = vadd.f32 %v155, %v224
  %v227 = vadd.f32 %v156, %v224
  %v228 = vadd.f32 %v157, %v224
  %v229 = vadd.f32 %v158, %v224
  %v230 = vadd.f32 %v159, %v224
  %v231 = vadd.f32 %v160, %v224
  %v232 = vadd.f32 %v161, %v224
  %v233 = vadd.f32 %v162, %v224
  %v234 = vadd.f32 %v163, %v224
  %v235 = vadd.f32 %v164, %v224
  %v236 = vadd.f32 %v165, %v224
  %v237 = vadd.f32 %v166, %v224
  %v238 = vadd.f32 %v167, %v224
  %v239 = vadd.f32 %v168, %v224
  %v240 = vadd.f32 %v169, %v224
  %v241 = vadd.f32 %v170, %v224
  %v242 = vadd.f32 %v171, %v224
  %v243 = vadd.f32 %v172, %v224
  %v244 = vadd.f32 %v173, %v224
  %v245 = vadd.f32 %v174, %v224
  %v246 = vadd.f32 %v175, %v224
  %v247 = vadd.f32 %v176, %v224
  %v248 = vadd.f32 %v177, %v224
  %v249 = vadd.f32 %v178, %v224
  %v250 = vadd.f32 %v179, %v224
  %v251 = vadd.f32 %v180, %v224
  %v252 = vadd.f32 %v181, %v224
  %v253 = vadd.f32 %v182, %v224
  %v254 = vadd.f32 %v183, %v224
  %v255 = vadd.f32 %v184, %v224
  %v256 = vadd.f32 %v185, %v224
  %v257 = vadd.f32 %v186, %v224
  %v258 = vadd.f32 %v187, %v224
  %v259 = vadd.f32 %v188, %v224
  %v260 = vadd.f32 %v189, %v224
  %v261 = vadd.f32 %v190, %v224
  %v262 = vadd.f32 %v191, %v224
  %v263 = vadd.f32 %v192, %v224
  %v264 = vadd.f32 %v193, %v224
  %v265 = vadd.f32 %v194, %v224
  %v266 = vadd.f32 %v195, %v224
  %v267 = vadd.f32 %v196, %v224
  %v268 = vadd.f32 %v197, %v224
  %v269 = vadd.f32 %v198, %v224
  %v270 = vadd.f32 %v199, %v224
  %v271 = vadd.f32 %v200, %v224
  %v272 = vadd.f32 %v201, %v224
  %v273 = vadd.f32 %v202, %v224
  %v274 = vadd.f32 %v203, %v224
  %v275 = vadd.f32 %v204, %v224
  %v276 = vadd.f32 %v205, %v224
  %v277 = vadd.f32 %v206, %v224
  %v278 = vadd.f32 %v207, %v224
  %v279 = vadd.f32 %v208, %v224
  %v280 = vadd.f32 %v209, %v224
  %v281 = vadd.f32 %v210, %v224
  %v282 = vadd.f32 %v211, %v224
  %v283 = vadd.f32 %v212, %v224
  %v284 = vadd.f32 %v213, %v224
  %v285 = vadd.f32 %v214, %v224
  %v286 = vadd.f32 %v215, %v224
  %v287 = vadd.f32 %v216, %v224
  %v288 = vadd.f32 %v217, %v224
  %v289 = vadd.f32 %v218, %v224
  %v290 = vmax.f32 %v226, 0.0
  %v291 = vmax.f32 %v227, 0.0
  %v292 = vmax.f32 %v228, 0.0
  %v293 = vmax.f32 %v229, 0.0
  %v294 = vmax.f32 %v230, 0.0
  %v295 = vmax.f32 %v231, 0.0
  %v296 = vmax.f32 %v232, 0.0
  %v297 = vmax.f32 %v233, 0.0
  %v298 = vmax.f32 %v234, 0.0
  %v299 = vmax.f32 %v235, 0.0
  %v300 = vmax.f32 %v236, 0.0
  %v301 = vmax.f32 %v237, 0.0
  %v302 = vmax.f32 %v238, 0.0
  %v303 = vmax.f32 %v239, 0.0
  %v304 = vmax.f32 %v240, 0.0
  %v305 = vmax.f32 %v241, 0.0
  %v306 = vmax.f32 %v242, 0.0
  %v307 = vmax.f32 %v243, 0.0
  %v308 = vmax.f32 %v244, 0.0
  %v309 = vmax.f32 %v245, 0.0
  %v310 = vmax.f32 %v246, 0.0
  %v311 = vmax.f32 %v247, 0.0
  %v312 = vmax.f32 %v248, 0.0
  %v313 = vmax.f32 %v249, 0.0
  %v314 = vmax.f32 %v250, 0.0
  %v315 = vmax.f32 %v251, 0.0
  %v316 = vmax.f32 %v252, 0.0
  %v317 = vmax.f32 %v253, 0.0
  %v318 = vmax.f32 %v254, 0.0
  %v319 = vmax.f32 %v255, 0.0
  %v320 = vmax.f32 %v256, 0.0
  %v321 = vmax.f32 %v257, 0.0
  %v322 = vmax.f32 %v258, 0.0
  %v323 = vmax.f32 %v259, 0.0
  %v324 = vmax.f32 %v260, 0.0
  %v325 = vmax.f32 %v261, 0.0
  %v326 = vmax.f32 %v262, 0.0
  %v327 = vmax.f32 %v263, 0.0
  %v328 = vmax.f32 %v264, 0.0
  %v329 = vmax.f32 %v265, 0.0
  %v330 = vmax.f32 %v266, 0.0
  %v331 = vmax.f32 %v267, 0.0
  %v332 = vmax.f32 %v268, 0.0
  %v333 = vmax.f32 %v269, 0.0
  %v334 = vmax.f32 %v270, 0.0
  %v335 = vmax.f32 %v271, 0.0
  %v336 = vmax.f32 %v272, 0.0
  %v337 = vmax.f32 %v273, 0.0
  %v338 = vmax.f32 %v274, 0.0
  %v339 = vmax.f32 %v275, 0.0
  %v340 = vmax.f32 %v276, 0.0
  %v341 = vmax.f32 %v277, 0.0
  %v342 = vmax.f32 %v278, 0.0
  %v343 = vmax.f32 %v279, 0.0
  %v344 = vmax.f32 %v280, 0.0
  %v345 = vmax.f32 %v281, 0.0
  %v346 = vmax.f32 %v282, 0.0
  %v347 = vmax.f32 %v283, 0.0
  %v348 = vmax.f32 %v284, 0.0
  %v349 = vmax.f32 %v285, 0.0
  %v350 = vmax.f32 %v286, 0.0
  %v351 = vmax.f32 %v287, 0.0
  %v352 = vmax.f32 %v288, 0.0
  %v353 = vmax.f32 %v289, 0.0
  %v354 = vpack.c.bf16 %v291, %v290
  %v355 = vpack.c.bf16 %v293, %v292
  %v356 = vpack.c.bf16 %v295, %v294
  %v357 = vpack.c.bf16 %v297, %v296
  %v358 = vpack.c.bf16 %v299, %v298
  %v359 = vpack.c.bf16 %v301, %v300
  %v360 = vpack.c.bf16 %v303, %v302
  %v361 = vpack.c.bf16 %v305, %v304
  %v362 = vpack.c.bf16 %v307, %v306
  %v363 = vpack.c.bf16 %v309, %v308
  %v364 = vpack.c.bf16 %v311, %v310
  %v365 = vpack.c.bf16 %v313, %v312
  %v366 = vpack.c.bf16 %v315, %v314
  %v367 = vpack.c.bf16 %v317, %v316
  %v368 = vpack.c.bf16 %v319, %v318
  %v369 = vpack.c.bf16 %v321, %v320
  %v370 = vpack.c.bf16 %v323, %v322
  %v371 = vpack.c.bf16 %v325, %v324
  %v372 = vpack.c.bf16 %v327, %v326
  %v373 = vpack.c.bf16 %v329, %v328
  %v374 = vpack.c.bf16 %v331, %v330
  %v375 = vpack.c.bf16 %v333, %v332
  %v376 = vpack.c.bf16 %v335, %v334
  %v377 = vpack.c.bf16 %v337, %v336
  %v378 = vpack.c.bf16 %v339, %v338
  %v379 = vpack.c.bf16 %v341, %v340
  %v380 = vpack.c.bf16 %v343, %v342
  %v381 = vpack.c.bf16 %v345, %v344
  %v382 = vpack.c.bf16 %v347, %v346
  %v383 = vpack.c.bf16 %v349, %v348
  %v384 = vpack.c.bf16 %v351, %v350
  %v385 = vpack.c.bf16 %v353, %v352
  %v386 = vld [vmem:[%s3] sm:$0xf]
  %v387 = vld [vmem:[%s3 + $0x4] sm:$0xf]
  %v388 = vld [vmem:[%s3 + $0x8] sm:$0xf]
  %v389 = vld [vmem:[%s3 + $0xc] sm:$0xf]
  %v390 = vld [vmem:[%s3 + $0x10] sm:$0xf]
  %v391 = vld [vmem:[%s3 + $0x14] sm:$0xf]
  %v392 = vld [vmem:[%s3 + $0x18] sm:$0xf]
  %v393 = vld [vmem:[%s3 + $0x1c] sm:$0xf]
  %v394 = vld [vmem:[%s3 + $0x20] sm:$0xf]
  %v395 = vld [vmem:[%s3 + $0x24] sm:$0xf]
  %v396 = vld [vmem:[%s3 + $0x28] sm:$0xf]
  %v397 = vld [vmem:[%s3 + $0x2c] sm:$0xf]
  %v398 = vld [vmem:[%s3 + $0x30] sm:$0xf]
  %v399 = vld [vmem:[%s3 + $0x34] sm:$0xf]
  %v400 = vld [vmem:[%s3 + $0x38] sm:$0xf]
  %v401 = vld [vmem:[%s3 + $0x3c] sm:$0xf]
  %v418 = vunpack.c.l.b16 %v386
  %v419 = vunpack.c.l.b16 %v387
  %v420 = vunpack.c.l.b16 %v388
  %v421 = vunpack.c.l.b16 %v389
  %v422 = vunpack.c.l.b16 %v390
  %v423 = vunpack.c.l.b16 %v391
  %v424 = vunpack.c.l.b16 %v392
  %v425 = vunpack.c.l.b16 %v393
  %v426 = vunpack.c.l.b16 %v394
  %v427 = vunpack.c.l.b16 %v395
  %v428 = vunpack.c.l.b16 %v396
  %v429 = vunpack.c.l.b16 %v397
  %v430 = vunpack.c.l.b16 %v398
  %v431 = vunpack.c.l.b16 %v399
  %v432 = vunpack.c.l.b16 %v400
  %v433 = vunpack.c.l.b16 %v401
  %v434 = vpack.c.b16 %v419, %v418
  %v435 = vpack.c.b16 %v421, %v420
  %v436 = vpack.c.b16 %v423, %v422
  %v437 = vpack.c.b16 %v425, %v424
  %v438 = vpack.c.b16 %v427, %v426
  %v439 = vpack.c.b16 %v429, %v428
  %v440 = vpack.c.b16 %v431, %v430
  %v441 = vpack.c.b16 %v433, %v432
  %450 = vmatprep.subr.bf16.mxu0 0
  %451 = vmatpush1.bf16.msra.mxu0 %v441
  %452 = vmatprep.subr.bf16.mxu0 0
  %453 = vmatpush1.bf16.msra.mxu0 %v440
  %454 = vmatprep.subr.bf16.mxu0 0
  %455 = vmatpush1.bf16.msra.mxu0 %v439
  %456 = vmatprep.subr.bf16.mxu0 0
  %457 = vmatpush1.bf16.msra.mxu0 %v438
  %458 = vmatprep.subr.bf16.mxu0 0
  %459 = vmatpush1.bf16.msra.mxu0 %v437
  %460 = vmatprep.subr.bf16.mxu0 0
  %461 = vmatpush1.bf16.msra.mxu0 %v436
  %462 = vmatprep.subr.bf16.mxu0 0
  %463 = vmatpush1.bf16.msra.mxu0 %v435
  %464 = vmatprep.subr.bf16.mxu0 0
  %465 = vmatpush1.bf16.msra.mxu0 %v434
  %466 = vmatprep.subr.bf16.mxu0 0
  %467 = vmatpush2.bf16.msra.mxu0 0
  %468 = vmatprep.subr.bf16.mxu0 0
  %469 = vmatpush2.bf16.msra.mxu0 0
  %470 = vmatprep.subr.bf16.mxu0 0
  %471 = vmatpush2.bf16.msra.mxu0 0
  %472 = vmatprep.subr.bf16.mxu0 0
  %473 = vmatpush2.bf16.msra.mxu0 0
  %474 = vmatprep.subr.bf16.mxu0 0
  %475 = vmatpush2.bf16.msra.mxu0 0
  %476 = vmatprep.subr.bf16.mxu0 0
  %477 = vmatpush2.bf16.msra.mxu0 0
  %478 = vmatprep.subr.bf16.mxu0 0
  %479 = vmatpush2.bf16.msra.mxu0 0
  %480 = vmatprep.subr.bf16.mxu0 0
  %481 = vmatpush2.bf16.msra.mxu0 0
  %482 = vmatprep.mubr.bf16.mxu0 0
  %483 = vmatmul.mubr.bf16.gmra.mxu0 %v354
  %v484 = vpop.f32.mrf.mxu0
  %v485 = vadd.f32 0.0, %v484
  %v486 = vpop.f32.mrf.mxu0
  %v487 = vpop.f32.mrf.mxu0
  %v488 = vadd.f32 0.0, %v487
  %v489 = vpop.f32.mrf.mxu0
  %490 = vmatprep.mubr.bf16.mxu0 0
  %491 = vmatmul.mubr.bf16.gmra.mxu0 %v355
  %v492 = vpop.f32.mrf.mxu0
  %v493 = vadd.f32 0.0, %v492
  %v494 = vpop.f32.mrf.mxu0
  %v495 = vpop.f32.mrf.mxu0
  %v496 = vadd.f32 0.0, %v495
  %v497 = vpop.f32.mrf.mxu0
  %498 = vmatprep.mubr.bf16.mxu0 0
  %499 = vmatmul.mubr.bf16.gmra.mxu0 %v356
  %v500 = vpop.f32.mrf.mxu0
  %v501 = vadd.f32 0.0, %v500
  %v502 = vpop.f32.mrf.mxu0
  %v503 = vpop.f32.mrf.mxu0
  %v504 = vadd.f32 0.0, %v503
  %v505 = vpop.f32.mrf.mxu0
  %506 = vmatprep.mubr.bf16.mxu0 0
  %507 = vmatmul.mubr.bf16.gmra.mxu0 %v357
  %v508 = vpop.f32.mrf.mxu0
  %v509 = vadd.f32 0.0, %v508
  %v510 = vpop.f32.mrf.mxu0
  %v511 = vpop.f32.mrf.mxu0
  %v512 = vadd.f32 0.0, %v511
  %v513 = vpop.f32.mrf.mxu0
  %514 = vmatprep.mubr.bf16.mxu0 0
  %515 = vmatmul.mubr.bf16.gmra.mxu0 %v358
  %v516 = vpop.f32.mrf.mxu0
  %v517 = vadd.f32 0.0, %v516
  %v518 = vpop.f32.mrf.mxu0
  %v519 = vpop.f32.mrf.mxu0
  %v520 = vadd.f32 0.0, %v519
  %v521 = vpop.f32.mrf.mxu0
  %522 = vmatprep.mubr.bf16.mxu0 0
  %523 = vmatmul.mubr.bf16.gmra.mxu0 %v359
  %v524 = vpop.f32.mrf.mxu0
  %v525 = vadd.f32 0.0, %v524
  %v526 = vpop.f32.mrf.mxu0
  %v527 = vpop.f32.mrf.mxu0
  %v528 = vadd.f32 0.0, %v527
  %v529 = vpop.f32.mrf.mxu0
  %530 = vmatprep.mubr.bf16.mxu0 0
  %531 = vmatmul.mubr.bf16.gmra.mxu0 %v360
  %v532 = vpop.f32.mrf.mxu0
  %v533 = vadd.f32 0.0, %v532
  %v534 = vpop.f32.mrf.mxu0
  %v535 = vpop.f32.mrf.mxu0
  %v536 = vadd.f32 0.0, %v535
  %v537 = vpop.f32.mrf.mxu0
  %538 = vmatprep.mubr.bf16.mxu0 0
  %539 = vmatmul.mubr.bf16.gmra.mxu0 %v361
  %v540 = vpop.f32.mrf.mxu0
  %v541 = vadd.f32 0.0, %v540
  %v542 = vpop.f32.mrf.mxu0
  %v543 = vpop.f32.mrf.mxu0
  %v544 = vadd.f32 0.0, %v543
  %v545 = vpop.f32.mrf.mxu0
  %546 = vmatprep.mubr.bf16.mxu0 0
  %547 = vmatmul.mubr.bf16.gmra.mxu0 %v362
  %v548 = vpop.f32.mrf.mxu0
  %v549 = vadd.f32 0.0, %v548
  %v550 = vpop.f32.mrf.mxu0
  %v551 = vpop.f32.mrf.mxu0
  %v552 = vadd.f32 0.0, %v551
  %v553 = vpop.f32.mrf.mxu0
  %554 = vmatprep.mubr.bf16.mxu0 0
  %555 = vmatmul.mubr.bf16.gmra.mxu0 %v363
  %v556 = vpop.f32.mrf.mxu0
  %v557 = vadd.f32 0.0, %v556
  %v558 = vpop.f32.mrf.mxu0
  %v559 = vpop.f32.mrf.mxu0
  %v560 = vadd.f32 0.0, %v559
  %v561 = vpop.f32.mrf.mxu0
  %562 = vmatprep.mubr.bf16.mxu0 0
  %563 = vmatmul.mubr.bf16.gmra.mxu0 %v364
  %v564 = vpop.f32.mrf.mxu0
  %v565 = vadd.f32 0.0, %v564
  %v566 = vpop.f32.mrf.mxu0
  %v567 = vpop.f32.mrf.mxu0
  %v568 = vadd.f32 0.0, %v567
  %v569 = vpop.f32.mrf.mxu0
  %570 = vmatprep.mubr.bf16.mxu0 0
  %571 = vmatmul.mubr.bf16.gmra.mxu0 %v365
  %v572 = vpop.f32.mrf.mxu0
  %v573 = vadd.f32 0.0, %v572
  %v574 = vpop.f32.mrf.mxu0
  %v575 = vpop.f32.mrf.mxu0
  %v576 = vadd.f32 0.0, %v575
  %v577 = vpop.f32.mrf.mxu0
  %578 = vmatprep.mubr.bf16.mxu0 0
  %579 = vmatmul.mubr.bf16.gmra.mxu0 %v366
  %v580 = vpop.f32.mrf.mxu0
  %v581 = vadd.f32 0.0, %v580
  %v582 = vpop.f32.mrf.mxu0
  %v583 = vpop.f32.mrf.mxu0
  %v584 = vadd.f32 0.0, %v583
  %v585 = vpop.f32.mrf.mxu0
  %586 = vmatprep.mubr.bf16.mxu0 0
  %587 = vmatmul.mubr.bf16.gmra.mxu0 %v367
  %v588 = vpop.f32.mrf.mxu0
  %v589 = vadd.f32 0.0, %v588
  %v590 = vpop.f32.mrf.mxu0
  %v591 = vpop.f32.mrf.mxu0
  %v592 = vadd.f32 0.0, %v591
  %v593 = vpop.f32.mrf.mxu0
  %594 = vmatprep.mubr.bf16.mxu0 0
  %595 = vmatmul.mubr.bf16.gmra.mxu0 %v368
  %v596 = vpop.f32.mrf.mxu0
  %v597 = vadd.f32 0.0, %v596
  %v598 = vpop.f32.mrf.mxu0
  %v599 = vpop.f32.mrf.mxu0
  %v600 = vadd.f32 0.0, %v599
  %v601 = vpop.f32.mrf.mxu0
  %602 = vmatprep.mubr.bf16.mxu0 0
  %603 = vmatmul.mubr.bf16.gmra.mxu0 %v369
  %v604 = vpop.f32.mrf.mxu0
  %v605 = vadd.f32 0.0, %v604
  %v606 = vpop.f32.mrf.mxu0
  %v607 = vpop.f32.mrf.mxu0
  %v608 = vadd.f32 0.0, %v607
  %v609 = vpop.f32.mrf.mxu0
  %610 = vmatprep.mubr.bf16.mxu0 0
  %611 = vmatmul.mubr.bf16.gmra.mxu0 %v370
  %v612 = vpop.f32.mrf.mxu0
  %v613 = vadd.f32 0.0, %v612
  %v614 = vpop.f32.mrf.mxu0
  %v615 = vpop.f32.mrf.mxu0
  %v616 = vadd.f32 0.0, %v615
  %v617 = vpop.f32.mrf.mxu0
  %618 = vmatprep.mubr.bf16.mxu0 0
  %619 = vmatmul.mubr.bf16.gmra.mxu0 %v371
  %v620 = vpop.f32.mrf.mxu0
  %v621 = vadd.f32 0.0, %v620
  %v622 = vpop.f32.mrf.mxu0
  %v623 = vpop.f32.mrf.mxu0
  %v624 = vadd.f32 0.0, %v623
  %v625 = vpop.f32.mrf.mxu0
  %626 = vmatprep.mubr.bf16.mxu0 0
  %627 = vmatmul.mubr.bf16.gmra.mxu0 %v372
  %v628 = vpop.f32.mrf.mxu0
  %v629 = vadd.f32 0.0, %v628
  %v630 = vpop.f32.mrf.mxu0
  %v631 = vpop.f32.mrf.mxu0
  %v632 = vadd.f32 0.0, %v631
  %v633 = vpop.f32.mrf.mxu0
  %634 = vmatprep.mubr.bf16.mxu0 0
  %635 = vmatmul.mubr.bf16.gmra.mxu0 %v373
  %v636 = vpop.f32.mrf.mxu0
  %v637 = vadd.f32 0.0, %v636
  %v638 = vpop.f32.mrf.mxu0
  %v639 = vpop.f32.mrf.mxu0
  %v640 = vadd.f32 0.0, %v639
  %v641 = vpop.f32.mrf.mxu0
  %642 = vmatprep.mubr.bf16.mxu0 0
  %643 = vmatmul.mubr.bf16.gmra.mxu0 %v374
  %v644 = vpop.f32.mrf.mxu0
  %v645 = vadd.f32 0.0, %v644
  %v646 = vpop.f32.mrf.mxu0
  %v647 = vpop.f32.mrf.mxu0
  %v648 = vadd.f32 0.0, %v647
  %v649 = vpop.f32.mrf.mxu0
  %650 = vmatprep.mubr.bf16.mxu0 0
  %651 = vmatmul.mubr.bf16.gmra.mxu0 %v375
  %v652 = vpop.f32.mrf.mxu0
  %v653 = vadd.f32 0.0, %v652
  %v654 = vpop.f32.mrf.mxu0
  %v655 = vpop.f32.mrf.mxu0
  %v656 = vadd.f32 0.0, %v655
  %v657 = vpop.f32.mrf.mxu0
  %658 = vmatprep.mubr.bf16.mxu0 0
  %659 = vmatmul.mubr.bf16.gmra.mxu0 %v376
  %v660 = vpop.f32.mrf.mxu0
  %v661 = vadd.f32 0.0, %v660
  %v662 = vpop.f32.mrf.mxu0
  %v663 = vpop.f32.mrf.mxu0
  %v664 = vadd.f32 0.0, %v663
  %v665 = vpop.f32.mrf.mxu0
  %666 = vmatprep.mubr.bf16.mxu0 0
  %667 = vmatmul.mubr.bf16.gmra.mxu0 %v377
  %v668 = vpop.f32.mrf.mxu0
  %v669 = vadd.f32 0.0, %v668
  %v670 = vpop.f32.mrf.mxu0
  %v671 = vpop.f32.mrf.mxu0
  %v672 = vadd.f32 0.0, %v671
  %v673 = vpop.f32.mrf.mxu0
  %674 = vmatprep.mubr.bf16.mxu0 0
  %675 = vmatmul.mubr.bf16.gmra.mxu0 %v378
  %v676 = vpop.f32.mrf.mxu0
  %v677 = vadd.f32 0.0, %v676
  %v678 = vpop.f32.mrf.mxu0
  %v679 = vpop.f32.mrf.mxu0
  %v680 = vadd.f32 0.0, %v679
  %v681 = vpop.f32.mrf.mxu0
  %682 = vmatprep.mubr.bf16.mxu0 0
  %683 = vmatmul.mubr.bf16.gmra.mxu0 %v379
  %v684 = vpop.f32.mrf.mxu0
  %v685 = vadd.f32 0.0, %v684
  %v686 = vpop.f32.mrf.mxu0
  %v687 = vpop.f32.mrf.mxu0
  %v688 = vadd.f32 0.0, %v687
  %v689 = vpop.f32.mrf.mxu0
  %690 = vmatprep.mubr.bf16.mxu0 0
  %691 = vmatmul.mubr.bf16.gmra.mxu0 %v380
  %v692 = vpop.f32.mrf.mxu0
  %v693 = vadd.f32 0.0, %v692
  %v694 = vpop.f32.mrf.mxu0
  %v695 = vpop.f32.mrf.mxu0
  %v696 = vadd.f32 0.0, %v695
  %v697 = vpop.f32.mrf.mxu0
  %698 = vmatprep.mubr.bf16.mxu0 0
  %699 = vmatmul.mubr.bf16.gmra.mxu0 %v381
  %v700 = vpop.f32.mrf.mxu0
  %v701 = vadd.f32 0.0, %v700
  %v702 = vpop.f32.mrf.mxu0
  %v703 = vpop.f32.mrf.mxu0
  %v704 = vadd.f32 0.0, %v703
  %v705 = vpop.f32.mrf.mxu0
  %706 = vmatprep.mubr.bf16.mxu0 0
  %707 = vmatmul.mubr.bf16.gmra.mxu0 %v382
  %v708 = vpop.f32.mrf.mxu0
  %v709 = vadd.f32 0.0, %v708
  %v710 = vpop.f32.mrf.mxu0
  %v711 = vpop.f32.mrf.mxu0
  %v712 = vadd.f32 0.0, %v711
  %v713 = vpop.f32.mrf.mxu0
  %714 = vmatprep.mubr.bf16.mxu0 0
  %715 = vmatmul.mubr.bf16.gmra.mxu0 %v383
  %v716 = vpop.f32.mrf.mxu0
  %v717 = vadd.f32 0.0, %v716
  %v718 = vpop.f32.mrf.mxu0
  %v719 = vpop.f32.mrf.mxu0
  %v720 = vadd.f32 0.0, %v719
  %v721 = vpop.f32.mrf.mxu0
  %722 = vmatprep.mubr.bf16.mxu0 0
  %723 = vmatmul.mubr.bf16.gmra.mxu0 %v384
  %v724 = vpop.f32.mrf.mxu0
  %v725 = vadd.f32 0.0, %v724
  %v726 = vpop.f32.mrf.mxu0
  %v727 = vpop.f32.mrf.mxu0
  %v728 = vadd.f32 0.0, %v727
  %v729 = vpop.f32.mrf.mxu0
  %730 = vmatprep.mubr.bf16.mxu0 0
  %731 = vmatmul.mubr.bf16.gmra.mxu0 %v385
  %v732 = vpop.f32.mrf.mxu0
  %v733 = vadd.f32 0.0, %v732
  %v734 = vpop.f32.mrf.mxu0
  %v735 = vpop.f32.mrf.mxu0
  %v736 = vadd.f32 0.0, %v735
  %v737 = vpop.f32.mrf.mxu0
  %738 = vdwg.mxu0
  %v739 = vpack.c.bf16 %v488, %v485
  %v740 = vpack.c.bf16 %v496, %v493
  %v741 = vpack.c.bf16 %v504, %v501
  %v742 = vpack.c.bf16 %v512, %v509
  %v743 = vpack.c.bf16 %v520, %v517
  %v744 = vpack.c.bf16 %v528, %v525
  %v745 = vpack.c.bf16 %v536, %v533
  %v746 = vpack.c.bf16 %v544, %v541
  %v747 = vpack.c.bf16 %v552, %v549
  %v748 = vpack.c.bf16 %v560, %v557
  %v749 = vpack.c.bf16 %v568, %v565
  %v750 = vpack.c.bf16 %v576, %v573
  %v751 = vpack.c.bf16 %v584, %v581
  %v752 = vpack.c.bf16 %v592, %v589
  %v753 = vpack.c.bf16 %v600, %v597
  %v754 = vpack.c.bf16 %v608, %v605
  %v755 = vpack.c.bf16 %v616, %v613
  %v756 = vpack.c.bf16 %v624, %v621
  %v757 = vpack.c.bf16 %v632, %v629
  %v758 = vpack.c.bf16 %v640, %v637
  %v759 = vpack.c.bf16 %v648, %v645
  %v760 = vpack.c.bf16 %v656, %v653
  %v761 = vpack.c.bf16 %v664, %v661
  %v762 = vpack.c.bf16 %v672, %v669
  %v763 = vpack.c.bf16 %v680, %v677
  %v764 = vpack.c.bf16 %v688, %v685
  %v765 = vpack.c.bf16 %v696, %v693
  %v766 = vpack.c.bf16 %v704, %v701
  %v767 = vpack.c.bf16 %v712, %v709
  %v768 = vpack.c.bf16 %v720, %v717
  %v769 = vpack.c.bf16 %v728, %v725
  %v770 = vpack.c.bf16 %v736, %v733
  %v803 = vunpack.c.l.b16 %v739
  %v804 = vunpack.c.h.b16 %v739
  %v805 = vunpack.c.l.b16 %v740
  %v806 = vunpack.c.h.b16 %v740
  %v807 = vunpack.c.l.b16 %v741
  %v808 = vunpack.c.h.b16 %v741
  %v809 = vunpack.c.l.b16 %v742
  %v810 = vunpack.c.h.b16 %v742
  %v811 = vunpack.c.l.b16 %v743
  %v812 = vunpack.c.h.b16 %v743
  %v813 = vunpack.c.l.b16 %v744
  %v814 = vunpack.c.h.b16 %v744
  %v815 = vunpack.c.l.b16 %v745
  %v816 = vunpack.c.h.b16 %v745
  %v817 = vunpack.c.l.b16 %v746
  %v818 = vunpack.c.h.b16 %v746
  %v819 = vunpack.c.l.b16 %v747
  %v820 = vunpack.c.h.b16 %v747
  %v821 = vunpack.c.l.b16 %v748
  %v822 = vunpack.c.h.b16 %v748
  %v823 = vunpack.c.l.b16 %v749
  %v824 = vunpack.c.h.b16 %v749
  %v825 = vunpack.c.l.b16 %v750
  %v826 = vunpack.c.h.b16 %v750
  %v827 = vunpack.c.l.b16 %v751
  %v828 = vunpack.c.h.b16 %v751
  %v829 = vunpack.c.l.b16 %v752
  %v830 = vunpack.c.h.b16 %v752
  %v831 = vunpack.c.l.b16 %v753
  %v832 = vunpack.c.h.b16 %v753
  %v833 = vunpack.c.l.b16 %v754
  %v834 = vunpack.c.h.b16 %v754
  %v835 = vunpack.c.l.b16 %v755
  %v836 = vunpack.c.h.b16 %v755
  %v837 = vunpack.c.l.b16 %v756
  %v838 = vunpack.c.h.b16 %v756
  %v839 = vunpack.c.l.b16 %v757
  %v840 = vunpack.c.h.b16 %v757
  %v841 = vunpack.c.l.b16 %v758
  %v842 = vunpack.c.h.b16 %v758
  %v843 = vunpack.c.l.b16 %v759
  %v844 = vunpack.c.h.b16 %v759
  %v845 = vunpack.c.l.b16 %v760
  %v846 = vunpack.c.h.b16 %v760
  %v847 = vunpack.c.l.b16 %v761
  %v848 = vunpack.c.h.b16 %v761
  %v849 = vunpack.c.l.b16 %v762
  %v850 = vunpack.c.h.b16 %v762
  %v851 = vunpack.c.l.b16 %v763
  %v852 = vunpack.c.h.b16 %v763
  %v853 = vunpack.c.l.b16 %v764
  %v854 = vunpack.c.h.b16 %v764
  %v855 = vunpack.c.l.b16 %v765
  %v856 = vunpack.c.h.b16 %v765
  %v857 = vunpack.c.l.b16 %v766
  %v858 = vunpack.c.h.b16 %v766
  %v859 = vunpack.c.l.b16 %v767
  %v860 = vunpack.c.h.b16 %v767
  %v861 = vunpack.c.l.b16 %v768
  %v862 = vunpack.c.h.b16 %v768
  %v863 = vunpack.c.l.b16 %v769
  %v864 = vunpack.c.h.b16 %v769
  %v865 = vunpack.c.l.b16 %v770
  %v866 = vunpack.c.h.b16 %v770
  %v867 = vpack.c.b16 %v803, %v803
  %v868 = vpack.c.b16 %v804, %v804
  %v869 = vpack.c.b16 %v805, %v805
  %v870 = vpack.c.b16 %v806, %v806
  %v871 = vpack.c.b16 %v807, %v807
  %v872 = vpack.c.b16 %v808, %v808
  %v873 = vpack.c.b16 %v809, %v809
  %v874 = vpack.c.b16 %v810, %v810
  %v875 = vpack.c.b16 %v811, %v811
  %v876 = vpack.c.b16 %v812, %v812
  %v877 = vpack.c.b16 %v813, %v813
  %v878 = vpack.c.b16 %v814, %v814
  %v879 = vpack.c.b16 %v815, %v815
  %v880 = vpack.c.b16 %v816, %v816
  %v881 = vpack.c.b16 %v817, %v817
  %v882 = vpack.c.b16 %v818, %v818
  %v883 = vpack.c.b16 %v819, %v819
  %v884 = vpack.c.b16 %v820, %v820
  %v885 = vpack.c.b16 %v821, %v821
  %v886 = vpack.c.b16 %v822, %v822
  %v887 = vpack.c.b16 %v823, %v823
  %v888 = vpack.c.b16 %v824, %v824
  %v889 = vpack.c.b16 %v825, %v825
  %v890 = vpack.c.b16 %v826, %v826
  %v891 = vpack.c.b16 %v827, %v827
  %v892 = vpack.c.b16 %v828, %v828
  %v893 = vpack.c.b16 %v829, %v829
  %v894 = vpack.c.b16 %v830, %v830
  %v895 = vpack.c.b16 %v831, %v831
  %v896 = vpack.c.b16 %v832, %v832
  %v897 = vpack.c.b16 %v833, %v833
  %v898 = vpack.c.b16 %v834, %v834
  %v899 = vpack.c.b16 %v835, %v835
  %v900 = vpack.c.b16 %v836, %v836
  %v901 = vpack.c.b16 %v837, %v837
  %v902 = vpack.c.b16 %v838, %v838
  %v903 = vpack.c.b16 %v839, %v839
  %v904 = vpack.c.b16 %v840, %v840
  %v905 = vpack.c.b16 %v841, %v841
  %v906 = vpack.c.b16 %v842, %v842
  %v907 = vpack.c.b16 %v843, %v843
  %v908 = vpack.c.b16 %v844, %v844
  %v909 = vpack.c.b16 %v845, %v845
  %v910 = vpack.c.b16 %v846, %v846
  %v911 = vpack.c.b16 %v847, %v847
  %v912 = vpack.c.b16 %v848, %v848
  %v913 = vpack.c.b16 %v849, %v849
  %v914 = vpack.c.b16 %v850, %v850
  %v915 = vpack.c.b16 %v851, %v851
  %v916 = vpack.c.b16 %v852, %v852
  %v917 = vpack.c.b16 %v853, %v853
  %v918 = vpack.c.b16 %v854, %v854
  %v919 = vpack.c.b16 %v855, %v855
  %v920 = vpack.c.b16 %v856, %v856
  %v921 = vpack.c.b16 %v857, %v857
  %v922 = vpack.c.b16 %v858, %v858
  %v923 = vpack.c.b16 %v859, %v859
  %v924 = vpack.c.b16 %v860, %v860
  %v925 = vpack.c.b16 %v861, %v861
  %v926 = vpack.c.b16 %v862, %v862
  %v927 = vpack.c.b16 %v863, %v863
  %v928 = vpack.c.b16 %v864, %v864
  %v929 = vpack.c.b16 %v865, %v865
  %v930 = vpack.c.b16 %v866, %v866
  %995 = vst [vmem:[%s4] sm:$0xf] %v867
  %996 = vst [vmem:[%s4 + $0x4] sm:$0xf] %v868
  %997 = vst [vmem:[%s4 + $0x8] sm:$0xf] %v869
  %998 = vst [vmem:[%s4 + $0xc] sm:$0xf] %v870
  %999 = vst [vmem:[%s4 + $0x10] sm:$0xf] %v871
  %1000 = vst [vmem:[%s4 + $0x14] sm:$0xf] %v872
  %1001 = vst [vmem:[%s4 + $0x18] sm:$0xf] %v873
  %1002 = vst [vmem:[%s4 + $0x1c] sm:$0xf] %v874
  %1003 = vst [vmem:[%s4 + $0x20] sm:$0xf] %v875
  %1004 = vst [vmem:[%s4 + $0x24] sm:$0xf] %v876
  %1005 = vst [vmem:[%s4 + $0x28] sm:$0xf] %v877
  %1006 = vst [vmem:[%s4 + $0x2c] sm:$0xf] %v878
  %1007 = vst [vmem:[%s4 + $0x30] sm:$0xf] %v879
  %1008 = vst [vmem:[%s4 + $0x34] sm:$0xf] %v880
  %1009 = vst [vmem:[%s4 + $0x38] sm:$0xf] %v881
  %1010 = vst [vmem:[%s4 + $0x3c] sm:$0xf] %v882
  %1011 = vst [vmem:[%s4 + $0x40] sm:$0xf] %v883
  %1012 = vst [vmem:[%s4 + $0x44] sm:$0xf] %v884
  %1013 = vst [vmem:[%s4 + $0x48] sm:$0xf] %v885
  %1014 = vst [vmem:[%s4 + $0x4c] sm:$0xf] %v886
  %1015 = vst [vmem:[%s4 + $0x50] sm:$0xf] %v887
  %1016 = vst [vmem:[%s4 + $0x54] sm:$0xf] %v888
  %1017 = vst [vmem:[%s4 + $0x58] sm:$0xf] %v889
  %1018 = vst [vmem:[%s4 + $0x5c] sm:$0xf] %v890
  %1019 = vst [vmem:[%s4 + $0x60] sm:$0xf] %v891
  %1020 = vst [vmem:[%s4 + $0x64] sm:$0xf] %v892
  %1021 = vst [vmem:[%s4 + $0x68] sm:$0xf] %v893
  %1022 = vst [vmem:[%s4 + $0x6c] sm:$0xf] %v894
  %1023 = vst [vmem:[%s4 + $0x70] sm:$0xf] %v895
  %1024 = vst [vmem:[%s4 + $0x74] sm:$0xf] %v896
  %1025 = vst [vmem:[%s4 + $0x78] sm:$0xf] %v897
  %1026 = vst [vmem:[%s4 + $0x7c] sm:$0xf] %v898
  %1027 = vst [vmem:[%s4 + $0x80] sm:$0xf] %v899
  %1028 = vst [vmem:[%s4 + $0x84] sm:$0xf] %v900
  %1029 = vst [vmem:[%s4 + $0x88] sm:$0xf] %v901
  %1030 = vst [vmem:[%s4 + $0x8c] sm:$0xf] %v902
  %1031 = vst [vmem:[%s4 + $0x90] sm:$0xf] %v903
  %1032 = vst [vmem:[%s4 + $0x94] sm:$0xf] %v904
  %1033 = vst [vmem:[%s4 + $0x98] sm:$0xf] %v905
  %1034 = vst [vmem:[%s4 + $0x9c] sm:$0xf] %v906
  %1035 = vst [vmem:[%s4 + $0xa0] sm:$0xf] %v907
  %1036 = vst [vmem:[%s4 + $0xa4] sm:$0xf] %v908
  %1037 = vst [vmem:[%s4 + $0xa8] sm:$0xf] %v909
  %1038 = vst [vmem:[%s4 + $0xac] sm:$0xf] %v910
  %1039 = vst [vmem:[%s4 + $0xb0] sm:$0xf] %v911
  %1040 = vst [vmem:[%s4 + $0xb4] sm:$0xf] %v912
  %1041 = vst [vmem:[%s4 + $0xb8] sm:$0xf] %v913
  %1042 = vst [vmem:[%s4 + $0xbc] sm:$0xf] %v914
  %1043 = vst [vmem:[%s4 + $0xc0] sm:$0xf] %v915
  %1044 = vst [vmem:[%s4 + $0xc4] sm:$0xf] %v916
  %1045 = vst [vmem:[%s4 + $0xc8] sm:$0xf] %v917
  %1046 = vst [vmem:[%s4 + $0xcc] sm:$0xf] %v918
  %1047 = vst [vmem:[%s4 + $0xd0] sm:$0xf] %v919
  %1048 = vst [vmem:[%s4 + $0xd4] sm:$0xf] %v920
  %1049 = vst [vmem:[%s4 + $0xd8] sm:$0xf] %v921
  %1050 = vst [vmem:[%s4 + $0xdc] sm:$0xf] %v922
  %1051 = vst [vmem:[%s4 + $0xe0] sm:$0xf] %v923
  %1052 = vst [vmem:[%s4 + $0xe4] sm:$0xf] %v924
  %1053 = vst [vmem:[%s4 + $0xe8] sm:$0xf] %v925
  %1054 = vst [vmem:[%s4 + $0xec] sm:$0xf] %v926
  %1055 = vst [vmem:[%s4 + $0xf0] sm:$0xf] %v927
  %1056 = vst [vmem:[%s4 + $0xf4] sm:$0xf] %v928
  %1057 = vst [vmem:[%s4 + $0xf8] sm:$0xf] %v929
  %1058 = vst [vmem:[%s4 + $0xfc] sm:$0xf] %v930
  %v1059 = vadd.f32 %v485, %v488
  %v1060 = vadd.f32 %v1059, %v493
  %v1061 = vadd.f32 %v1060, %v496
  %v1062 = vadd.f32 %v1061, %v501
  %v1063 = vadd.f32 %v1062, %v504
  %v1064 = vadd.f32 %v1063, %v509
  %v1065 = vadd.f32 %v1064, %v512
  %v1066 = vadd.f32 %v1065, %v517
  %v1067 = vadd.f32 %v1066, %v520
  %v1068 = vadd.f32 %v1067, %v525
  %v1069 = vadd.f32 %v1068, %v528
  %v1070 = vadd.f32 %v1069, %v533
  %v1071 = vadd.f32 %v1070, %v536
  %v1072 = vadd.f32 %v1071, %v541
  %v1073 = vadd.f32 %v1072, %v544
  %v1074 = vadd.f32 %v1073, %v549
  %v1075 = vadd.f32 %v1074, %v552
  %v1076 = vadd.f32 %v1075, %v557
  %v1077 = vadd.f32 %v1076, %v560
  %v1078 = vadd.f32 %v1077, %v565
  %v1079 = vadd.f32 %v1078, %v568
  %v1080 = vadd.f32 %v1079, %v573
  %v1081 = vadd.f32 %v1080, %v576
  %v1082 = vadd.f32 %v1081, %v581
  %v1083 = vadd.f32 %v1082, %v584
  %v1084 = vadd.f32 %v1083, %v589
  %v1085 = vadd.f32 %v1084, %v592
  %v1086 = vadd.f32 %v1085, %v597
  %v1087 = vadd.f32 %v1086, %v600
  %v1088 = vadd.f32 %v1087, %v605
  %v1089 = vadd.f32 %v1088, %v608
  %v1090 = vadd.f32 %v1089, %v613
  %v1091 = vadd.f32 %v1090, %v616
  %v1092 = vadd.f32 %v1091, %v621
  %v1093 = vadd.f32 %v1092, %v624
  %v1094 = vadd.f32 %v1093, %v629
  %v1095 = vadd.f32 %v1094, %v632
  %v1096 = vadd.f32 %v1095, %v637
  %v1097 = vadd.f32 %v1096, %v640
  %v1098 = vadd.f32 %v1097, %v645
  %v1099 = vadd.f32 %v1098, %v648
  %v1100 = vadd.f32 %v1099, %v653
  %v1101 = vadd.f32 %v1100, %v656
  %v1102 = vadd.f32 %v1101, %v661
  %v1103 = vadd.f32 %v1102, %v664
  %v1104 = vadd.f32 %v1103, %v669
  %v1105 = vadd.f32 %v1104, %v672
  %v1106 = vadd.f32 %v1105, %v677
  %v1107 = vadd.f32 %v1106, %v680
  %v1108 = vadd.f32 %v1107, %v685
  %v1109 = vadd.f32 %v1108, %v688
  %v1110 = vadd.f32 %v1109, %v693
  %v1111 = vadd.f32 %v1110, %v696
  %v1112 = vadd.f32 %v1111, %v701
  %v1113 = vadd.f32 %v1112, %v704
  %v1114 = vadd.f32 %v1113, %v709
  %v1115 = vadd.f32 %v1114, %v712
  %v1116 = vadd.f32 %v1115, %v717
  %v1117 = vadd.f32 %v1116, %v720
  %v1118 = vadd.f32 %v1117, %v725
  %v1119 = vadd.f32 %v1118, %v728
  %v1120 = vadd.f32 %v1119, %v733
  %v1121 = vadd.f32 %v1120, %v736
  %v1122 = vrot.slane %v1121, 4
  %v1123 = vadd.f32 %v1121, %v1122
  %v1124 = vrot.slane %v1123, 2
  %v1125 = vadd.f32 %v1123, %v1124
  %v1126 = vrot.slane %v1125, 1
  %v1127 = vadd.f32 %v1125, %v1126
  %v1128 = vmul.f32 %v485, %v485
  %v1129 = vmul.f32 %v488, %v488
  %v1130 = vmul.f32 %v493, %v493
  %v1131 = vmul.f32 %v496, %v496
  %v1132 = vmul.f32 %v501, %v501
  %v1133 = vmul.f32 %v504, %v504
  %v1134 = vmul.f32 %v509, %v509
  %v1135 = vmul.f32 %v512, %v512
  %v1136 = vmul.f32 %v517, %v517
  %v1137 = vmul.f32 %v520, %v520
  %v1138 = vmul.f32 %v525, %v525
  %v1139 = vmul.f32 %v528, %v528
  %v1140 = vmul.f32 %v533, %v533
  %v1141 = vmul.f32 %v536, %v536
  %v1142 = vmul.f32 %v541, %v541
  %v1143 = vmul.f32 %v544, %v544
  %v1144 = vmul.f32 %v549, %v549
  %v1145 = vmul.f32 %v552, %v552
  %v1146 = vmul.f32 %v557, %v557
  %v1147 = vmul.f32 %v560, %v560
  %v1148 = vmul.f32 %v565, %v565
  %v1149 = vmul.f32 %v568, %v568
  %v1150 = vmul.f32 %v573, %v573
  %v1151 = vmul.f32 %v576, %v576
  %v1152 = vmul.f32 %v581, %v581
  %v1153 = vmul.f32 %v584, %v584
  %v1154 = vmul.f32 %v589, %v589
  %v1155 = vmul.f32 %v592, %v592
  %v1156 = vmul.f32 %v597, %v597
  %v1157 = vmul.f32 %v600, %v600
  %v1158 = vmul.f32 %v605, %v605
  %v1159 = vmul.f32 %v608, %v608
  %v1160 = vmul.f32 %v613, %v613
  %v1161 = vmul.f32 %v616, %v616
  %v1162 = vmul.f32 %v621, %v621
  %v1163 = vmul.f32 %v624, %v624
  %v1164 = vmul.f32 %v629, %v629
  %v1165 = vmul.f32 %v632, %v632
  %v1166 = vmul.f32 %v637, %v637
  %v1167 = vmul.f32 %v640, %v640
  %v1168 = vmul.f32 %v645, %v645
  %v1169 = vmul.f32 %v648, %v648
  %v1170 = vmul.f32 %v653, %v653
  %v1171 = vmul.f32 %v656, %v656
  %v1172 = vmul.f32 %v661, %v661
  %v1173 = vmul.f32 %v664, %v664
  %v1174 = vmul.f32 %v669, %v669
  %v1175 = vmul.f32 %v672, %v672
  %v1176 = vmul.f32 %v677, %v677
  %v1177 = vmul.f32 %v680, %v680
  %v1178 = vmul.f32 %v685, %v685
  %v1179 = vmul.f32 %v688, %v688
  %v1180 = vmul.f32 %v693, %v693
  %v1181 = vmul.f32 %v696, %v696
  %v1182 = vmul.f32 %v701, %v701
  %v1183 = vmul.f32 %v704, %v704
  %v1184 = vmul.f32 %v709, %v709
  %v1185 = vmul.f32 %v712, %v712
  %v1186 = vmul.f32 %v717, %v717
  %v1187 = vmul.f32 %v720, %v720
  %v1188 = vmul.f32 %v725, %v725
  %v1189 = vmul.f32 %v728, %v728
  %v1190 = vmul.f32 %v733, %v733
  %v1191 = vmul.f32 %v736, %v736
  %v1192 = vadd.f32 %v1128, %v1129
  %v1193 = vadd.f32 %v1192, %v1130
  %v1194 = vadd.f32 %v1193, %v1131
  %v1195 = vadd.f32 %v1194, %v1132
  %v1196 = vadd.f32 %v1195, %v1133
  %v1197 = vadd.f32 %v1196, %v1134
  %v1198 = vadd.f32 %v1197, %v1135
  %v1199 = vadd.f32 %v1198, %v1136
  %v1200 = vadd.f32 %v1199, %v1137
  %v1201 = vadd.f32 %v1200, %v1138
  %v1202 = vadd.f32 %v1201, %v1139
  %v1203 = vadd.f32 %v1202, %v1140
  %v1204 = vadd.f32 %v1203, %v1141
  %v1205 = vadd.f32 %v1204, %v1142
  %v1206 = vadd.f32 %v1205, %v1143
  %v1207 = vadd.f32 %v1206, %v1144
  %v1208 = vadd.f32 %v1207, %v1145
  %v1209 = vadd.f32 %v1208, %v1146
  %v1210 = vadd.f32 %v1209, %v1147
  %v1211 = vadd.f32 %v1210, %v1148
  %v1212 = vadd.f32 %v1211, %v1149
  %v1213 = vadd.f32 %v1212, %v1150
  %v1214 = vadd.f32 %v1213, %v1151
  %v1215 = vadd.f32 %v1214, %v1152
  %v1216 = vadd.f32 %v1215, %v1153
  %v1217 = vadd.f32 %v1216, %v1154
  %v1218 = vadd.f32 %v1217, %v1155
  %v1219 = vadd.f32 %v1218, %v1156
  %v1220 = vadd.f32 %v1219, %v1157
  %v1221 = vadd.f32 %v1220, %v1158
  %v1222 = vadd.f32 %v1221, %v1159
  %v1223 = vadd.f32 %v1222, %v1160
  %v1224 = vadd.f32 %v1223, %v1161
  %v1225 = vadd.f32 %v1224, %v1162
  %v1226 = vadd.f32 %v1225, %v1163
  %v1227 = vadd.f32 %v1226, %v1164
  %v1228 = vadd.f32 %v1227, %v1165
  %v1229 = vadd.f32 %v1228, %v1166
  %v1230 = vadd.f32 %v1229, %v1167
  %v1231 = vadd.f32 %v1230, %v1168
  %v1232 = vadd.f32 %v1231, %v1169
  %v1233 = vadd.f32 %v1232, %v1170
  %v1234 = vadd.f32 %v1233, %v1171
  %v1235 = vadd.f32 %v1234, %v1172
  %v1236 = vadd.f32 %v1235, %v1173
  %v1237 = vadd.f32 %v1236, %v1174
  %v1238 = vadd.f32 %v1237, %v1175
  %v1239 = vadd.f32 %v1238, %v1176
  %v1240 = vadd.f32 %v1239, %v1177
  %v1241 = vadd.f32 %v1240, %v1178
  %v1242 = vadd.f32 %v1241, %v1179
  %v1243 = vadd.f32 %v1242, %v1180
  %v1244 = vadd.f32 %v1243, %v1181
  %v1245 = vadd.f32 %v1244, %v1182
  %v1246 = vadd.f32 %v1245, %v1183
  %v1247 = vadd.f32 %v1246, %v1184
  %v1248 = vadd.f32 %v1247, %v1185
  %v1249 = vadd.f32 %v1248, %v1186
  %v1250 = vadd.f32 %v1249, %v1187
  %v1251 = vadd.f32 %v1250, %v1188
  %v1252 = vadd.f32 %v1251, %v1189
  %v1253 = vadd.f32 %v1252, %v1190
  %v1254 = vadd.f32 %v1253, %v1191
  %v1255 = vrot.slane %v1254, 4
  %v1256 = vadd.f32 %v1254, %v1255
  %v1257 = vrot.slane %v1256, 2
  %v1258 = vadd.f32 %v1256, %v1257
  %v1259 = vrot.slane %v1258, 1
  %v1260 = vadd.f32 %v1258, %v1259
  %vm1261 = vcmask 1043456
  %v1262 = vsel %vm1261, %v1127, %v1260
  %1263 = vst [vmem:[%s5] sm:$0xff] %v1262
  // Predicated region
  $region18: #{bottleneck_forward.6} parent=0 // pred_check
    _
  $region19: #{bottleneck_forward.6} parent=0 // pred_check_branch
    %1265 = sbr.rel (0) target = $region21
  $region20: #{bottleneck_forward.6} parent=0 // pred_region
    _
  $region21: #{bottleneck_forward.6} parent=0 // pred_fallthru
    _
  // Predicated region
  $region22: #{bottleneck_forward.6} parent=0 // pred_check
    _
  $region23: #{bottleneck_forward.6} parent=0 // pred_check_branch
    %1267 = sbr.rel (0) target = $region25
  $region24: #{bottleneck_forward.6} parent=0 // pred_region
    _
  $region25: #{bottleneck_forward.6} parent=0 // pred_fallthru
    _
  // Predicated region
  $region26: #{bottleneck_forward.6} parent=0 // pred_check
    _
  $region27: #{bottleneck_forward.6} parent=0 // pred_check_branch
    %1269 = sbr.rel (0) target = $region29
  $region28: #{bottleneck_forward.6} parent=0 // pred_region
    _
  $region29: #{bottleneck_forward.6} parent=0 // pred_fallthru
    _
  // Predicated region
  $region30: #{bottleneck_forward.6} parent=0 // pred_check
    _
  $region31: #{bottleneck_forward.6} parent=0 // pred_check_branch
    %1271 = sbr.rel (0) target = $region33
  $region32: #{bottleneck_forward.6} parent=0 // pred_region
    _
  $region33: #{bottleneck_forward.6} parent=0 // pred_fallthru
    _

// kernel: bottleneck_forward.4
$region0: #{bottleneck_forward.4}
  #allocation0 [shape = 'u32[]', space=smem, size = 0x4, offset = 0x4, fixed_abs, tag = 'smem constant byte address 0x4 - core index']
  #allocation1 [shape = 'u32[144,128]{1,0:T(1,128)}', space=vmem, size = 0x12000, scoped, tag = 'internal scratch']
  %s0 = inlined_call_operand.vmem [shape: bf16[512,128], index: 0, kind: input, shape index: {}]
  %s1 = inlined_call_operand.vmem [shape: bf16[128,128], index: 1, kind: input, shape index: {}]
  %s2 = inlined_call_operand.vmem [shape: bf16[512,128], index: 2, kind: output, shape index: {0}]
  %s3 = inlined_call_operand.vmem [shape: f32[1,8,128], index: 3, kind: output, shape index: {1}]
  %4 = xla_tuple %s2, %s3
  %s5 = sld [smem:[#allocation0]]
  $region26: #{bottleneck_forward.4} parent=0
    _
  %s7 = ssub.s32 1, %s5
  %s8 = scalar_select 0, %s7, %s5
  // Predicated region
  $region2: #{bottleneck_forward.4} parent=0 // pred_check
    _
  $region3: #{bottleneck_forward.4} parent=0 // pred_check_branch
    %10 = sbr.rel (0) target = $region5
  $region4: #{bottleneck_forward.4} parent=0 // pred_region
    _
  $region5: #{bottleneck_forward.4} parent=0 // pred_fallthru
    _
  // Predicated region
  $region6: #{bottleneck_forward.4} parent=0 // pred_check
    _
  $region7: #{bottleneck_forward.4} parent=0 // pred_check_branch
    %12 = sbr.rel (0) target = $region9
  $region8: #{bottleneck_forward.4} parent=0 // pred_region
    _
  $region9: #{bottleneck_forward.4} parent=0 // pred_fallthru
    _
  %v14 = vld [vmem:[%s0] sm:$0xf]
  %v15 = vld [vmem:[%s0 + $0x4] sm:$0xf]
  %v16 = vld [vmem:[%s0 + $0x8] sm:$0xf]
  %v17 = vld [vmem:[%s0 + $0xc] sm:$0xf]
  %v18 = vld [vmem:[%s0 + $0x10] sm:$0xf]
  %v19 = vld [vmem:[%s0 + $0x14] sm:$0xf]
  %v20 = vld [vmem:[%s0 + $0x18] sm:$0xf]
  %v21 = vld [vmem:[%s0 + $0x1c] sm:$0xf]
  %v22 = vld [vmem:[%s0 + $0x20] sm:$0xf]
  %v23 = vld [vmem:[%s0 + $0x24] sm:$0xf]
  %v24 = vld [vmem:[%s0 + $0x28] sm:$0xf]
  %v25 = vld [vmem:[%s0 + $0x2c] sm:$0xf]
  %v26 = vld [vmem:[%s0 + $0x30] sm:$0xf]
  %v27 = vld [vmem:[%s0 + $0x34] sm:$0xf]
  %v28 = vld [vmem:[%s0 + $0x38] sm:$0xf]
  %v29 = vld [vmem:[%s0 + $0x3c] sm:$0xf]
  %v30 = vld [vmem:[%s0 + $0x40] sm:$0xf]
  %v31 = vld [vmem:[%s0 + $0x44] sm:$0xf]
  %v32 = vld [vmem:[%s0 + $0x48] sm:$0xf]
  %v33 = vld [vmem:[%s0 + $0x4c] sm:$0xf]
  %v34 = vld [vmem:[%s0 + $0x50] sm:$0xf]
  %v35 = vld [vmem:[%s0 + $0x54] sm:$0xf]
  %v36 = vld [vmem:[%s0 + $0x58] sm:$0xf]
  %v37 = vld [vmem:[%s0 + $0x5c] sm:$0xf]
  %v38 = vld [vmem:[%s0 + $0x60] sm:$0xf]
  %v39 = vld [vmem:[%s0 + $0x64] sm:$0xf]
  %v40 = vld [vmem:[%s0 + $0x68] sm:$0xf]
  %v41 = vld [vmem:[%s0 + $0x6c] sm:$0xf]
  %v42 = vld [vmem:[%s0 + $0x70] sm:$0xf]
  %v43 = vld [vmem:[%s0 + $0x74] sm:$0xf]
  %v44 = vld [vmem:[%s0 + $0x78] sm:$0xf]
  %v45 = vld [vmem:[%s0 + $0x7c] sm:$0xf]
  %v46 = vld [vmem:[%s0 + $0x80] sm:$0xf]
  %v47 = vld [vmem:[%s0 + $0x84] sm:$0xf]
  %v48 = vld [vmem:[%s0 + $0x88] sm:$0xf]
  %v49 = vld [vmem:[%s0 + $0x8c] sm:$0xf]
  %v50 = vld [vmem:[%s0 + $0x90] sm:$0xf]
  %v51 = vld [vmem:[%s0 + $0x94] sm:$0xf]
  %v52 = vld [vmem:[%s0 + $0x98] sm:$0xf]
  %v53 = vld [vmem:[%s0 + $0x9c] sm:$0xf]
  %v54 = vld [vmem:[%s0 + $0xa0] sm:$0xf]
  %v55 = vld [vmem:[%s0 + $0xa4] sm:$0xf]
  %v56 = vld [vmem:[%s0 + $0xa8] sm:$0xf]
  %v57 = vld [vmem:[%s0 + $0xac] sm:$0xf]
  %v58 = vld [vmem:[%s0 + $0xb0] sm:$0xf]
  %v59 = vld [vmem:[%s0 + $0xb4] sm:$0xf]
  %v60 = vld [vmem:[%s0 + $0xb8] sm:$0xf]
  %v61 = vld [vmem:[%s0 + $0xbc] sm:$0xf]
  %v62 = vld [vmem:[%s0 + $0xc0] sm:$0xf]
  %v63 = vld [vmem:[%s0 + $0xc4] sm:$0xf]
  %v64 = vld [vmem:[%s0 + $0xc8] sm:$0xf]
  %v65 = vld [vmem:[%s0 + $0xcc] sm:$0xf]
  %v66 = vld [vmem:[%s0 + $0xd0] sm:$0xf]
  %v67 = vld [vmem:[%s0 + $0xd4] sm:$0xf]
  %v68 = vld [vmem:[%s0 + $0xd8] sm:$0xf]
  %v69 = vld [vmem:[%s0 + $0xdc] sm:$0xf]
  %v70 = vld [vmem:[%s0 + $0xe0] sm:$0xf]
  %v71 = vld [vmem:[%s0 + $0xe4] sm:$0xf]
  %v72 = vld [vmem:[%s0 + $0xe8] sm:$0xf]
  %v73 = vld [vmem:[%s0 + $0xec] sm:$0xf]
  %v74 = vld [vmem:[%s0 + $0xf0] sm:$0xf]
  %v75 = vld [vmem:[%s0 + $0xf4] sm:$0xf]
  %v76 = vld [vmem:[%s0 + $0xf8] sm:$0xf]
  %v77 = vld [vmem:[%s0 + $0xfc] sm:$0xf]
  %v78 = vld [vmem:[%s1] sm:$0xf]
  %v79 = vld [vmem:[%s1 + $0x4] sm:$0xf]
  %v80 = vld [vmem:[%s1 + $0x8] sm:$0xf]
  %v81 = vld [vmem:[%s1 + $0xc] sm:$0xf]
  %v82 = vld [vmem:[%s1 + $0x10] sm:$0xf]
  %v83 = vld [vmem:[%s1 + $0x14] sm:$0xf]
  %v84 = vld [vmem:[%s1 + $0x18] sm:$0xf]
  %v85 = vld [vmem:[%s1 + $0x1c] sm:$0xf]
  %v86 = vld [vmem:[%s1 + $0x20] sm:$0xf]
  %v87 = vld [vmem:[%s1 + $0x24] sm:$0xf]
  %v88 = vld [vmem:[%s1 + $0x28] sm:$0xf]
  %v89 = vld [vmem:[%s1 + $0x2c] sm:$0xf]
  %v90 = vld [vmem:[%s1 + $0x30] sm:$0xf]
  %v91 = vld [vmem:[%s1 + $0x34] sm:$0xf]
  %v92 = vld [vmem:[%s1 + $0x38] sm:$0xf]
  %v93 = vld [vmem:[%s1 + $0x3c] sm:$0xf]
  %v158 = vunpack.c.l.b16 %v14
  %v159 = vunpack.c.l.b16 %v15
  %v160 = vunpack.c.l.b16 %v16
  %v161 = vunpack.c.l.b16 %v17
  %v162 = vunpack.c.l.b16 %v18
  %v163 = vunpack.c.l.b16 %v19
  %v164 = vunpack.c.l.b16 %v20
  %v165 = vunpack.c.l.b16 %v21
  %v166 = vunpack.c.l.b16 %v22
  %v167 = vunpack.c.l.b16 %v23
  %v168 = vunpack.c.l.b16 %v24
  %v169 = vunpack.c.l.b16 %v25
  %v170 = vunpack.c.l.b16 %v26
  %v171 = vunpack.c.l.b16 %v27
  %v172 = vunpack.c.l.b16 %v28
  %v173 = vunpack.c.l.b16 %v29
  %v174 = vunpack.c.l.b16 %v30
  %v175 = vunpack.c.l.b16 %v31
  %v176 = vunpack.c.l.b16 %v32
  %v177 = vunpack.c.l.b16 %v33
  %v178 = vunpack.c.l.b16 %v34
  %v179 = vunpack.c.l.b16 %v35
  %v180 = vunpack.c.l.b16 %v36
  %v181 = vunpack.c.l.b16 %v37
  %v182 = vunpack.c.l.b16 %v38
  %v183 = vunpack.c.l.b16 %v39
  %v184 = vunpack.c.l.b16 %v40
  %v185 = vunpack.c.l.b16 %v41
  %v186 = vunpack.c.l.b16 %v42
  %v187 = vunpack.c.l.b16 %v43
  %v188 = vunpack.c.l.b16 %v44
  %v189 = vunpack.c.l.b16 %v45
  %v190 = vunpack.c.l.b16 %v46
  %v191 = vunpack.c.l.b16 %v47
  %v192 = vunpack.c.l.b16 %v48
  %v193 = vunpack.c.l.b16 %v49
  %v194 = vunpack.c.l.b16 %v50
  %v195 = vunpack.c.l.b16 %v51
  %v196 = vunpack.c.l.b16 %v52
  %v197 = vunpack.c.l.b16 %v53
  %v198 = vunpack.c.l.b16 %v54
  %v199 = vunpack.c.l.b16 %v55
  %v200 = vunpack.c.l.b16 %v56
  %v201 = vunpack.c.l.b16 %v57
  %v202 = vunpack.c.l.b16 %v58
  %v203 = vunpack.c.l.b16 %v59
  %v204 = vunpack.c.l.b16 %v60
  %v205 = vunpack.c.l.b16 %v61
  %v206 = vunpack.c.l.b16 %v62
  %v207 = vunpack.c.l.b16 %v63
  %v208 = vunpack.c.l.b16 %v64
  %v209 = vunpack.c.l.b16 %v65
  %v210 = vunpack.c.l.b16 %v66
  %v211 = vunpack.c.l.b16 %v67
  %v212 = vunpack.c.l.b16 %v68
  %v213 = vunpack.c.l.b16 %v69
  %v214 = vunpack.c.l.b16 %v70
  %v215 = vunpack.c.l.b16 %v71
  %v216 = vunpack.c.l.b16 %v72
  %v217 = vunpack.c.l.b16 %v73
  %v218 = vunpack.c.l.b16 %v74
  %v219 = vunpack.c.l.b16 %v75
  %v220 = vunpack.c.l.b16 %v76
  %v221 = vunpack.c.l.b16 %v77
  %v222 = vpack.c.b16 %v159, %v158
  %v223 = vpack.c.b16 %v161, %v160
  %v224 = vpack.c.b16 %v163, %v162
  %v225 = vpack.c.b16 %v165, %v164
  %v226 = vpack.c.b16 %v167, %v166
  %v227 = vpack.c.b16 %v169, %v168
  %v228 = vpack.c.b16 %v171, %v170
  %v229 = vpack.c.b16 %v173, %v172
  %v230 = vpack.c.b16 %v175, %v174
  %v231 = vpack.c.b16 %v177, %v176
  %v232 = vpack.c.b16 %v179, %v178
  %v233 = vpack.c.b16 %v181, %v180
  %v234 = vpack.c.b16 %v183, %v182
  %v235 = vpack.c.b16 %v185, %v184
  %v236 = vpack.c.b16 %v187, %v186
  %v237 = vpack.c.b16 %v189, %v188
  %v238 = vpack.c.b16 %v191, %v190
  %v239 = vpack.c.b16 %v193, %v192
  %v240 = vpack.c.b16 %v195, %v194
  %v241 = vpack.c.b16 %v197, %v196
  %v242 = vpack.c.b16 %v199, %v198
  %v243 = vpack.c.b16 %v201, %v200
  %v244 = vpack.c.b16 %v203, %v202
  %v245 = vpack.c.b16 %v205, %v204
  %v246 = vpack.c.b16 %v207, %v206
  %v247 = vpack.c.b16 %v209, %v208
  %v248 = vpack.c.b16 %v211, %v210
  %v249 = vpack.c.b16 %v213, %v212
  %v250 = vpack.c.b16 %v215, %v214
  %v251 = vpack.c.b16 %v217, %v216
  %v252 = vpack.c.b16 %v219, %v218
  %v253 = vpack.c.b16 %v221, %v220
  %v302 = vunpack.c.l.b16 %v78
  %v303 = vunpack.c.l.b16 %v79
  %v304 = vunpack.c.l.b16 %v80
  %v305 = vunpack.c.l.b16 %v81
  %v306 = vunpack.c.l.b16 %v82
  %v307 = vunpack.c.l.b16 %v83
  %v308 = vunpack.c.l.b16 %v84
  %v309 = vunpack.c.l.b16 %v85
  %v310 = vunpack.c.l.b16 %v86
  %v311 = vunpack.c.l.b16 %v87
  %v312 = vunpack.c.l.b16 %v88
  %v313 = vunpack.c.l.b16 %v89
  %v314 = vunpack.c.l.b16 %v90
  %v315 = vunpack.c.l.b16 %v91
  %v316 = vunpack.c.l.b16 %v92
  %v317 = vunpack.c.l.b16 %v93
  %v318 = vpack.c.b16 %v303, %v302
  %v319 = vpack.c.b16 %v305, %v304
  %v320 = vpack.c.b16 %v307, %v306
  %v321 = vpack.c.b16 %v309, %v308
  %v322 = vpack.c.b16 %v311, %v310
  %v323 = vpack.c.b16 %v313, %v312
  %v324 = vpack.c.b16 %v315, %v314
  %v325 = vpack.c.b16 %v317, %v316
  %334 = vmatprep.subr.bf16.mxu0 0
  %335 = vmatpush1.bf16.msra.mxu0 %v325
  %336 = vmatprep.subr.bf16.mxu0 0
  %337 = vmatpush1.bf16.msra.mxu0 %v324
  %338 = vmatprep.subr.bf16.mxu0 0
  %339 = vmatpush1.bf16.msra.mxu0 %v323
  %340 = vmatprep.subr.bf16.mxu0 0
  %341 = vmatpush1.bf16.msra.mxu0 %v322
  %342 = vmatprep.subr.bf16.mxu0 0
  %343 = vmatpush1.bf16.msra.mxu0 %v321
  %344 = vmatprep.subr.bf16.mxu0 0
  %345 = vmatpush1.bf16.msra.mxu0 %v320
  %346 = vmatprep.subr.bf16.mxu0 0
  %347 = vmatpush1.bf16.msra.mxu0 %v319
  %348 = vmatprep.subr.bf16.mxu0 0
  %349 = vmatpush1.bf16.msra.mxu0 %v318
  %350 = vmatprep.subr.bf16.mxu0 0
  %351 = vmatpush2.bf16.msra.mxu0 0
  %352 = vmatprep.subr.bf16.mxu0 0
  %353 = vmatpush2.bf16.msra.mxu0 0
  %354 = vmatprep.subr.bf16.mxu0 0
  %355 = vmatpush2.bf16.msra.mxu0 0
  %356 = vmatprep.subr.bf16.mxu0 0
  %357 = vmatpush2.bf16.msra.mxu0 0
  %358 = vmatprep.subr.bf16.mxu0 0
  %359 = vmatpush2.bf16.msra.mxu0 0
  %360 = vmatprep.subr.bf16.mxu0 0
  %361 = vmatpush2.bf16.msra.mxu0 0
  %362 = vmatprep.subr.bf16.mxu0 0
  %363 = vmatpush2.bf16.msra.mxu0 0
  %364 = vmatprep.subr.bf16.mxu0 0
  %365 = vmatpush2.bf16.msra.mxu0 0
  %366 = vmatprep.mubr.bf16.mxu0 0
  %367 = vmatmul.mubr.bf16.gmra.mxu0 %v222
  %v368 = vpop.f32.mrf.mxu0
  %v369 = vadd.f32 0.0, %v368
  %v370 = vpop.f32.mrf.mxu0
  %v371 = vpop.f32.mrf.mxu0
  %v372 = vadd.f32 0.0, %v371
  %v373 = vpop.f32.mrf.mxu0
  %374 = vmatprep.mubr.bf16.mxu0 0
  %375 = vmatmul.mubr.bf16.gmra.mxu0 %v223
  %v376 = vpop.f32.mrf.mxu0
  %v377 = vadd.f32 0.0, %v376
  %v378 = vpop.f32.mrf.mxu0
  %v379 = vpop.f32.mrf.mxu0
  %v380 = vadd.f32 0.0, %v379
  %v381 = vpop.f32.mrf.mxu0
  %382 = vmatprep.mubr.bf16.mxu0 0
  %383 = vmatmul.mubr.bf16.gmra.mxu0 %v224
  %v384 = vpop.f32.mrf.mxu0
  %v385 = vadd.f32 0.0, %v384
  %v386 = vpop.f32.mrf.mxu0
  %v387 = vpop.f32.mrf.mxu0
  %v388 = vadd.f32 0.0, %v387
  %v389 = vpop.f32.mrf.mxu0
  %390 = vmatprep.mubr.bf16.mxu0 0
  %391 = vmatmul.mubr.bf16.gmra.mxu0 %v225
  %v392 = vpop.f32.mrf.mxu0
  %v393 = vadd.f32 0.0, %v392
  %v394 = vpop.f32.mrf.mxu0
  %v395 = vpop.f32.mrf.mxu0
  %v396 = vadd.f32 0.0, %v395
  %v397 = vpop.f32.mrf.mxu0
  %398 = vmatprep.mubr.bf16.mxu0 0
  %399 = vmatmul.mubr.bf16.gmra.mxu0 %v226
  %v400 = vpop.f32.mrf.mxu0
  %v401 = vadd.f32 0.0, %v400
  %v402 = vpop.f32.mrf.mxu0
  %v403 = vpop.f32.mrf.mxu0
  %v404 = vadd.f32 0.0, %v403
  %v405 = vpop.f32.mrf.mxu0
  %406 = vmatprep.mubr.bf16.mxu0 0
  %407 = vmatmul.mubr.bf16.gmra.mxu0 %v227
  %v408 = vpop.f32.mrf.mxu0
  %v409 = vadd.f32 0.0, %v408
  %v410 = vpop.f32.mrf.mxu0
  %v411 = vpop.f32.mrf.mxu0
  %v412 = vadd.f32 0.0, %v411
  %v413 = vpop.f32.mrf.mxu0
  %414 = vmatprep.mubr.bf16.mxu0 0
  %415 = vmatmul.mubr.bf16.gmra.mxu0 %v228
  %v416 = vpop.f32.mrf.mxu0
  %v417 = vadd.f32 0.0, %v416
  %v418 = vpop.f32.mrf.mxu0
  %v419 = vpop.f32.mrf.mxu0
  %v420 = vadd.f32 0.0, %v419
  %v421 = vpop.f32.mrf.mxu0
  %422 = vmatprep.mubr.bf16.mxu0 0
  %423 = vmatmul.mubr.bf16.gmra.mxu0 %v229
  %v424 = vpop.f32.mrf.mxu0
  %v425 = vadd.f32 0.0, %v424
  %v426 = vpop.f32.mrf.mxu0
  %v427 = vpop.f32.mrf.mxu0
  %v428 = vadd.f32 0.0, %v427
  %v429 = vpop.f32.mrf.mxu0
  %430 = vmatprep.mubr.bf16.mxu0 0
  %431 = vmatmul.mubr.bf16.gmra.mxu0 %v230
  %v432 = vpop.f32.mrf.mxu0
  %v433 = vadd.f32 0.0, %v432
  %v434 = vpop.f32.mrf.mxu0
  %v435 = vpop.f32.mrf.mxu0
  %v436 = vadd.f32 0.0, %v435
  %v437 = vpop.f32.mrf.mxu0
  %438 = vmatprep.mubr.bf16.mxu0 0
  %439 = vmatmul.mubr.bf16.gmra.mxu0 %v231
  %v440 = vpop.f32.mrf.mxu0
  %v441 = vadd.f32 0.0, %v440
  %v442 = vpop.f32.mrf.mxu0
  %v443 = vpop.f32.mrf.mxu0
  %v444 = vadd.f32 0.0, %v443
  %v445 = vpop.f32.mrf.mxu0
  %446 = vmatprep.mubr.bf16.mxu0 0
  %447 = vmatmul.mubr.bf16.gmra.mxu0 %v232
  %v448 = vpop.f32.mrf.mxu0
  %v449 = vadd.f32 0.0, %v448
  %v450 = vpop.f32.mrf.mxu0
  %v451 = vpop.f32.mrf.mxu0
  %v452 = vadd.f32 0.0, %v451
  %v453 = vpop.f32.mrf.mxu0
  %454 = vmatprep.mubr.bf16.mxu0 0
  %455 = vmatmul.mubr.bf16.gmra.mxu0 %v233
  %v456 = vpop.f32.mrf.mxu0
  %v457 = vadd.f32 0.0, %v456
  %v458 = vpop.f32.mrf.mxu0
  %v459 = vpop.f32.mrf.mxu0
  %v460 = vadd.f32 0.0, %v459
  %v461 = vpop.f32.mrf.mxu0
  %462 = vmatprep.mubr.bf16.mxu0 0
  %463 = vmatmul.mubr.bf16.gmra.mxu0 %v234
  %v464 = vpop.f32.mrf.mxu0
  %v465 = vadd.f32 0.0, %v464
  %v466 = vpop.f32.mrf.mxu0
  %v467 = vpop.f32.mrf.mxu0
  %v468 = vadd.f32 0.0, %v467
  %v469 = vpop.f32.mrf.mxu0
  %470 = vmatprep.mubr.bf16.mxu0 0
  %471 = vmatmul.mubr.bf16.gmra.mxu0 %v235
  %v472 = vpop.f32.mrf.mxu0
  %v473 = vadd.f32 0.0, %v472
  %v474 = vpop.f32.mrf.mxu0
  %v475 = vpop.f32.mrf.mxu0
  %v476 = vadd.f32 0.0, %v475
  %v477 = vpop.f32.mrf.mxu0
  %478 = vmatprep.mubr.bf16.mxu0 0
  %479 = vmatmul.mubr.bf16.gmra.mxu0 %v236
  %v480 = vpop.f32.mrf.mxu0
  %v481 = vadd.f32 0.0, %v480
  %v482 = vpop.f32.mrf.mxu0
  %v483 = vpop.f32.mrf.mxu0
  %v484 = vadd.f32 0.0, %v483
  %v485 = vpop.f32.mrf.mxu0
  %486 = vmatprep.mubr.bf16.mxu0 0
  %487 = vmatmul.mubr.bf16.gmra.mxu0 %v237
  %v488 = vpop.f32.mrf.mxu0
  %v489 = vadd.f32 0.0, %v488
  %v490 = vpop.f32.mrf.mxu0
  %v491 = vpop.f32.mrf.mxu0
  %v492 = vadd.f32 0.0, %v491
  %v493 = vpop.f32.mrf.mxu0
  %494 = vmatprep.mubr.bf16.mxu0 0
  %495 = vmatmul.mubr.bf16.gmra.mxu0 %v238
  %v496 = vpop.f32.mrf.mxu0
  %v497 = vadd.f32 0.0, %v496
  %v498 = vpop.f32.mrf.mxu0
  %v499 = vpop.f32.mrf.mxu0
  %v500 = vadd.f32 0.0, %v499
  %v501 = vpop.f32.mrf.mxu0
  %502 = vmatprep.mubr.bf16.mxu0 0
  %503 = vmatmul.mubr.bf16.gmra.mxu0 %v239
  %v504 = vpop.f32.mrf.mxu0
  %v505 = vadd.f32 0.0, %v504
  %v506 = vpop.f32.mrf.mxu0
  %v507 = vpop.f32.mrf.mxu0
  %v508 = vadd.f32 0.0, %v507
  %v509 = vpop.f32.mrf.mxu0
  %510 = vmatprep.mubr.bf16.mxu0 0
  %511 = vmatmul.mubr.bf16.gmra.mxu0 %v240
  %v512 = vpop.f32.mrf.mxu0
  %v513 = vadd.f32 0.0, %v512
  %v514 = vpop.f32.mrf.mxu0
  %v515 = vpop.f32.mrf.mxu0
  %v516 = vadd.f32 0.0, %v515
  %v517 = vpop.f32.mrf.mxu0
  %518 = vmatprep.mubr.bf16.mxu0 0
  %519 = vmatmul.mubr.bf16.gmra.mxu0 %v241
  %v520 = vpop.f32.mrf.mxu0
  %v521 = vadd.f32 0.0, %v520
  %v522 = vpop.f32.mrf.mxu0
  %v523 = vpop.f32.mrf.mxu0
  %v524 = vadd.f32 0.0, %v523
  %v525 = vpop.f32.mrf.mxu0
  %526 = vmatprep.mubr.bf16.mxu0 0
  %527 = vmatmul.mubr.bf16.gmra.mxu0 %v242
  %v528 = vpop.f32.mrf.mxu0
  %v529 = vadd.f32 0.0, %v528
  %v530 = vpop.f32.mrf.mxu0
  %v531 = vpop.f32.mrf.mxu0
  %v532 = vadd.f32 0.0, %v531
  %v533 = vpop.f32.mrf.mxu0
  %534 = vmatprep.mubr.bf16.mxu0 0
  %535 = vmatmul.mubr.bf16.gmra.mxu0 %v243
  %v536 = vpop.f32.mrf.mxu0
  %v537 = vadd.f32 0.0, %v536
  %v538 = vpop.f32.mrf.mxu0
  %v539 = vpop.f32.mrf.mxu0
  %v540 = vadd.f32 0.0, %v539
  %v541 = vpop.f32.mrf.mxu0
  %542 = vmatprep.mubr.bf16.mxu0 0
  %543 = vmatmul.mubr.bf16.gmra.mxu0 %v244
  %v544 = vpop.f32.mrf.mxu0
  %v545 = vadd.f32 0.0, %v544
  %v546 = vpop.f32.mrf.mxu0
  %v547 = vpop.f32.mrf.mxu0
  %v548 = vadd.f32 0.0, %v547
  %v549 = vpop.f32.mrf.mxu0
  %550 = vmatprep.mubr.bf16.mxu0 0
  %551 = vmatmul.mubr.bf16.gmra.mxu0 %v245
  %v552 = vpop.f32.mrf.mxu0
  %v553 = vadd.f32 0.0, %v552
  %v554 = vpop.f32.mrf.mxu0
  %v555 = vpop.f32.mrf.mxu0
  %v556 = vadd.f32 0.0, %v555
  %v557 = vpop.f32.mrf.mxu0
  %558 = vmatprep.mubr.bf16.mxu0 0
  %559 = vmatmul.mubr.bf16.gmra.mxu0 %v246
  %v560 = vpop.f32.mrf.mxu0
  %v561 = vadd.f32 0.0, %v560
  %v562 = vpop.f32.mrf.mxu0
  %v563 = vpop.f32.mrf.mxu0
  %v564 = vadd.f32 0.0, %v563
  %v565 = vpop.f32.mrf.mxu0
  %566 = vmatprep.mubr.bf16.mxu0 0
  %567 = vmatmul.mubr.bf16.gmra.mxu0 %v247
  %v568 = vpop.f32.mrf.mxu0
  %v569 = vadd.f32 0.0, %v568
  %v570 = vpop.f32.mrf.mxu0
  %v571 = vpop.f32.mrf.mxu0
  %v572 = vadd.f32 0.0, %v571
  %v573 = vpop.f32.mrf.mxu0
  %574 = vmatprep.mubr.bf16.mxu0 0
  %575 = vmatmul.mubr.bf16.gmra.mxu0 %v248
  %v576 = vpop.f32.mrf.mxu0
  %v577 = vadd.f32 0.0, %v576
  %v578 = vpop.f32.mrf.mxu0
  %v579 = vpop.f32.mrf.mxu0
  %v580 = vadd.f32 0.0, %v579
  %v581 = vpop.f32.mrf.mxu0
  %582 = vmatprep.mubr.bf16.mxu0 0
  %583 = vmatmul.mubr.bf16.gmra.mxu0 %v249
  %v584 = vpop.f32.mrf.mxu0
  %v585 = vadd.f32 0.0, %v584
  %v586 = vpop.f32.mrf.mxu0
  %v587 = vpop.f32.mrf.mxu0
  %v588 = vadd.f32 0.0, %v587
  %v589 = vpop.f32.mrf.mxu0
  %590 = vmatprep.mubr.bf16.mxu0 0
  %591 = vmatmul.mubr.bf16.gmra.mxu0 %v250
  %v592 = vpop.f32.mrf.mxu0
  %v593 = vadd.f32 0.0, %v592
  %v594 = vpop.f32.mrf.mxu0
  %v595 = vpop.f32.mrf.mxu0
  %v596 = vadd.f32 0.0, %v595
  %v597 = vpop.f32.mrf.mxu0
  %598 = vmatprep.mubr.bf16.mxu0 0
  %599 = vmatmul.mubr.bf16.gmra.mxu0 %v251
  %v600 = vpop.f32.mrf.mxu0
  %v601 = vadd.f32 0.0, %v600
  %v602 = vpop.f32.mrf.mxu0
  %v603 = vpop.f32.mrf.mxu0
  %v604 = vadd.f32 0.0, %v603
  %v605 = vpop.f32.mrf.mxu0
  %606 = vmatprep.mubr.bf16.mxu0 0
  %607 = vmatmul.mubr.bf16.gmra.mxu0 %v252
  %v608 = vpop.f32.mrf.mxu0
  %v609 = vadd.f32 0.0, %v608
  %v610 = vpop.f32.mrf.mxu0
  %v611 = vpop.f32.mrf.mxu0
  %v612 = vadd.f32 0.0, %v611
  %v613 = vpop.f32.mrf.mxu0
  %614 = vmatprep.mubr.bf16.mxu0 0
  %615 = vmatmul.mubr.bf16.gmra.mxu0 %v253
  %v616 = vpop.f32.mrf.mxu0
  %v617 = vadd.f32 0.0, %v616
  %v618 = vpop.f32.mrf.mxu0
  %v619 = vpop.f32.mrf.mxu0
  %v620 = vadd.f32 0.0, %v619
  %v621 = vpop.f32.mrf.mxu0
  %622 = vdwg.mxu0
  %v623 = vpack.c.bf16 %v372, %v369
  %v624 = vpack.c.bf16 %v380, %v377
  %v625 = vpack.c.bf16 %v388, %v385
  %v626 = vpack.c.bf16 %v396, %v393
  %v627 = vpack.c.bf16 %v404, %v401
  %v628 = vpack.c.bf16 %v412, %v409
  %v629 = vpack.c.bf16 %v420, %v417
  %v630 = vpack.c.bf16 %v428, %v425
  %v631 = vpack.c.bf16 %v436, %v433
  %v632 = vpack.c.bf16 %v444, %v441
  %v633 = vpack.c.bf16 %v452, %v449
  %v634 = vpack.c.bf16 %v460, %v457
  %v635 = vpack.c.bf16 %v468, %v465
  %v636 = vpack.c.bf16 %v476, %v473
  %v637 = vpack.c.bf16 %v484, %v481
  %v638 = vpack.c.bf16 %v492, %v489
  %v639 = vpack.c.bf16 %v500, %v497
  %v640 = vpack.c.bf16 %v508, %v505
  %v641 = vpack.c.bf16 %v516, %v513
  %v642 = vpack.c.bf16 %v524, %v521
  %v643 = vpack.c.bf16 %v532, %v529
  %v644 = vpack.c.bf16 %v540, %v537
  %v645 = vpack.c.bf16 %v548, %v545
  %v646 = vpack.c.bf16 %v556, %v553
  %v647 = vpack.c.bf16 %v564, %v561
  %v648 = vpack.c.bf16 %v572, %v569
  %v649 = vpack.c.bf16 %v580, %v577
  %v650 = vpack.c.bf16 %v588, %v585
  %v651 = vpack.c.bf16 %v596, %v593
  %v652 = vpack.c.bf16 %v604, %v601
  %v653 = vpack.c.bf16 %v612, %v609
  %v654 = vpack.c.bf16 %v620, %v617
  %v687 = vunpack.c.l.b16 %v623
  %v688 = vunpack.c.h.b16 %v623
  %v689 = vunpack.c.l.b16 %v624
  %v690 = vunpack.c.h.b16 %v624
  %v691 = vunpack.c.l.b16 %v625
  %v692 = vunpack.c.h.b16 %v625
  %v693 = vunpack.c.l.b16 %v626
  %v694 = vunpack.c.h.b16 %v626
  %v695 = vunpack.c.l.b16 %v627
  %v696 = vunpack.c.h.b16 %v627
  %v697 = vunpack.c.l.b16 %v628
  %v698 = vunpack.c.h.b16 %v628
  %v699 = vunpack.c.l.b16 %v629
  %v700 = vunpack.c.h.b16 %v629
  %v701 = vunpack.c.l.b16 %v630
  %v702 = vunpack.c.h.b16 %v630
  %v703 = vunpack.c.l.b16 %v631
  %v704 = vunpack.c.h.b16 %v631
  %v705 = vunpack.c.l.b16 %v632
  %v706 = vunpack.c.h.b16 %v632
  %v707 = vunpack.c.l.b16 %v633
  %v708 = vunpack.c.h.b16 %v633
  %v709 = vunpack.c.l.b16 %v634
  %v710 = vunpack.c.h.b16 %v634
  %v711 = vunpack.c.l.b16 %v635
  %v712 = vunpack.c.h.b16 %v635
  %v713 = vunpack.c.l.b16 %v636
  %v714 = vunpack.c.h.b16 %v636
  %v715 = vunpack.c.l.b16 %v637
  %v716 = vunpack.c.h.b16 %v637
  %v717 = vunpack.c.l.b16 %v638
  %v718 = vunpack.c.h.b16 %v638
  %v719 = vunpack.c.l.b16 %v639
  %v720 = vunpack.c.h.b16 %v639
  %v721 = vunpack.c.l.b16 %v640
  %v722 = vunpack.c.h.b16 %v640
  %v723 = vunpack.c.l.b16 %v641
  %v724 = vunpack.c.h.b16 %v641
  %v725 = vunpack.c.l.b16 %v642
  %v726 = vunpack.c.h.b16 %v642
  %v727 = vunpack.c.l.b16 %v643
  %v728 = vunpack.c.h.b16 %v643
  %v729 = vunpack.c.l.b16 %v644
  %v730 = vunpack.c.h.b16 %v644
  %v731 = vunpack.c.l.b16 %v645
  %v732 = vunpack.c.h.b16 %v645
  %v733 = vunpack.c.l.b16 %v646
  %v734 = vunpack.c.h.b16 %v646
  %v735 = vunpack.c.l.b16 %v647
  %v736 = vunpack.c.h.b16 %v647
  %v737 = vunpack.c.l.b16 %v648
  %v738 = vunpack.c.h.b16 %v648
  %v739 = vunpack.c.l.b16 %v649
  %v740 = vunpack.c.h.b16 %v649
  %v741 = vunpack.c.l.b16 %v650
  %v742 = vunpack.c.h.b16 %v650
  %v743 = vunpack.c.l.b16 %v651
  %v744 = vunpack.c.h.b16 %v651
  %v745 = vunpack.c.l.b16 %v652
  %v746 = vunpack.c.h.b16 %v652
  %v747 = vunpack.c.l.b16 %v653
  %v748 = vunpack.c.h.b16 %v653
  %v749 = vunpack.c.l.b16 %v654
  %v750 = vunpack.c.h.b16 %v654
  %v751 = vpack.c.b16 %v687, %v687
  %v752 = vpack.c.b16 %v688, %v688
  %v753 = vpack.c.b16 %v689, %v689
  %v754 = vpack.c.b16 %v690, %v690
  %v755 = vpack.c.b16 %v691, %v691
  %v756 = vpack.c.b16 %v692, %v692
  %v757 = vpack.c.b16 %v693, %v693
  %v758 = vpack.c.b16 %v694, %v694
  %v759 = vpack.c.b16 %v695, %v695
  %v760 = vpack.c.b16 %v696, %v696
  %v761 = vpack.c.b16 %v697, %v697
  %v762 = vpack.c.b16 %v698, %v698
  %v763 = vpack.c.b16 %v699, %v699
  %v764 = vpack.c.b16 %v700, %v700
  %v765 = vpack.c.b16 %v701, %v701
  %v766 = vpack.c.b16 %v702, %v702
  %v767 = vpack.c.b16 %v703, %v703
  %v768 = vpack.c.b16 %v704, %v704
  %v769 = vpack.c.b16 %v705, %v705
  %v770 = vpack.c.b16 %v706, %v706
  %v771 = vpack.c.b16 %v707, %v707
  %v772 = vpack.c.b16 %v708, %v708
  %v773 = vpack.c.b16 %v709, %v709
  %v774 = vpack.c.b16 %v710, %v710
  %v775 = vpack.c.b16 %v711, %v711
  %v776 = vpack.c.b16 %v712, %v712
  %v777 = vpack.c.b16 %v713, %v713
  %v778 = vpack.c.b16 %v714, %v714
  %v779 = vpack.c.b16 %v715, %v715
  %v780 = vpack.c.b16 %v716, %v716
  %v781 = vpack.c.b16 %v717, %v717
  %v782 = vpack.c.b16 %v718, %v718
  %v783 = vpack.c.b16 %v719, %v719
  %v784 = vpack.c.b16 %v720, %v720
  %v785 = vpack.c.b16 %v721, %v721
  %v786 = vpack.c.b16 %v722, %v722
  %v787 = vpack.c.b16 %v723, %v723
  %v788 = vpack.c.b16 %v724, %v724
  %v789 = vpack.c.b16 %v725, %v725
  %v790 = vpack.c.b16 %v726, %v726
  %v791 = vpack.c.b16 %v727, %v727
  %v792 = vpack.c.b16 %v728, %v728
  %v793 = vpack.c.b16 %v729, %v729
  %v794 = vpack.c.b16 %v730, %v730
  %v795 = vpack.c.b16 %v731, %v731
  %v796 = vpack.c.b16 %v732, %v732
  %v797 = vpack.c.b16 %v733, %v733
  %v798 = vpack.c.b16 %v734, %v734
  %v799 = vpack.c.b16 %v735, %v735
  %v800 = vpack.c.b16 %v736, %v736
  %v801 = vpack.c.b16 %v737, %v737
  %v802 = vpack.c.b16 %v738, %v738
  %v803 = vpack.c.b16 %v739, %v739
  %v804 = vpack.c.b16 %v740, %v740
  %v805 = vpack.c.b16 %v741, %v741
  %v806 = vpack.c.b16 %v742, %v742
  %v807 = vpack.c.b16 %v743, %v743
  %v808 = vpack.c.b16 %v744, %v744
  %v809 = vpack.c.b16 %v745, %v745
  %v810 = vpack.c.b16 %v746, %v746
  %v811 = vpack.c.b16 %v747, %v747
  %v812 = vpack.c.b16 %v748, %v748
  %v813 = vpack.c.b16 %v749, %v749
  %v814 = vpack.c.b16 %v750, %v750
  %879 = vst [vmem:[%s2] sm:$0xf] %v751
  %880 = vst [vmem:[%s2 + $0x4] sm:$0xf] %v752
  %881 = vst [vmem:[%s2 + $0x8] sm:$0xf] %v753
  %882 = vst [vmem:[%s2 + $0xc] sm:$0xf] %v754
  %883 = vst [vmem:[%s2 + $0x10] sm:$0xf] %v755
  %884 = vst [vmem:[%s2 + $0x14] sm:$0xf] %v756
  %885 = vst [vmem:[%s2 + $0x18] sm:$0xf] %v757
  %886 = vst [vmem:[%s2 + $0x1c] sm:$0xf] %v758
  %887 = vst [vmem:[%s2 + $0x20] sm:$0xf] %v759
  %888 = vst [vmem:[%s2 + $0x24] sm:$0xf] %v760
  %889 = vst [vmem:[%s2 + $0x28] sm:$0xf] %v761
  %890 = vst [vmem:[%s2 + $0x2c] sm:$0xf] %v762
  %891 = vst [vmem:[%s2 + $0x30] sm:$0xf] %v763
  %892 = vst [vmem:[%s2 + $0x34] sm:$0xf] %v764
  %893 = vst [vmem:[%s2 + $0x38] sm:$0xf] %v765
  %894 = vst [vmem:[%s2 + $0x3c] sm:$0xf] %v766
  %895 = vst [vmem:[%s2 + $0x40] sm:$0xf] %v767
  %896 = vst [vmem:[%s2 + $0x44] sm:$0xf] %v768
  %897 = vst [vmem:[%s2 + $0x48] sm:$0xf] %v769
  %898 = vst [vmem:[%s2 + $0x4c] sm:$0xf] %v770
  %899 = vst [vmem:[%s2 + $0x50] sm:$0xf] %v771
  %900 = vst [vmem:[%s2 + $0x54] sm:$0xf] %v772
  %901 = vst [vmem:[%s2 + $0x58] sm:$0xf] %v773
  %902 = vst [vmem:[%s2 + $0x5c] sm:$0xf] %v774
  %903 = vst [vmem:[%s2 + $0x60] sm:$0xf] %v775
  %904 = vst [vmem:[%s2 + $0x64] sm:$0xf] %v776
  %905 = vst [vmem:[%s2 + $0x68] sm:$0xf] %v777
  %906 = vst [vmem:[%s2 + $0x6c] sm:$0xf] %v778
  %907 = vst [vmem:[%s2 + $0x70] sm:$0xf] %v779
  %908 = vst [vmem:[%s2 + $0x74] sm:$0xf] %v780
  %909 = vst [vmem:[%s2 + $0x78] sm:$0xf] %v781
  %910 = vst [vmem:[%s2 + $0x7c] sm:$0xf] %v782
  %911 = vst [vmem:[%s2 + $0x80] sm:$0xf] %v783
  %912 = vst [vmem:[%s2 + $0x84] sm:$0xf] %v784
  %913 = vst [vmem:[%s2 + $0x88] sm:$0xf] %v785
  %914 = vst [vmem:[%s2 + $0x8c] sm:$0xf] %v786
  %915 = vst [vmem:[%s2 + $0x90] sm:$0xf] %v787
  %916 = vst [vmem:[%s2 + $0x94] sm:$0xf] %v788
  %917 = vst [vmem:[%s2 + $0x98] sm:$0xf] %v789
  %918 = vst [vmem:[%s2 + $0x9c] sm:$0xf] %v790
  %919 = vst [vmem:[%s2 + $0xa0] sm:$0xf] %v791
  %920 = vst [vmem:[%s2 + $0xa4] sm:$0xf] %v792
  %921 = vst [vmem:[%s2 + $0xa8] sm:$0xf] %v793
  %922 = vst [vmem:[%s2 + $0xac] sm:$0xf] %v794
  %923 = vst [vmem:[%s2 + $0xb0] sm:$0xf] %v795
  %924 = vst [vmem:[%s2 + $0xb4] sm:$0xf] %v796
  %925 = vst [vmem:[%s2 + $0xb8] sm:$0xf] %v797
  %926 = vst [vmem:[%s2 + $0xbc] sm:$0xf] %v798
  %927 = vst [vmem:[%s2 + $0xc0] sm:$0xf] %v799
  %928 = vst [vmem:[%s2 + $0xc4] sm:$0xf] %v800
  %929 = vst [vmem:[%s2 + $0xc8] sm:$0xf] %v801
  %930 = vst [vmem:[%s2 + $0xcc] sm:$0xf] %v802
  %931 = vst [vmem:[%s2 + $0xd0] sm:$0xf] %v803
  %932 = vst [vmem:[%s2 + $0xd4] sm:$0xf] %v804
  %933 = vst [vmem:[%s2 + $0xd8] sm:$0xf] %v805
  %934 = vst [vmem:[%s2 + $0xdc] sm:$0xf] %v806
  %935 = vst [vmem:[%s2 + $0xe0] sm:$0xf] %v807
  %936 = vst [vmem:[%s2 + $0xe4] sm:$0xf] %v808
  %937 = vst [vmem:[%s2 + $0xe8] sm:$0xf] %v809
  %938 = vst [vmem:[%s2 + $0xec] sm:$0xf] %v810
  %939 = vst [vmem:[%s2 + $0xf0] sm:$0xf] %v811
  %940 = vst [vmem:[%s2 + $0xf4] sm:$0xf] %v812
  %941 = vst [vmem:[%s2 + $0xf8] sm:$0xf] %v813
  %942 = vst [vmem:[%s2 + $0xfc] sm:$0xf] %v814
  %v943 = vadd.f32 %v369, %v372
  %v944 = vadd.f32 %v943, %v377
  %v945 = vadd.f32 %v944, %v380
  %v946 = vadd.f32 %v945, %v385
  %v947 = vadd.f32 %v946, %v388
  %v948 = vadd.f32 %v947, %v393
  %v949 = vadd.f32 %v948, %v396
  %v950 = vadd.f32 %v949, %v401
  %v951 = vadd.f32 %v950, %v404
  %v952 = vadd.f32 %v951, %v409
  %v953 = vadd.f32 %v952, %v412
  %v954 = vadd.f32 %v953, %v417
  %v955 = vadd.f32 %v954, %v420
  %v956 = vadd.f32 %v955, %v425
  %v957 = vadd.f32 %v956, %v428
  %v958 = vadd.f32 %v957, %v433
  %v959 = vadd.f32 %v958, %v436
  %v960 = vadd.f32 %v959, %v441
  %v961 = vadd.f32 %v960, %v444
  %v962 = vadd.f32 %v961, %v449
  %v963 = vadd.f32 %v962, %v452
  %v964 = vadd.f32 %v963, %v457
  %v965 = vadd.f32 %v964, %v460
  %v966 = vadd.f32 %v965, %v465
  %v967 = vadd.f32 %v966, %v468
  %v968 = vadd.f32 %v967, %v473
  %v969 = vadd.f32 %v968, %v476
  %v970 = vadd.f32 %v969, %v481
  %v971 = vadd.f32 %v970, %v484
  %v972 = vadd.f32 %v971, %v489
  %v973 = vadd.f32 %v972, %v492
  %v974 = vadd.f32 %v973, %v497
  %v975 = vadd.f32 %v974, %v500
  %v976 = vadd.f32 %v975, %v505
  %v977 = vadd.f32 %v976, %v508
  %v978 = vadd.f32 %v977, %v513
  %v979 = vadd.f32 %v978, %v516
  %v980 = vadd.f32 %v979, %v521
  %v981 = vadd.f32 %v980, %v524
  %v982 = vadd.f32 %v981, %v529
  %v983 = vadd.f32 %v982, %v532
  %v984 = vadd.f32 %v983, %v537
  %v985 = vadd.f32 %v984, %v540
  %v986 = vadd.f32 %v985, %v545
  %v987 = vadd.f32 %v986, %v548
  %v988 = vadd.f32 %v987, %v553
  %v989 = vadd.f32 %v988, %v556
  %v990 = vadd.f32 %v989, %v561
  %v991 = vadd.f32 %v990, %v564
  %v992 = vadd.f32 %v991, %v569
  %v993 = vadd.f32 %v992, %v572
  %v994 = vadd.f32 %v993, %v577
  %v995 = vadd.f32 %v994, %v580
  %v996 = vadd.f32 %v995, %v585
  %v997 = vadd.f32 %v996, %v588
  %v998 = vadd.f32 %v997, %v593
  %v999 = vadd.f32 %v998, %v596
  %v1000 = vadd.f32 %v999, %v601
  %v1001 = vadd.f32 %v1000, %v604
  %v1002 = vadd.f32 %v1001, %v609
  %v1003 = vadd.f32 %v1002, %v612
  %v1004 = vadd.f32 %v1003, %v617
  %v1005 = vadd.f32 %v1004, %v620
  %v1006 = vrot.slane %v1005, 4
  %v1007 = vadd.f32 %v1005, %v1006
  %v1008 = vrot.slane %v1007, 2
  %v1009 = vadd.f32 %v1007, %v1008
  %v1010 = vrot.slane %v1009, 1
  %v1011 = vadd.f32 %v1009, %v1010
  %v1012 = vmul.f32 %v369, %v369
  %v1013 = vmul.f32 %v372, %v372
  %v1014 = vmul.f32 %v377, %v377
  %v1015 = vmul.f32 %v380, %v380
  %v1016 = vmul.f32 %v385, %v385
  %v1017 = vmul.f32 %v388, %v388
  %v1018 = vmul.f32 %v393, %v393
  %v1019 = vmul.f32 %v396, %v396
  %v1020 = vmul.f32 %v401, %v401
  %v1021 = vmul.f32 %v404, %v404
  %v1022 = vmul.f32 %v409, %v409
  %v1023 = vmul.f32 %v412, %v412
  %v1024 = vmul.f32 %v417, %v417
  %v1025 = vmul.f32 %v420, %v420
  %v1026 = vmul.f32 %v425, %v425
  %v1027 = vmul.f32 %v428, %v428
  %v1028 = vmul.f32 %v433, %v433
  %v1029 = vmul.f32 %v436, %v436
  %v1030 = vmul.f32 %v441, %v441
  %v1031 = vmul.f32 %v444, %v444
  %v1032 = vmul.f32 %v449, %v449
  %v1033 = vmul.f32 %v452, %v452
  %v1034 = vmul.f32 %v457, %v457
  %v1035 = vmul.f32 %v460, %v460
  %v1036 = vmul.f32 %v465, %v465
  %v1037 = vmul.f32 %v468, %v468
  %v1038 = vmul.f32 %v473, %v473
  %v1039 = vmul.f32 %v476, %v476
  %v1040 = vmul.f32 %v481, %v481
  %v1041 = vmul.f32 %v484, %v484
  %v1042 = vmul.f32 %v489, %v489
  %v1043 = vmul.f32 %v492, %v492
  %v1044 = vmul.f32 %v497, %v497
  %v1045 = vmul.f32 %v500, %v500
  %v1046 = vmul.f32 %v505, %v505
  %v1047 = vmul.f32 %v508, %v508
  %v1048 = vmul.f32 %v513, %v513
  %v1049 = vmul.f32 %v516, %v516
  %v1050 = vmul.f32 %v521, %v521
  %v1051 = vmul.f32 %v524, %v524
  %v1052 = vmul.f32 %v529, %v529
  %v1053 = vmul.f32 %v532, %v532
  %v1054 = vmul.f32 %v537, %v537
  %v1055 = vmul.f32 %v540, %v540
  %v1056 = vmul.f32 %v545, %v545
  %v1057 = vmul.f32 %v548, %v548
  %v1058 = vmul.f32 %v553, %v553
  %v1059 = vmul.f32 %v556, %v556
  %v1060 = vmul.f32 %v561, %v561
  %v1061 = vmul.f32 %v564, %v564
  %v1062 = vmul.f32 %v569, %v569
  %v1063 = vmul.f32 %v572, %v572
  %v1064 = vmul.f32 %v577, %v577
  %v1065 = vmul.f32 %v580, %v580
  %v1066 = vmul.f32 %v585, %v585
  %v1067 = vmul.f32 %v588, %v588
  %v1068 = vmul.f32 %v593, %v593
  %v1069 = vmul.f32 %v596, %v596
  %v1070 = vmul.f32 %v601, %v601
  %v1071 = vmul.f32 %v604, %v604
  %v1072 = vmul.f32 %v609, %v609
  %v1073 = vmul.f32 %v612, %v612
  %v1074 = vmul.f32 %v617, %v617
  %v1075 = vmul.f32 %v620, %v620
  %v1076 = vadd.f32 %v1012, %v1013
  %v1077 = vadd.f32 %v1076, %v1014
  %v1078 = vadd.f32 %v1077, %v1015
  %v1079 = vadd.f32 %v1078, %v1016
  %v1080 = vadd.f32 %v1079, %v1017
  %v1081 = vadd.f32 %v1080, %v1018
  %v1082 = vadd.f32 %v1081, %v1019
  %v1083 = vadd.f32 %v1082, %v1020
  %v1084 = vadd.f32 %v1083, %v1021
  %v1085 = vadd.f32 %v1084, %v1022
  %v1086 = vadd.f32 %v1085, %v1023
  %v1087 = vadd.f32 %v1086, %v1024
  %v1088 = vadd.f32 %v1087, %v1025
  %v1089 = vadd.f32 %v1088, %v1026
  %v1090 = vadd.f32 %v1089, %v1027
  %v1091 = vadd.f32 %v1090, %v1028
  %v1092 = vadd.f32 %v1091, %v1029
  %v1093 = vadd.f32 %v1092, %v1030
  %v1094 = vadd.f32 %v1093, %v1031
  %v1095 = vadd.f32 %v1094, %v1032
  %v1096 = vadd.f32 %v1095, %v1033
  %v1097 = vadd.f32 %v1096, %v1034
  %v1098 = vadd.f32 %v1097, %v1035
  %v1099 = vadd.f32 %v1098, %v1036
  %v1100 = vadd.f32 %v1099, %v1037
  %v1101 = vadd.f32 %v1100, %v1038
  %v1102 = vadd.f32 %v1101, %v1039
  %v1103 = vadd.f32 %v1102, %v1040
  %v1104 = vadd.f32 %v1103, %v1041
  %v1105 = vadd.f32 %v1104, %v1042
  %v1106 = vadd.f32 %v1105, %v1043
  %v1107 = vadd.f32 %v1106, %v1044
  %v1108 = vadd.f32 %v1107, %v1045
  %v1109 = vadd.f32 %v1108, %v1046
  %v1110 = vadd.f32 %v1109, %v1047
  %v1111 = vadd.f32 %v1110, %v1048
  %v1112 = vadd.f32 %v1111, %v1049
  %v1113 = vadd.f32 %v1112, %v1050
  %v1114 = vadd.f32 %v1113, %v1051
  %v1115 = vadd.f32 %v1114, %v1052
  %v1116 = vadd.f32 %v1115, %v1053
  %v1117 = vadd.f32 %v1116, %v1054
  %v1118 = vadd.f32 %v1117, %v1055
  %v1119 = vadd.f32 %v1118, %v1056
  %v1120 = vadd.f32 %v1119, %v1057
  %v1121 = vadd.f32 %v1120, %v1058
  %v1122 = vadd.f32 %v1121, %v1059
  %v1123 = vadd.f32 %v1122, %v1060
  %v1124 = vadd.f32 %v1123, %v1061
  %v1125 = vadd.f32 %v1124, %v1062
  %v1126 = vadd.f32 %v1125, %v1063
  %v1127 = vadd.f32 %v1126, %v1064
  %v1128 = vadd.f32 %v1127, %v1065
  %v1129 = vadd.f32 %v1128, %v1066
  %v1130 = vadd.f32 %v1129, %v1067
  %v1131 = vadd.f32 %v1130, %v1068
  %v1132 = vadd.f32 %v1131, %v1069
  %v1133 = vadd.f32 %v1132, %v1070
  %v1134 = vadd.f32 %v1133, %v1071
  %v1135 = vadd.f32 %v1134, %v1072
  %v1136 = vadd.f32 %v1135, %v1073
  %v1137 = vadd.f32 %v1136, %v1074
  %v1138 = vadd.f32 %v1137, %v1075
  %v1139 = vrot.slane %v1138, 4
  %v1140 = vadd.f32 %v1138, %v1139
  %v1141 = vrot.slane %v1140, 2
  %v1142 = vadd.f32 %v1140, %v1141
  %v1143 = vrot.slane %v1142, 1
  %v1144 = vadd.f32 %v1142, %v1143
  %vm1145 = vcmask 1043456
  %v1146 = vsel %vm1145, %v1011, %v1144
  %1147 = vst [vmem:[%s3] sm:$0xff] %v1146
  // Predicated region
  $region10: #{bottleneck_forward.4} parent=0 // pred_check
    _
  $region11: #{bottleneck_forward.4} parent=0 // pred_check_branch
    %1149 = sbr.rel (0) target = $region13
  $region12: #{bottleneck_forward.4} parent=0 // pred_region
    _
  $region13: #{bottleneck_forward.4} parent=0 // pred_fallthru
    _
  // Predicated region
  $region14: #{bottleneck_forward.4} parent=0 // pred_check
    _
  $region15: #{bottleneck_forward.4} parent=0 // pred_check_branch
    %1151 = sbr.rel (0) target = $region17
  $region16: #{bottleneck_forward.4} parent=0 // pred_region
    _
  $region17: #{bottleneck_forward.4} parent=0 // pred_fallthru
    _
  // Predicated region
  $region18: #{bottleneck_forward.4} parent=0 // pred_check
    _
  $region19: #{bottleneck_forward.4} parent=0 // pred_check_branch
    %1153 = sbr.rel (0) target = $region21
  $region20: #{bottleneck_forward.4} parent=0 // pred_region
    _
  $region21: #{bottleneck_forward.4} parent=0 // pred_fallthru
    _
  // Predicated region
  $region22: #{bottleneck_forward.4} parent=0 // pred_check
    _
  $region23: #{bottleneck_forward.4} parent=0 // pred_check_branch
    %1155 = sbr.rel (0) target = $region25
  $region24: #{bottleneck_forward.4} parent=0 // pred_region
    _
  $region25: #{bottleneck_forward.4} parent=0 // pred_fallthru
    _

// kernel: bottleneck_forward.5
$region0: #{bottleneck_forward.5}
  #allocation0 [shape = 'u32[]', space=smem, size = 0x4, offset = 0x4, fixed_abs, tag = 'smem constant byte address 0x4 - core index']
  #allocation1 [shape = 'u32[144,128]{1,0:T(1,128)}', space=vmem, size = 0x12000, scoped, tag = 'internal scratch']
  %s0 = inlined_call_operand.vmem [shape: f32[1,128], index: 0, kind: input, shape index: {}]
  %s1 = inlined_call_operand.vmem [shape: f32[1,128], index: 1, kind: input, shape index: {}]
  %s2 = inlined_call_operand.vmem [shape: bf16[2,16,16,128], index: 2, kind: input, shape index: {}]
  %s3 = inlined_call_operand.vmem [shape: bf16[3,384,128], index: 3, kind: input, shape index: {}]
  %s4 = inlined_call_operand.vmem [shape: bf16[512,128], index: 4, kind: output, shape index: {0}]
  %s5 = inlined_call_operand.vmem [shape: f32[2,8,128], index: 5, kind: output, shape index: {1}]
  %6 = xla_tuple %s4, %s5
  %s7 = sld [smem:[#allocation0]]
  $region57: #{bottleneck_forward.5} parent=0
    _
  %s9 = ssub.s32 1, %s7
  %s10 = scalar_select 0, %s9, %s7
  loop: start=0, step=1, limit=4
  $region2: #{bottleneck_forward.5} parent=0 // loop_pre_header
    _
  $region3: #{bottleneck_forward.5} parent=0 // loop_header
    %s12 = sphi 0, %s16
    %p13 = scmp.ge.s32.totalorder %s12, 4
    %s20 = sphi 0, %s20
    %s22 = sphi 0, %s20
    %s23 = sphi 0, %s22
    %s37 = sphi 0, %s23
    %s41 = sphi 0, %s41
    %s43 = sphi 0, %s41
    %s44 = sphi 0, %s43
    %s58 = sphi 0, %s44
    %s64 = sphi 0, %s66
    %s67 = sphi 0, %s64
    %s68 = sphi 0, %s67
    %s84 = sphi 0, %s68
    %s88 = sphi 0, %s88
    %s90 = sphi 0, %s88
    %s91 = sphi 0, %s90
    %s105 = sphi 0, %s91
    %s111 = sphi 0, %s113
    %s114 = sphi 0, %s111
    %s115 = sphi 0, %s114
    %s131 = sphi 0, %s115
    %s137 = sphi 0, %s139
    %s140 = sphi 0, %s137
    %s141 = sphi 0, %s140
    %s157 = sphi 0, %s141
  $region4: #{bottleneck_forward.5} parent=0 // loop_header_branch
    %15 = sbr.rel (%p13) target = $region8
  $region5: #{bottleneck_forward.5} parent=0 // loop_body
    %s17 = ssub.s32 %s12, 1
    %s18 = ssub.s32 %s12, 2
    %s19 = sadd.s32 %s12, 1
    %s21 = sadd.s32 %s20, 1
    %p24 = scmp.eq.s32.totalorder %s12, 1
    %p25 = scmp.ne.s32.totalorder %s20, %s22
    %p26 = scmp.eq.s32.totalorder %s12, 0
    %p27 = por %p25, %p26
    %p28 = scmp.ne.s32.totalorder %s20, %s22
    %p29 = scmp.eq.s32.totalorder %s17, 1
    %p30 = por %p28, %p29
    %p31 = scmp.ne.s32.totalorder %s22, %s23
    %p32 = scmp.eq.s32.totalorder %s17, 0
    %p33 = por %p31, %p32
    %p34 = scmp.ne.s32.totalorder %s22, %s23
    %p35 = scmp.eq.s32.totalorder %s18, 1
    %p36 = por %p34, %p35
    %p38 = scmp.ne.s32.totalorder %s23, %s37
    %p39 = scmp.eq.s32.totalorder %s18, 0
    %p40 = por %p38, %p39
    %s42 = sadd.s32 %s41, 1
    %p45 = scmp.eq.s32.totalorder %s12, 1
    %p46 = scmp.ne.s32.totalorder %s41, %s43
    %p47 = scmp.eq.s32.totalorder %s12, 0
    %p48 = por %p46, %p47
    %p49 = scmp.ne.s32.totalorder %s41, %s43
    %p50 = scmp.eq.s32.totalorder %s17, 1
    %p51 = por %p49, %p50
    %p52 = scmp.ne.s32.totalorder %s43, %s44
    %p53 = scmp.eq.s32.totalorder %s17, 0
    %p54 = por %p52, %p53
    %p55 = scmp.ne.s32.totalorder %s43, %s44
    %p56 = scmp.eq.s32.totalorder %s18, 1
    %p57 = por %p55, %p56
    %p59 = scmp.ne.s32.totalorder %s44, %s58
    %p60 = scmp.eq.s32.totalorder %s18, 0
    %p61 = por %p59, %p60
    %s62 = ssub.s32 %s12, %s19
    %p63 = scmp.eq.s32.totalorder %s62, 0
    %s65 = sadd.s32 %s64, 1
    %s66 = scalar_select %p63, %s64, %s65
    %p69 = pneg %p63
    %p70 = scmp.eq.s32.totalorder %s12, 1
    %p71 = por %p69, %p70
    %p72 = scmp.ne.s32.totalorder %s64, %s67
    %p73 = scmp.eq.s32.totalorder %s12, 0
    %p74 = por %p72, %p73
    %p75 = scmp.ne.s32.totalorder %s64, %s67
    %p76 = scmp.eq.s32.totalorder %s17, 1
    %p77 = por %p75, %p76
    %p78 = scmp.ne.s32.totalorder %s67, %s68
    %p79 = scmp.eq.s32.totalorder %s17, 0
    %p80 = por %p78, %p79
    %p81 = scmp.ne.s32.totalorder %s67, %s68
    %p82 = scmp.eq.s32.totalorder %s18, 1
    %p83 = por %p81, %p82
    %p85 = scmp.ne.s32.totalorder %s68, %s84
    %p86 = scmp.eq.s32.totalorder %s18, 0
    %p87 = por %p85, %p86
    %s89 = sadd.s32 %s88, 1
    %p92 = scmp.eq.s32.totalorder %s12, 1
    %p93 = scmp.ne.s32.totalorder %s88, %s90
    %p94 = scmp.eq.s32.totalorder %s12, 0
    %p95 = por %p93, %p94
    %p96 = scmp.ne.s32.totalorder %s88, %s90
    %p97 = scmp.eq.s32.totalorder %s17, 1
    %p98 = por %p96, %p97
    %p99 = scmp.ne.s32.totalorder %s90, %s91
    %p100 = scmp.eq.s32.totalorder %s17, 0
    %p101 = por %p99, %p100
    %p102 = scmp.ne.s32.totalorder %s90, %s91
    %p103 = scmp.eq.s32.totalorder %s18, 1
    %p104 = por %p102, %p103
    %p106 = scmp.ne.s32.totalorder %s91, %s105
    %p107 = scmp.eq.s32.totalorder %s18, 0
    %p108 = por %p106, %p107
    %s109 = ssub.s32 %s12, %s19
    %p110 = scmp.eq.s32.totalorder %s109, 0
    %s112 = sadd.s32 %s111, 1
    %s113 = scalar_select %p110, %s111, %s112
    %p116 = pneg %p110
    %p117 = scmp.eq.s32.totalorder %s12, 1
    %p118 = por %p116, %p117
    %p119 = scmp.ne.s32.totalorder %s111, %s114
    %p120 = scmp.eq.s32.totalorder %s12, 0
    %p121 = por %p119, %p120
    %p122 = scmp.ne.s32.totalorder %s111, %s114
    %p123 = scmp.eq.s32.totalorder %s17, 1
    %p124 = por %p122, %p123
    %p125 = scmp.ne.s32.totalorder %s114, %s115
    %p126 = scmp.eq.s32.totalorder %s17, 0
    %p127 = por %p125, %p126
    %p128 = scmp.ne.s32.totalorder %s114, %s115
    %p129 = scmp.eq.s32.totalorder %s18, 1
    %p130 = por %p128, %p129
    %p132 = scmp.ne.s32.totalorder %s115, %s131
    %p133 = scmp.eq.s32.totalorder %s18, 0
    %p134 = por %p132, %p133
    %s135 = ssub.s32 %s12, %s19
    %p136 = scmp.eq.s32.totalorder %s135, 0
    %s138 = sadd.s32 %s137, 1
    %s139 = scalar_select %p136, %s137, %s138
    %p142 = pneg %p136
    %p143 = scmp.eq.s32.totalorder %s12, 1
    %p144 = por %p142, %p143
    %p145 = scmp.ne.s32.totalorder %s137, %s140
    %p146 = scmp.eq.s32.totalorder %s12, 0
    %p147 = por %p145, %p146
    %p148 = scmp.ne.s32.totalorder %s137, %s140
    %p149 = scmp.eq.s32.totalorder %s17, 1
    %p150 = por %p148, %p149
    %p151 = scmp.ne.s32.totalorder %s140, %s141
    %p152 = scmp.eq.s32.totalorder %s17, 0
    %p153 = por %p151, %p152
    %p154 = scmp.ne.s32.totalorder %s140, %s141
    %p155 = scmp.eq.s32.totalorder %s18, 1
    %p156 = por %p154, %p155
    %p158 = scmp.ne.s32.totalorder %s141, %s157
    %p159 = scmp.eq.s32.totalorder %s18, 0
    %p160 = por %p158, %p159
    %p161 = scmp.le.s32.totalorder 1, %s12
    %p162 = scmp.lt.s32.totalorder %s12, 3
    %p163 = pnand %p161, %p162
    %p164 = pneg %p163
    // Predicated region
    $region9: #{bottleneck_forward.5} parent=5 // pred_check
      _
    $region10: #{bottleneck_forward.5} parent=5 // pred_check_branch
      %166 = sbr.rel (%p163) target = $region12
    $region11: #{bottleneck_forward.5} parent=5 // pred_region
      %s167 = ssub.s32 %s12, 1
      // Predicated region
      $region13: #{bottleneck_forward.5} parent=11 // pred_check
        %p168 = pneg %p33
      $region14: #{bottleneck_forward.5} parent=11 // pred_check_branch
        %170 = sbr.rel (%p168) target = $region16
      $region15: #{bottleneck_forward.5} parent=11 // pred_region
        _
      $region16: #{bottleneck_forward.5} parent=11 // pred_fallthru
        _
      // Predicated region
      $region17: #{bottleneck_forward.5} parent=11 // pred_check
        %p171 = pneg %p54
      $region18: #{bottleneck_forward.5} parent=11 // pred_check_branch
        %173 = sbr.rel (%p171) target = $region20
      $region19: #{bottleneck_forward.5} parent=11 // pred_region
        _
      $region20: #{bottleneck_forward.5} parent=11 // pred_fallthru
        _
      // Predicated region
      $region21: #{bottleneck_forward.5} parent=11 // pred_check
        %p174 = pneg %p101
      $region22: #{bottleneck_forward.5} parent=11 // pred_check_branch
        %176 = sbr.rel (%p174) target = $region24
      $region23: #{bottleneck_forward.5} parent=11 // pred_region
        _
      $region24: #{bottleneck_forward.5} parent=11 // pred_fallthru
        _
    $region12: #{bottleneck_forward.5} parent=5 // pred_fallthru
      _
    %p177 = scmp.lt.s32.totalorder %s12, 2
    // Predicated region
    $region25: #{bottleneck_forward.5} parent=5 // pred_check
      %p178 = pneg %p177
    $region26: #{bottleneck_forward.5} parent=5 // pred_check_branch
      %180 = sbr.rel (%p178) target = $region28
    $region27: #{bottleneck_forward.5} parent=5 // pred_region
      // Predicated region
      $region29: #{bottleneck_forward.5} parent=27 // pred_check
        %p181 = pneg %p74
      $region30: #{bottleneck_forward.5} parent=27 // pred_check_branch
        %183 = sbr.rel (%p181) target = $region32
      $region31: #{bottleneck_forward.5} parent=27 // pred_region
        %p184 = scmp.lt.s32.totalorder %s12, 1
        %s185 = scalar_select %p184, %s12, 1
        %s186 = smul.addr %s185, 32
        %s187 = smul.addr %s186, 4
        %s188 = scalar_lea.vmem %s2, %s187
      $region32: #{bottleneck_forward.5} parent=27 // pred_fallthru
        _
    $region28: #{bottleneck_forward.5} parent=5 // pred_fallthru
      _
    %p189 = scmp.le.s32.totalorder 1, %s12
    %p190 = scmp.lt.s32.totalorder %s12, 3
    %p191 = pnand %p189, %p190
    %p192 = pneg %p191
    // Predicated region
    $region33: #{bottleneck_forward.5} parent=5 // pred_check
      _
    $region34: #{bottleneck_forward.5} parent=5 // pred_check_branch
      %194 = sbr.rel (%p191) target = $region36
    $region35: #{bottleneck_forward.5} parent=5 // pred_region
      %s195 = ssub.s32 %s12, 1
      %p196 = pneg %p33
      %p197 = pneg %p30
      %p198 = pneg %p54
      %p199 = pneg %p51
      %p200 = scmp.lt.s32.totalorder %s17, 1
      %s201 = scalar_select %p200, %s17, 1
      %s202 = smul.addr %s201, 32
      %s203 = smul.addr %s202, 4
      %s204 = scalar_lea.vmem %s2, %s203
      %p205 = pneg %p80
      %p206 = pneg %p77
      %p207 = pneg %p101
      %p208 = pneg %p98
      %p209 = pneg %p127
      %p210 = pneg %p124
      %s211 = smul.u32 32, %s17
      %p212 = scmp.lt.s32.totalorder %s211, 63
      %s213 = scalar_select %p212, %s211, 63
      %s214 = smul.addr %s213, 4
      %s215 = scalar_lea.vmem %s4, %s214
      %p216 = pneg %p153
      %p217 = pneg %p150
      %p218 = scmp.lt.s32.totalorder %s17, 1
      %s219 = scalar_select %p218, %s17, 1
      %s220 = smul.addr %s219, 8
      %s221 = scalar_lea.vmem %s5, %s220
      %p222 = scmp.lt.s32.totalorder %s17, 1
      %s223 = scalar_select %p222, %s17, 1
      %s224 = smul.addr %s223, 32
      %s225 = smul.addr %s224, 4
      %s226 = scalar_lea.vmem %s2, %s225
      %s227 = smul.u32 32, %s17
      %p228 = scmp.lt.s32.totalorder %s227, 63
      %s229 = scalar_select %p228, %s227, 63
      %s230 = smul.addr %s229, 4
      %s231 = scalar_lea.vmem %s4, %s230
      %s232 = smul.u32 32, %s17
      %p233 = scmp.lt.s32.totalorder %s17, 1
      %s234 = scalar_select %p233, %s17, 1
      %s235 = smul.addr %s234, 8
      %s236 = scalar_lea.vmem %s5, %s235
      %v238 = vld [vmem:[%s0] sm:$0x1]
      %v239 = vld [vmem:[%s1] sm:$0x1]
      %v240 = vld [vmem:[%s226] sm:$0xf]
      %v241 = vld [vmem:[%s226 + $0x4] sm:$0xf]
      %v242 = vld [vmem:[%s226 + $0x8] sm:$0xf]
      %v243 = vld [vmem:[%s226 + $0xc] sm:$0xf]
      %v244 = vld [vmem:[%s226 + $0x10] sm:$0xf]
      %v245 = vld [vmem:[%s226 + $0x14] sm:$0xf]
      %v246 = vld [vmem:[%s226 + $0x18] sm:$0xf]
      %v247 = vld [vmem:[%s226 + $0x1c] sm:$0xf]
      %v248 = vld [vmem:[%s226 + $0x20] sm:$0xf]
      %v249 = vld [vmem:[%s226 + $0x24] sm:$0xf]
      %v250 = vld [vmem:[%s226 + $0x28] sm:$0xf]
      %v251 = vld [vmem:[%s226 + $0x2c] sm:$0xf]
      %v252 = vld [vmem:[%s226 + $0x30] sm:$0xf]
      %v253 = vld [vmem:[%s226 + $0x34] sm:$0xf]
      %v254 = vld [vmem:[%s226 + $0x38] sm:$0xf]
      %v255 = vld [vmem:[%s226 + $0x3c] sm:$0xf]
      %v256 = vld [vmem:[%s226 + $0x40] sm:$0xf]
      %v257 = vld [vmem:[%s226 + $0x44] sm:$0xf]
      %v258 = vld [vmem:[%s226 + $0x48] sm:$0xf]
      %v259 = vld [vmem:[%s226 + $0x4c] sm:$0xf]
      %v260 = vld [vmem:[%s226 + $0x50] sm:$0xf]
      %v261 = vld [vmem:[%s226 + $0x54] sm:$0xf]
      %v262 = vld [vmem:[%s226 + $0x58] sm:$0xf]
      %v263 = vld [vmem:[%s226 + $0x5c] sm:$0xf]
      %v264 = vld [vmem:[%s226 + $0x60] sm:$0xf]
      %v265 = vld [vmem:[%s226 + $0x64] sm:$0xf]
      %v266 = vld [vmem:[%s226 + $0x68] sm:$0xf]
      %v267 = vld [vmem:[%s226 + $0x6c] sm:$0xf]
      %v268 = vld [vmem:[%s226 + $0x70] sm:$0xf]
      %v269 = vld [vmem:[%s226 + $0x74] sm:$0xf]
      %v270 = vld [vmem:[%s226 + $0x78] sm:$0xf]
      %v271 = vld [vmem:[%s226 + $0x7c] sm:$0xf]
      %v272 = vunpack.c.l.bf16 %v240
      %v273 = vunpack.c.l.bf16 %v241
      %v274 = vunpack.c.l.bf16 %v242
      %v275 = vunpack.c.l.bf16 %v243
      %v276 = vunpack.c.l.bf16 %v244
      %v277 = vunpack.c.l.bf16 %v245
      %v278 = vunpack.c.l.bf16 %v246
      %v279 = vunpack.c.l.bf16 %v247
      %v280 = vunpack.c.l.bf16 %v248
      %v281 = vunpack.c.l.bf16 %v249
      %v282 = vunpack.c.l.bf16 %v250
      %v283 = vunpack.c.l.bf16 %v251
      %v284 = vunpack.c.l.bf16 %v252
      %v285 = vunpack.c.l.bf16 %v253
      %v286 = vunpack.c.l.bf16 %v254
      %v287 = vunpack.c.l.bf16 %v255
      %v288 = vunpack.c.l.bf16 %v256
      %v289 = vunpack.c.l.bf16 %v257
      %v290 = vunpack.c.l.bf16 %v258
      %v291 = vunpack.c.l.bf16 %v259
      %v292 = vunpack.c.l.bf16 %v260
      %v293 = vunpack.c.l.bf16 %v261
      %v294 = vunpack.c.l.bf16 %v262
      %v295 = vunpack.c.l.bf16 %v263
      %v296 = vunpack.c.l.bf16 %v264
      %v297 = vunpack.c.l.bf16 %v265
      %v298 = vunpack.c.l.bf16 %v266
      %v299 = vunpack.c.l.bf16 %v267
      %v300 = vunpack.c.l.bf16 %v268
      %v301 = vunpack.c.l.bf16 %v269
      %v302 = vunpack.c.l.bf16 %v270
      %v303 = vunpack.c.l.bf16 %v271
      %v305 = vlaneseq
      %v306 = vshrl.u32 %v305, 7
      %v307 = vsub.s32 0, %v306
      %v308 = vrot.slane %v238, %v307
      %v310 = vmul.f32 %v272, %v308
      %v311 = vmul.f32 %v273, %v308
      %v312 = vmul.f32 %v274, %v308
      %v313 = vmul.f32 %v275, %v308
      %v314 = vmul.f32 %v276, %v308
      %v315 = vmul.f32 %v277, %v308
      %v316 = vmul.f32 %v278, %v308
      %v317 = vmul.f32 %v279, %v308
      %v318 = vmul.f32 %v280, %v308
      %v319 = vmul.f32 %v281, %v308
      %v320 = vmul.f32 %v282, %v308
      %v321 = vmul.f32 %v283, %v308
      %v322 = vmul.f32 %v284, %v308
      %v323 = vmul.f32 %v285, %v308
      %v324 = vmul.f32 %v286, %v308
      %v325 = vmul.f32 %v287, %v308
      %v326 = vmul.f32 %v288, %v308
      %v327 = vmul.f32 %v289, %v308
      %v328 = vmul.f32 %v290, %v308
      %v329 = vmul.f32 %v291, %v308
      %v330 = vmul.f32 %v292, %v308
      %v331 = vmul.f32 %v293, %v308
      %v332 = vmul.f32 %v294, %v308
      %v333 = vmul.f32 %v295, %v308
      %v334 = vmul.f32 %v296, %v308
      %v335 = vmul.f32 %v297, %v308
      %v336 = vmul.f32 %v298, %v308
      %v337 = vmul.f32 %v299, %v308
      %v338 = vmul.f32 %v300, %v308
      %v339 = vmul.f32 %v301, %v308
      %v340 = vmul.f32 %v302, %v308
      %v341 = vmul.f32 %v303, %v308
      %v343 = vlaneseq
      %v344 = vshrl.u32 %v343, 7
      %v345 = vsub.s32 0, %v344
      %v346 = vrot.slane %v239, %v345
      %v348 = vadd.f32 %v310, %v346
      %v349 = vadd.f32 %v311, %v346
      %v350 = vadd.f32 %v312, %v346
      %v351 = vadd.f32 %v313, %v346
      %v352 = vadd.f32 %v314, %v346
      %v353 = vadd.f32 %v315, %v346
      %v354 = vadd.f32 %v316, %v346
      %v355 = vadd.f32 %v317, %v346
      %v356 = vadd.f32 %v318, %v346
      %v357 = vadd.f32 %v319, %v346
      %v358 = vadd.f32 %v320, %v346
      %v359 = vadd.f32 %v321, %v346
      %v360 = vadd.f32 %v322, %v346
      %v361 = vadd.f32 %v323, %v346
      %v362 = vadd.f32 %v324, %v346
      %v363 = vadd.f32 %v325, %v346
      %v364 = vadd.f32 %v326, %v346
      %v365 = vadd.f32 %v327, %v346
      %v366 = vadd.f32 %v328, %v346
      %v367 = vadd.f32 %v329, %v346
      %v368 = vadd.f32 %v330, %v346
      %v369 = vadd.f32 %v331, %v346
      %v370 = vadd.f32 %v332, %v346
      %v371 = vadd.f32 %v333, %v346
      %v372 = vadd.f32 %v334, %v346
      %v373 = vadd.f32 %v335, %v346
      %v374 = vadd.f32 %v336, %v346
      %v375 = vadd.f32 %v337, %v346
      %v376 = vadd.f32 %v338, %v346
      %v377 = vadd.f32 %v339, %v346
      %v378 = vadd.f32 %v340, %v346
      %v379 = vadd.f32 %v341, %v346
      %v380 = vmax.f32 %v348, 0.0
      %v381 = vmax.f32 %v349, 0.0
      %v382 = vmax.f32 %v350, 0.0
      %v383 = vmax.f32 %v351, 0.0
      %v384 = vmax.f32 %v352, 0.0
      %v385 = vmax.f32 %v353, 0.0
      %v386 = vmax.f32 %v354, 0.0
      %v387 = vmax.f32 %v355, 0.0
      %v388 = vmax.f32 %v356, 0.0
      %v389 = vmax.f32 %v357, 0.0
      %v390 = vmax.f32 %v358, 0.0
      %v391 = vmax.f32 %v359, 0.0
      %v392 = vmax.f32 %v360, 0.0
      %v393 = vmax.f32 %v361, 0.0
      %v394 = vmax.f32 %v362, 0.0
      %v395 = vmax.f32 %v363, 0.0
      %v396 = vmax.f32 %v364, 0.0
      %v397 = vmax.f32 %v365, 0.0
      %v398 = vmax.f32 %v366, 0.0
      %v399 = vmax.f32 %v367, 0.0
      %v400 = vmax.f32 %v368, 0.0
      %v401 = vmax.f32 %v369, 0.0
      %v402 = vmax.f32 %v370, 0.0
      %v403 = vmax.f32 %v371, 0.0
      %v404 = vmax.f32 %v372, 0.0
      %v405 = vmax.f32 %v373, 0.0
      %v406 = vmax.f32 %v374, 0.0
      %v407 = vmax.f32 %v375, 0.0
      %v408 = vmax.f32 %v376, 0.0
      %v409 = vmax.f32 %v377, 0.0
      %v410 = vmax.f32 %v378, 0.0
      %v411 = vmax.f32 %v379, 0.0
      %v412 = vpack.c.bf16 %v381, %v380
      %v413 = vpack.c.bf16 %v383, %v382
      %v414 = vpack.c.bf16 %v385, %v384
      %v415 = vpack.c.bf16 %v387, %v386
      %v416 = vpack.c.bf16 %v389, %v388
      %v417 = vpack.c.bf16 %v391, %v390
      %v418 = vpack.c.bf16 %v393, %v392
      %v419 = vpack.c.bf16 %v395, %v394
      %v420 = vpack.c.bf16 %v397, %v396
      %v421 = vpack.c.bf16 %v399, %v398
      %v422 = vpack.c.bf16 %v401, %v400
      %v423 = vpack.c.bf16 %v403, %v402
      %v424 = vpack.c.bf16 %v405, %v404
      %v425 = vpack.c.bf16 %v407, %v406
      %v426 = vpack.c.bf16 %v409, %v408
      %v427 = vpack.c.bf16 %v411, %v410
      %v429 = vshrl.u32 %v412, 16
      %v431 = vrot.slane %v429, 7
      %v432 = vshll.u32 %v412, 16
      %v434 = vor.u32 %v431, %v432
      %v436 = vshrl.u32 %v413, 16
      %v438 = vrot.slane %v436, 7
      %v439 = vshll.u32 %v413, 16
      %v441 = vor.u32 %v438, %v439
      %v443 = vshrl.u32 %v414, 16
      %v445 = vrot.slane %v443, 7
      %v446 = vshll.u32 %v414, 16
      %v448 = vor.u32 %v445, %v446
      %v450 = vshrl.u32 %v415, 16
      %v452 = vrot.slane %v450, 7
      %v453 = vshll.u32 %v415, 16
      %v455 = vor.u32 %v452, %v453
      %v457 = vshrl.u32 %v416, 16
      %v459 = vrot.slane %v457, 7
      %v460 = vshll.u32 %v416, 16
      %v462 = vor.u32 %v459, %v460
      %v464 = vshrl.u32 %v417, 16
      %v466 = vrot.slane %v464, 7
      %v467 = vshll.u32 %v417, 16
      %v469 = vor.u32 %v466, %v467
      %v471 = vshrl.u32 %v418, 16
      %v473 = vrot.slane %v471, 7
      %v474 = vshll.u32 %v418, 16
      %v476 = vor.u32 %v473, %v474
      %v478 = vshrl.u32 %v419, 16
      %v480 = vrot.slane %v478, 7
      %v481 = vshll.u32 %v419, 16
      %v483 = vor.u32 %v480, %v481
      %v485 = vshrl.u32 %v420, 16
      %v487 = vrot.slane %v485, 7
      %v488 = vshll.u32 %v420, 16
      %v490 = vor.u32 %v487, %v488
      %v492 = vshrl.u32 %v421, 16
      %v494 = vrot.slane %v492, 7
      %v495 = vshll.u32 %v421, 16
      %v497 = vor.u32 %v494, %v495
      %v499 = vshrl.u32 %v422, 16
      %v501 = vrot.slane %v499, 7
      %v502 = vshll.u32 %v422, 16
      %v504 = vor.u32 %v501, %v502
      %v506 = vshrl.u32 %v423, 16
      %v508 = vrot.slane %v506, 7
      %v509 = vshll.u32 %v423, 16
      %v511 = vor.u32 %v508, %v509
      %v513 = vshrl.u32 %v424, 16
      %v515 = vrot.slane %v513, 7
      %v516 = vshll.u32 %v424, 16
      %v518 = vor.u32 %v515, %v516
      %v520 = vshrl.u32 %v425, 16
      %v522 = vrot.slane %v520, 7
      %v523 = vshll.u32 %v425, 16
      %v525 = vor.u32 %v522, %v523
      %v527 = vshrl.u32 %v426, 16
      %v529 = vrot.slane %v527, 7
      %v530 = vshll.u32 %v426, 16
      %v532 = vor.u32 %v529, %v530
      %v534 = vshrl.u32 %v427, 16
      %v536 = vrot.slane %v534, 7
      %v537 = vshll.u32 %v427, 16
      %v539 = vor.u32 %v536, %v537
      %vm572 = vcmask 1040384
      %vm573 = vsmask.f32 256
      %vm574 = vmand %vm572, %vm573
      %v575 = vsel %vm574, 0, %v434
      %v576 = vsel %vm574, 0, %v441
      %v577 = vsel %vm574, 0, %v448
      %v578 = vsel %vm574, 0, %v455
      %v579 = vsel %vm574, 0, %v462
      %v580 = vsel %vm574, 0, %v469
      %v581 = vsel %vm574, 0, %v476
      %v582 = vsel %vm574, 0, %v483
      %v583 = vsel %vm574, 0, %v490
      %v584 = vsel %vm574, 0, %v497
      %v585 = vsel %vm574, 0, %v504
      %v586 = vsel %vm574, 0, %v511
      %v587 = vsel %vm574, 0, %v518
      %v588 = vsel %vm574, 0, %v525
      %v589 = vsel %vm574, 0, %v532
      %v590 = vsel %vm574, 0, %v539
      %v591 = vsel %vm574, %v431, 0
      %v592 = vsel %vm574, %v438, 0
      %v593 = vsel %vm574, %v445, 0
      %v594 = vsel %vm574, %v452, 0
      %v595 = vsel %vm574, %v459, 0
      %v596 = vsel %vm574, %v466, 0
      %v597 = vsel %vm574, %v473, 0
      %v598 = vsel %vm574, %v480, 0
      %v599 = vsel %vm574, %v487, 0
      %v600 = vsel %vm574, %v494, 0
      %v601 = vsel %vm574, %v501, 0
      %v602 = vsel %vm574, %v508, 0
      %v603 = vsel %vm574, %v515, 0
      %v604 = vsel %vm574, %v522, 0
      %v605 = vsel %vm574, %v529, 0
      %v606 = vsel %vm574, %v536, 0
      %vm607 = vsmask.f32 7424
      %v609 = vshrl.u32 0, 16
      %v611 = vshll.u32 0, 16
      %v613 = vrot.slane %v611, 1
      %v614 = vor.u32 %v609, %v613
      %v615 = vsel %vm607, %v614, %v613
      %v617 = vshrl.u32 %v575, 16
      %v619 = vshll.u32 %v575, 16
      %v621 = vrot.slane %v619, 1
      %v622 = vor.u32 %v617, %v621
      %v624 = vshll.u32 %v591, 16
      %v626 = vrot.slane %v624, 1
      %v627 = vsel %vm607, %v622, %v626
      %v629 = vshrl.u32 %v576, 16
      %v631 = vshll.u32 %v576, 16
      %v633 = vrot.slane %v631, 1
      %v634 = vor.u32 %v629, %v633
      %v636 = vshll.u32 %v592, 16
      %v638 = vrot.slane %v636, 1
      %v639 = vsel %vm607, %v634, %v638
      %v641 = vshrl.u32 %v577, 16
      %v643 = vshll.u32 %v577, 16
      %v645 = vrot.slane %v643, 1
      %v646 = vor.u32 %v641, %v645
      %v648 = vshll.u32 %v593, 16
      %v650 = vrot.slane %v648, 1
      %v651 = vsel %vm607, %v646, %v650
      %v653 = vshrl.u32 %v578, 16
      %v655 = vshll.u32 %v578, 16
      %v657 = vrot.slane %v655, 1
      %v658 = vor.u32 %v653, %v657
      %v660 = vshll.u32 %v594, 16
      %v662 = vrot.slane %v660, 1
      %v663 = vsel %vm607, %v658, %v662
      %v665 = vshrl.u32 %v579, 16
      %v667 = vshll.u32 %v579, 16
      %v669 = vrot.slane %v667, 1
      %v670 = vor.u32 %v665, %v669
      %v672 = vshll.u32 %v595, 16
      %v674 = vrot.slane %v672, 1
      %v675 = vsel %vm607, %v670, %v674
      %v677 = vshrl.u32 %v580, 16
      %v679 = vshll.u32 %v580, 16
      %v681 = vrot.slane %v679, 1
      %v682 = vor.u32 %v677, %v681
      %v684 = vshll.u32 %v596, 16
      %v686 = vrot.slane %v684, 1
      %v687 = vsel %vm607, %v682, %v686
      %v689 = vshrl.u32 %v581, 16
      %v691 = vshll.u32 %v581, 16
      %v693 = vrot.slane %v691, 1
      %v694 = vor.u32 %v689, %v693
      %v696 = vshll.u32 %v597, 16
      %v698 = vrot.slane %v696, 1
      %v699 = vsel %vm607, %v694, %v698
      %v701 = vshrl.u32 %v582, 16
      %v703 = vshll.u32 %v582, 16
      %v705 = vrot.slane %v703, 1
      %v706 = vor.u32 %v701, %v705
      %v708 = vshll.u32 %v598, 16
      %v710 = vrot.slane %v708, 1
      %v711 = vsel %vm607, %v706, %v710
      %v713 = vshrl.u32 %v583, 16
      %v715 = vshll.u32 %v583, 16
      %v717 = vrot.slane %v715, 1
      %v718 = vor.u32 %v713, %v717
      %v720 = vshll.u32 %v599, 16
      %v722 = vrot.slane %v720, 1
      %v723 = vsel %vm607, %v718, %v722
      %v725 = vshrl.u32 %v584, 16
      %v727 = vshll.u32 %v584, 16
      %v729 = vrot.slane %v727, 1
      %v730 = vor.u32 %v725, %v729
      %v732 = vshll.u32 %v600, 16
      %v734 = vrot.slane %v732, 1
      %v735 = vsel %vm607, %v730, %v734
      %v737 = vshrl.u32 %v585, 16
      %v739 = vshll.u32 %v585, 16
      %v741 = vrot.slane %v739, 1
      %v742 = vor.u32 %v737, %v741
      %v744 = vshll.u32 %v601, 16
      %v746 = vrot.slane %v744, 1
      %v747 = vsel %vm607, %v742, %v746
      %v749 = vshrl.u32 %v586, 16
      %v751 = vshll.u32 %v586, 16
      %v753 = vrot.slane %v751, 1
      %v754 = vor.u32 %v749, %v753
      %v756 = vshll.u32 %v602, 16
      %v758 = vrot.slane %v756, 1
      %v759 = vsel %vm607, %v754, %v758
      %v761 = vshrl.u32 %v587, 16
      %v763 = vshll.u32 %v587, 16
      %v765 = vrot.slane %v763, 1
      %v766 = vor.u32 %v761, %v765
      %v768 = vshll.u32 %v603, 16
      %v770 = vrot.slane %v768, 1
      %v771 = vsel %vm607, %v766, %v770
      %v773 = vshrl.u32 %v588, 16
      %v775 = vshll.u32 %v588, 16
      %v777 = vrot.slane %v775, 1
      %v778 = vor.u32 %v773, %v777
      %v780 = vshll.u32 %v604, 16
      %v782 = vrot.slane %v780, 1
      %v783 = vsel %vm607, %v778, %v782
      %v785 = vshrl.u32 %v589, 16
      %v787 = vshll.u32 %v589, 16
      %v789 = vrot.slane %v787, 1
      %v790 = vor.u32 %v785, %v789
      %v792 = vshll.u32 %v605, 16
      %v794 = vrot.slane %v792, 1
      %v795 = vsel %vm607, %v790, %v794
      %vm843 = vcmask 1046528
      %v844 = vrot.slane 0, 1
      %v845 = vsel %vm843, %v844, %v844
      %v846 = vrot.slane %v575, 1
      %v847 = vrot.slane %v591, 1
      %v848 = vsel %vm843, %v846, %v847
      %v849 = vrot.slane %v576, 1
      %v850 = vrot.slane %v592, 1
      %v851 = vsel %vm843, %v849, %v850
      %v852 = vrot.slane %v577, 1
      %v853 = vrot.slane %v593, 1
      %v854 = vsel %vm843, %v852, %v853
      %v855 = vrot.slane %v578, 1
      %v856 = vrot.slane %v594, 1
      %v857 = vsel %vm843, %v855, %v856
      %v858 = vrot.slane %v579, 1
      %v859 = vrot.slane %v595, 1
      %v860 = vsel %vm843, %v858, %v859
      %v861 = vrot.slane %v580, 1
      %v862 = vrot.slane %v596, 1
      %v863 = vsel %vm843, %v861, %v862
      %v864 = vrot.slane %v581, 1
      %v865 = vrot.slane %v597, 1
      %v866 = vsel %vm843, %v864, %v865
      %v867 = vrot.slane %v582, 1
      %v868 = vrot.slane %v598, 1
      %v869 = vsel %vm843, %v867, %v868
      %v870 = vrot.slane %v583, 1
      %v871 = vrot.slane %v599, 1
      %v872 = vsel %vm843, %v870, %v871
      %v873 = vrot.slane %v584, 1
      %v874 = vrot.slane %v600, 1
      %v875 = vsel %vm843, %v873, %v874
      %v876 = vrot.slane %v585, 1
      %v877 = vrot.slane %v601, 1
      %v878 = vsel %vm843, %v876, %v877
      %v879 = vrot.slane %v586, 1
      %v880 = vrot.slane %v602, 1
      %v881 = vsel %vm843, %v879, %v880
      %v882 = vrot.slane %v587, 1
      %v883 = vrot.slane %v603, 1
      %v884 = vsel %vm843, %v882, %v883
      %v885 = vrot.slane %v588, 1
      %v886 = vrot.slane %v604, 1
      %v887 = vsel %vm843, %v885, %v886
      %v888 = vrot.slane %v589, 1
      %v889 = vrot.slane %v605, 1
      %v890 = vsel %vm843, %v888, %v889
      %v907 = vld [vmem:[%s3] sm:$0xf]
      %v908 = vld [vmem:[%s3 + $0x4] sm:$0xf]
      %v909 = vld [vmem:[%s3 + $0x8] sm:$0xf]
      %v910 = vld [vmem:[%s3 + $0xc] sm:$0xf]
      %v911 = vld [vmem:[%s3 + $0x10] sm:$0xf]
      %v912 = vld [vmem:[%s3 + $0x14] sm:$0xf]
      %v913 = vld [vmem:[%s3 + $0x18] sm:$0xf]
      %v914 = vld [vmem:[%s3 + $0x1c] sm:$0xf]
      %v915 = vld [vmem:[%s3 + $0x20] sm:$0xf]
      %v916 = vld [vmem:[%s3 + $0x24] sm:$0xf]
      %v917 = vld [vmem:[%s3 + $0x28] sm:$0xf]
      %v918 = vld [vmem:[%s3 + $0x2c] sm:$0xf]
      %v919 = vld [vmem:[%s3 + $0x30] sm:$0xf]
      %v920 = vld [vmem:[%s3 + $0x34] sm:$0xf]
      %v921 = vld [vmem:[%s3 + $0x38] sm:$0xf]
      %v922 = vld [vmem:[%s3 + $0x3c] sm:$0xf]
      %v923 = vld [vmem:[%s3 + $0x40] sm:$0xf]
      %v924 = vld [vmem:[%s3 + $0x44] sm:$0xf]
      %v925 = vld [vmem:[%s3 + $0x48] sm:$0xf]
      %v926 = vld [vmem:[%s3 + $0x4c] sm:$0xf]
      %v927 = vld [vmem:[%s3 + $0x50] sm:$0xf]
      %v928 = vld [vmem:[%s3 + $0x54] sm:$0xf]
      %v929 = vld [vmem:[%s3 + $0x58] sm:$0xf]
      %v930 = vld [vmem:[%s3 + $0x5c] sm:$0xf]
      %v931 = vld [vmem:[%s3 + $0x60] sm:$0xf]
      %v932 = vld [vmem:[%s3 + $0x64] sm:$0xf]
      %v933 = vld [vmem:[%s3 + $0x68] sm:$0xf]
      %v934 = vld [vmem:[%s3 + $0x6c] sm:$0xf]
      %v935 = vld [vmem:[%s3 + $0x70] sm:$0xf]
      %v936 = vld [vmem:[%s3 + $0x74] sm:$0xf]
      %v937 = vld [vmem:[%s3 + $0x78] sm:$0xf]
      %v938 = vld [vmem:[%s3 + $0x7c] sm:$0xf]
      %v939 = vld [vmem:[%s3 + $0x80] sm:$0xf]
      %v940 = vld [vmem:[%s3 + $0x84] sm:$0xf]
      %v941 = vld [vmem:[%s3 + $0x88] sm:$0xf]
      %v942 = vld [vmem:[%s3 + $0x8c] sm:$0xf]
      %v943 = vld [vmem:[%s3 + $0x90] sm:$0xf]
      %v944 = vld [vmem:[%s3 + $0x94] sm:$0xf]
      %v945 = vld [vmem:[%s3 + $0x98] sm:$0xf]
      %v946 = vld [vmem:[%s3 + $0x9c] sm:$0xf]
      %v947 = vld [vmem:[%s3 + $0xa0] sm:$0xf]
      %v948 = vld [vmem:[%s3 + $0xa4] sm:$0xf]
      %v949 = vld [vmem:[%s3 + $0xa8] sm:$0xf]
      %v950 = vld [vmem:[%s3 + $0xac] sm:$0xf]
      %v951 = vld [vmem:[%s3 + $0xb0] sm:$0xf]
      %v952 = vld [vmem:[%s3 + $0xb4] sm:$0xf]
      %v953 = vld [vmem:[%s3 + $0xb8] sm:$0xf]
      %v954 = vld [vmem:[%s3 + $0xbc] sm:$0xf]
      %v956 = vshrl.u32 %v590, 16
      %v958 = vshll.u32 %v590, 16
      %v960 = vrot.slane %v958, 1
      %v961 = vor.u32 %v956, %v960
      %v963 = vshll.u32 %v606, 16
      %v965 = vrot.slane %v963, 1
      %v966 = vsel %vm607, %v961, %v965
      %v970 = vrot.slane %v590, 1
      %v971 = vrot.slane %v606, 1
      %v972 = vsel %vm843, %v970, %v971
      %s974 = scalar_lea.vmem %s3, 192
      %v975 = vld [vmem:[%s974] sm:$0xf]
      %v976 = vld [vmem:[%s974 + $0x4] sm:$0xf]
      %v977 = vld [vmem:[%s974 + $0x8] sm:$0xf]
      %v978 = vld [vmem:[%s974 + $0xc] sm:$0xf]
      %v979 = vld [vmem:[%s974 + $0x10] sm:$0xf]
      %v980 = vld [vmem:[%s974 + $0x14] sm:$0xf]
      %v981 = vld [vmem:[%s974 + $0x18] sm:$0xf]
      %v982 = vld [vmem:[%s974 + $0x1c] sm:$0xf]
      %v983 = vld [vmem:[%s974 + $0x20] sm:$0xf]
      %v984 = vld [vmem:[%s974 + $0x24] sm:$0xf]
      %v985 = vld [vmem:[%s974 + $0x28] sm:$0xf]
      %v986 = vld [vmem:[%s974 + $0x2c] sm:$0xf]
      %v987 = vld [vmem:[%s974 + $0x30] sm:$0xf]
      %v988 = vld [vmem:[%s974 + $0x34] sm:$0xf]
      %v989 = vld [vmem:[%s974 + $0x38] sm:$0xf]
      %v990 = vld [vmem:[%s974 + $0x3c] sm:$0xf]
      %v991 = vld [vmem:[%s974 + $0x40] sm:$0xf]
      %v992 = vld [vmem:[%s974 + $0x44] sm:$0xf]
      %v993 = vld [vmem:[%s974 + $0x48] sm:$0xf]
      %v994 = vld [vmem:[%s974 + $0x4c] sm:$0xf]
      %v995 = vld [vmem:[%s974 + $0x50] sm:$0xf]
      %v996 = vld [vmem:[%s974 + $0x54] sm:$0xf]
      %v997 = vld [vmem:[%s974 + $0x58] sm:$0xf]
      %v998 = vld [vmem:[%s974 + $0x5c] sm:$0xf]
      %v999 = vld [vmem:[%s974 + $0x60] sm:$0xf]
      %v1000 = vld [vmem:[%s974 + $0x64] sm:$0xf]
      %v1001 = vld [vmem:[%s974 + $0x68] sm:$0xf]
      %v1002 = vld [vmem:[%s974 + $0x6c] sm:$0xf]
      %v1003 = vld [vmem:[%s974 + $0x70] sm:$0xf]
      %v1004 = vld [vmem:[%s974 + $0x74] sm:$0xf]
      %v1005 = vld [vmem:[%s974 + $0x78] sm:$0xf]
      %v1006 = vld [vmem:[%s974 + $0x7c] sm:$0xf]
      %v1007 = vld [vmem:[%s974 + $0x80] sm:$0xf]
      %v1008 = vld [vmem:[%s974 + $0x84] sm:$0xf]
      %v1009 = vld [vmem:[%s974 + $0x88] sm:$0xf]
      %v1010 = vld [vmem:[%s974 + $0x8c] sm:$0xf]
      %v1011 = vld [vmem:[%s974 + $0x90] sm:$0xf]
      %v1012 = vld [vmem:[%s974 + $0x94] sm:$0xf]
      %v1013 = vld [vmem:[%s974 + $0x98] sm:$0xf]
      %v1014 = vld [vmem:[%s974 + $0x9c] sm:$0xf]
      %v1015 = vld [vmem:[%s974 + $0xa0] sm:$0xf]
      %v1016 = vld [vmem:[%s974 + $0xa4] sm:$0xf]
      %v1017 = vld [vmem:[%s974 + $0xa8] sm:$0xf]
      %v1018 = vld [vmem:[%s974 + $0xac] sm:$0xf]
      %v1019 = vld [vmem:[%s974 + $0xb0] sm:$0xf]
      %v1020 = vld [vmem:[%s974 + $0xb4] sm:$0xf]
      %v1021 = vld [vmem:[%s974 + $0xb8] sm:$0xf]
      %v1022 = vld [vmem:[%s974 + $0xbc] sm:$0xf]
      %v1071 = vunpack.c.l.b16 %v975
      %v1072 = vunpack.c.l.b16 %v976
      %v1073 = vunpack.c.l.b16 %v977
      %v1074 = vunpack.c.l.b16 %v978
      %v1075 = vunpack.c.l.b16 %v979
      %v1076 = vunpack.c.l.b16 %v980
      %v1077 = vunpack.c.l.b16 %v981
      %v1078 = vunpack.c.l.b16 %v982
      %v1079 = vunpack.c.l.b16 %v983
      %v1080 = vunpack.c.l.b16 %v984
      %v1081 = vunpack.c.l.b16 %v985
      %v1082 = vunpack.c.l.b16 %v986
      %v1083 = vunpack.c.l.b16 %v987
      %v1084 = vunpack.c.l.b16 %v988
      %v1085 = vunpack.c.l.b16 %v989
      %v1086 = vunpack.c.l.b16 %v990
      %v1087 = vunpack.c.l.b16 %v991
      %v1088 = vunpack.c.l.b16 %v992
      %v1089 = vunpack.c.l.b16 %v993
      %v1090 = vunpack.c.l.b16 %v994
      %v1091 = vunpack.c.l.b16 %v995
      %v1092 = vunpack.c.l.b16 %v996
      %v1093 = vunpack.c.l.b16 %v997
      %v1094 = vunpack.c.l.b16 %v998
      %v1095 = vunpack.c.l.b16 %v999
      %v1096 = vunpack.c.l.b16 %v1000
      %v1097 = vunpack.c.l.b16 %v1001
      %v1098 = vunpack.c.l.b16 %v1002
      %v1099 = vunpack.c.l.b16 %v1003
      %v1100 = vunpack.c.l.b16 %v1004
      %v1101 = vunpack.c.l.b16 %v1005
      %v1102 = vunpack.c.l.b16 %v1006
      %v1103 = vunpack.c.l.b16 %v1007
      %v1104 = vunpack.c.l.b16 %v1008
      %v1105 = vunpack.c.l.b16 %v1009
      %v1106 = vunpack.c.l.b16 %v1010
      %v1107 = vunpack.c.l.b16 %v1011
      %v1108 = vunpack.c.l.b16 %v1012
      %v1109 = vunpack.c.l.b16 %v1013
      %v1110 = vunpack.c.l.b16 %v1014
      %v1111 = vunpack.c.l.b16 %v1015
      %v1112 = vunpack.c.l.b16 %v1016
      %v1113 = vunpack.c.l.b16 %v1017
      %v1114 = vunpack.c.l.b16 %v1018
      %v1115 = vunpack.c.l.b16 %v1019
      %v1116 = vunpack.c.l.b16 %v1020
      %v1117 = vunpack.c.l.b16 %v1021
      %v1118 = vunpack.c.l.b16 %v1022
      %v1119 = vpack.c.b16 %v1072, %v1071
      %v1120 = vpack.c.b16 %v1074, %v1073
      %v1121 = vpack.c.b16 %v1076, %v1075
      %v1122 = vpack.c.b16 %v1078, %v1077
      %v1123 = vpack.c.b16 %v1080, %v1079
      %v1124 = vpack.c.b16 %v1082, %v1081
      %v1125 = vpack.c.b16 %v1084, %v1083
      %v1126 = vpack.c.b16 %v1086, %v1085
      %v1127 = vpack.c.b16 %v1088, %v1087
      %v1128 = vpack.c.b16 %v1090, %v1089
      %v1129 = vpack.c.b16 %v1092, %v1091
      %v1130 = vpack.c.b16 %v1094, %v1093
      %v1131 = vpack.c.b16 %v1096, %v1095
      %v1132 = vpack.c.b16 %v1098, %v1097
      %v1133 = vpack.c.b16 %v1100, %v1099
      %v1134 = vpack.c.b16 %v1102, %v1101
      %v1135 = vpack.c.b16 %v1104, %v1103
      %v1136 = vpack.c.b16 %v1106, %v1105
      %v1137 = vpack.c.b16 %v1108, %v1107
      %v1138 = vpack.c.b16 %v1110, %v1109
      %v1139 = vpack.c.b16 %v1112, %v1111
      %v1140 = vpack.c.b16 %v1114, %v1113
      %v1141 = vpack.c.b16 %v1116, %v1115
      %v1142 = vpack.c.b16 %v1118, %v1117
      %1167 = vmatprep.subr.bf16.mxu0 0
      %1168 = vmatpush1.bf16.msra.mxu0 %v1126
      %1169 = vmatprep.subr.bf16.mxu0 0
      %1170 = vmatpush1.bf16.msra.mxu0 %v1125
      %1171 = vmatprep.subr.bf16.mxu0 0
      %1172 = vmatpush1.bf16.msra.mxu0 %v1124
      %1173 = vmatprep.subr.bf16.mxu0 0
      %1174 = vmatpush1.bf16.msra.mxu0 %v1123
      %1175 = vmatprep.subr.bf16.mxu0 0
      %1176 = vmatpush1.bf16.msra.mxu0 %v1122
      %1177 = vmatprep.subr.bf16.mxu0 0
      %1178 = vmatpush1.bf16.msra.mxu0 %v1121
      %1179 = vmatprep.subr.bf16.mxu0 0
      %1180 = vmatpush1.bf16.msra.mxu0 %v1120
      %1181 = vmatprep.subr.bf16.mxu0 0
      %1182 = vmatpush1.bf16.msra.mxu0 %v1119
      %1183 = vmatprep.subr.bf16.mxu0 0
      %1184 = vmatpush2.bf16.msra.mxu0 %v1134
      %1185 = vmatprep.subr.bf16.mxu0 0
      %1186 = vmatpush2.bf16.msra.mxu0 %v1133
      %1187 = vmatprep.subr.bf16.mxu0 0
      %1188 = vmatpush2.bf16.msra.mxu0 %v1132
      %1189 = vmatprep.subr.bf16.mxu0 0
      %1190 = vmatpush2.bf16.msra.mxu0 %v1131
      %1191 = vmatprep.subr.bf16.mxu0 0
      %1192 = vmatpush2.bf16.msra.mxu0 %v1130
      %1193 = vmatprep.subr.bf16.mxu0 0
      %1194 = vmatpush2.bf16.msra.mxu0 %v1129
      %1195 = vmatprep.subr.bf16.mxu0 0
      %1196 = vmatpush2.bf16.msra.mxu0 %v1128
      %1197 = vmatprep.subr.bf16.mxu0 0
      %1198 = vmatpush2.bf16.msra.mxu0 %v1127
      %1199 = vmatprep.mubr.bf16.mxu0 %v627
      %1200 = vmatmul.mubr.bf16.gmra.mxu0 %v575
      %v1201 = vpop.f32.mrf.mxu0
      %v1202 = vadd.f32 0.0, %v1201
      %v1203 = vpop.f32.mrf.mxu0
      %v1204 = vpop.f32.mrf.mxu0
      %v1205 = vadd.f32 0.0, %v1204
      %v1206 = vpop.f32.mrf.mxu0
      %1207 = vmatprep.mubr.bf16.mxu0 %v639
      %1208 = vmatmul.mubr.bf16.gmra.mxu0 %v576
      %v1209 = vpop.f32.mrf.mxu0
      %v1210 = vadd.f32 0.0, %v1209
      %v1211 = vpop.f32.mrf.mxu0
      %v1212 = vpop.f32.mrf.mxu0
      %v1213 = vadd.f32 0.0, %v1212
      %v1214 = vpop.f32.mrf.mxu0
      %1215 = vmatprep.mubr.bf16.mxu0 %v651
      %1216 = vmatmul.mubr.bf16.gmra.mxu0 %v577
      %v1217 = vpop.f32.mrf.mxu0
      %v1218 = vadd.f32 0.0, %v1217
      %v1219 = vpop.f32.mrf.mxu0
      %v1220 = vpop.f32.mrf.mxu0
      %v1221 = vadd.f32 0.0, %v1220
      %v1222 = vpop.f32.mrf.mxu0
      %1223 = vmatprep.mubr.bf16.mxu0 %v663
      %1224 = vmatmul.mubr.bf16.gmra.mxu0 %v578
      %v1225 = vpop.f32.mrf.mxu0
      %v1226 = vadd.f32 0.0, %v1225
      %v1227 = vpop.f32.mrf.mxu0
      %v1228 = vpop.f32.mrf.mxu0
      %v1229 = vadd.f32 0.0, %v1228
      %v1230 = vpop.f32.mrf.mxu0
      %1231 = vmatprep.mubr.bf16.mxu0 %v675
      %1232 = vmatmul.mubr.bf16.gmra.mxu0 %v579
      %v1233 = vpop.f32.mrf.mxu0
      %v1234 = vadd.f32 0.0, %v1233
      %v1235 = vpop.f32.mrf.mxu0
      %v1236 = vpop.f32.mrf.mxu0
      %v1237 = vadd.f32 0.0, %v1236
      %v1238 = vpop.f32.mrf.mxu0
      %1239 = vmatprep.mubr.bf16.mxu0 %v687
      %1240 = vmatmul.mubr.bf16.gmra.mxu0 %v580
      %v1241 = vpop.f32.mrf.mxu0
      %v1242 = vadd.f32 0.0, %v1241
      %v1243 = vpop.f32.mrf.mxu0
      %v1244 = vpop.f32.mrf.mxu0
      %v1245 = vadd.f32 0.0, %v1244
      %v1246 = vpop.f32.mrf.mxu0
      %1247 = vmatprep.mubr.bf16.mxu0 %v699
      %1248 = vmatmul.mubr.bf16.gmra.mxu0 %v581
      %v1249 = vpop.f32.mrf.mxu0
      %v1250 = vadd.f32 0.0, %v1249
      %v1251 = vpop.f32.mrf.mxu0
      %v1252 = vpop.f32.mrf.mxu0
      %v1253 = vadd.f32 0.0, %v1252
      %v1254 = vpop.f32.mrf.mxu0
      %1255 = vmatprep.mubr.bf16.mxu0 %v711
      %1256 = vmatmul.mubr.bf16.gmra.mxu0 %v582
      %v1257 = vpop.f32.mrf.mxu0
      %v1258 = vadd.f32 0.0, %v1257
      %v1259 = vpop.f32.mrf.mxu0
      %v1260 = vpop.f32.mrf.mxu0
      %v1261 = vadd.f32 0.0, %v1260
      %v1262 = vpop.f32.mrf.mxu0
      %1263 = vmatprep.mubr.bf16.mxu0 %v723
      %1264 = vmatmul.mubr.bf16.gmra.mxu0 %v583
      %v1265 = vpop.f32.mrf.mxu0
      %v1266 = vadd.f32 0.0, %v1265
      %v1267 = vpop.f32.mrf.mxu0
      %v1268 = vpop.f32.mrf.mxu0
      %v1269 = vadd.f32 0.0, %v1268
      %v1270 = vpop.f32.mrf.mxu0
      %1271 = vmatprep.mubr.bf16.mxu0 %v735
      %1272 = vmatmul.mubr.bf16.gmra.mxu0 %v584
      %v1273 = vpop.f32.mrf.mxu0
      %v1274 = vadd.f32 0.0, %v1273
      %v1275 = vpop.f32.mrf.mxu0
      %v1276 = vpop.f32.mrf.mxu0
      %v1277 = vadd.f32 0.0, %v1276
      %v1278 = vpop.f32.mrf.mxu0
      %1279 = vmatprep.mubr.bf16.mxu0 %v747
      %1280 = vmatmul.mubr.bf16.gmra.mxu0 %v585
      %v1281 = vpop.f32.mrf.mxu0
      %v1282 = vadd.f32 0.0, %v1281
      %v1283 = vpop.f32.mrf.mxu0
      %v1284 = vpop.f32.mrf.mxu0
      %v1285 = vadd.f32 0.0, %v1284
      %v1286 = vpop.f32.mrf.mxu0
      %1287 = vmatprep.mubr.bf16.mxu0 %v759
      %1288 = vmatmul.mubr.bf16.gmra.mxu0 %v586
      %v1289 = vpop.f32.mrf.mxu0
      %v1290 = vadd.f32 0.0, %v1289
      %v1291 = vpop.f32.mrf.mxu0
      %v1292 = vpop.f32.mrf.mxu0
      %v1293 = vadd.f32 0.0, %v1292
      %v1294 = vpop.f32.mrf.mxu0
      %1295 = vmatprep.mubr.bf16.mxu0 %v771
      %1296 = vmatmul.mubr.bf16.gmra.mxu0 %v587
      %v1297 = vpop.f32.mrf.mxu0
      %v1298 = vadd.f32 0.0, %v1297
      %v1299 = vpop.f32.mrf.mxu0
      %v1300 = vpop.f32.mrf.mxu0
      %v1301 = vadd.f32 0.0, %v1300
      %v1302 = vpop.f32.mrf.mxu0
      %1303 = vmatprep.mubr.bf16.mxu0 %v783
      %1304 = vmatmul.mubr.bf16.gmra.mxu0 %v588
      %v1305 = vpop.f32.mrf.mxu0
      %v1306 = vadd.f32 0.0, %v1305
      %v1307 = vpop.f32.mrf.mxu0
      %v1308 = vpop.f32.mrf.mxu0
      %v1309 = vadd.f32 0.0, %v1308
      %v1310 = vpop.f32.mrf.mxu0
      %1311 = vmatprep.mubr.bf16.mxu0 %v795
      %1312 = vmatmul.mubr.bf16.gmra.mxu0 %v589
      %v1313 = vpop.f32.mrf.mxu0
      %v1314 = vadd.f32 0.0, %v1313
      %v1315 = vpop.f32.mrf.mxu0
      %v1316 = vpop.f32.mrf.mxu0
      %v1317 = vadd.f32 0.0, %v1316
      %v1318 = vpop.f32.mrf.mxu0
      %1319 = vmatprep.mubr.bf16.mxu0 %v966
      %1320 = vmatmul.mubr.bf16.gmra.mxu0 %v590
      %v1321 = vpop.f32.mrf.mxu0
      %v1322 = vadd.f32 0.0, %v1321
      %v1323 = vpop.f32.mrf.mxu0
      %v1324 = vpop.f32.mrf.mxu0
      %v1325 = vadd.f32 0.0, %v1324
      %v1326 = vpop.f32.mrf.mxu0
      %1327 = vdwg.mxu0
      %1328 = vmatprep.subr.bf16.mxu0 0
      %1329 = vmatpush1.bf16.msra.mxu0 %v1142
      %1330 = vmatprep.subr.bf16.mxu0 0
      %1331 = vmatpush1.bf16.msra.mxu0 %v1141
      %1332 = vmatprep.subr.bf16.mxu0 0
      %1333 = vmatpush1.bf16.msra.mxu0 %v1140
      %1334 = vmatprep.subr.bf16.mxu0 0
      %1335 = vmatpush1.bf16.msra.mxu0 %v1139
      %1336 = vmatprep.subr.bf16.mxu0 0
      %1337 = vmatpush1.bf16.msra.mxu0 %v1138
      %1338 = vmatprep.subr.bf16.mxu0 0
      %1339 = vmatpush1.bf16.msra.mxu0 %v1137
      %1340 = vmatprep.subr.bf16.mxu0 0
      %1341 = vmatpush1.bf16.msra.mxu0 %v1136
      %1342 = vmatprep.subr.bf16.mxu0 0
      %1343 = vmatpush1.bf16.msra.mxu0 %v1135
      %1344 = vmatprep.subr.bf16.mxu0 0
      %1345 = vmatpush2.bf16.msra.mxu0 0
      %1346 = vmatprep.subr.bf16.mxu0 0
      %1347 = vmatpush2.bf16.msra.mxu0 0
      %1348 = vmatprep.subr.bf16.mxu0 0
      %1349 = vmatpush2.bf16.msra.mxu0 0
      %1350 = vmatprep.subr.bf16.mxu0 0
      %1351 = vmatpush2.bf16.msra.mxu0 0
      %1352 = vmatprep.subr.bf16.mxu0 0
      %1353 = vmatpush2.bf16.msra.mxu0 0
      %1354 = vmatprep.subr.bf16.mxu0 0
      %1355 = vmatpush2.bf16.msra.mxu0 0
      %1356 = vmatprep.subr.bf16.mxu0 0
      %1357 = vmatpush2.bf16.msra.mxu0 0
      %1358 = vmatprep.subr.bf16.mxu0 0
      %1359 = vmatpush2.bf16.msra.mxu0 0
      %1360 = vmatprep.mubr.bf16.mxu0 0
      %1361 = vmatmul.mubr.bf16.gmra.mxu0 %v848
      %v1362 = vpop.f32.mrf.mxu0
      %v1363 = vadd.f32 %v1202, %v1362
      %v1364 = vpop.f32.mrf.mxu0
      %v1365 = vpop.f32.mrf.mxu0
      %v1366 = vadd.f32 %v1205, %v1365
      %v1367 = vpop.f32.mrf.mxu0
      %1368 = vmatprep.mubr.bf16.mxu0 0
      %1369 = vmatmul.mubr.bf16.gmra.mxu0 %v851
      %v1370 = vpop.f32.mrf.mxu0
      %v1371 = vadd.f32 %v1210, %v1370
      %v1372 = vpop.f32.mrf.mxu0
      %v1373 = vpop.f32.mrf.mxu0
      %v1374 = vadd.f32 %v1213, %v1373
      %v1375 = vpop.f32.mrf.mxu0
      %1376 = vmatprep.mubr.bf16.mxu0 0
      %1377 = vmatmul.mubr.bf16.gmra.mxu0 %v854
      %v1378 = vpop.f32.mrf.mxu0
      %v1379 = vadd.f32 %v1218, %v1378
      %v1380 = vpop.f32.mrf.mxu0
      %v1381 = vpop.f32.mrf.mxu0
      %v1382 = vadd.f32 %v1221, %v1381
      %v1383 = vpop.f32.mrf.mxu0
      %1384 = vmatprep.mubr.bf16.mxu0 0
      %1385 = vmatmul.mubr.bf16.gmra.mxu0 %v857
      %v1386 = vpop.f32.mrf.mxu0
      %v1387 = vadd.f32 %v1226, %v1386
      %v1388 = vpop.f32.mrf.mxu0
      %v1389 = vpop.f32.mrf.mxu0
      %v1390 = vadd.f32 %v1229, %v1389
      %v1391 = vpop.f32.mrf.mxu0
      %1392 = vmatprep.mubr.bf16.mxu0 0
      %1393 = vmatmul.mubr.bf16.gmra.mxu0 %v860
      %v1394 = vpop.f32.mrf.mxu0
      %v1395 = vadd.f32 %v1234, %v1394
      %v1396 = vpop.f32.mrf.mxu0
      %v1397 = vpop.f32.mrf.mxu0
      %v1398 = vadd.f32 %v1237, %v1397
      %v1399 = vpop.f32.mrf.mxu0
      %1400 = vmatprep.mubr.bf16.mxu0 0
      %1401 = vmatmul.mubr.bf16.gmra.mxu0 %v863
      %v1402 = vpop.f32.mrf.mxu0
      %v1403 = vadd.f32 %v1242, %v1402
      %v1404 = vpop.f32.mrf.mxu0
      %v1405 = vpop.f32.mrf.mxu0
      %v1406 = vadd.f32 %v1245, %v1405
      %v1407 = vpop.f32.mrf.mxu0
      %1408 = vmatprep.mubr.bf16.mxu0 0
      %1409 = vmatmul.mubr.bf16.gmra.mxu0 %v866
      %v1410 = vpop.f32.mrf.mxu0
      %v1411 = vadd.f32 %v1250, %v1410
      %v1412 = vpop.f32.mrf.mxu0
      %v1413 = vpop.f32.mrf.mxu0
      %v1414 = vadd.f32 %v1253, %v1413
      %v1415 = vpop.f32.mrf.mxu0
      %1416 = vmatprep.mubr.bf16.mxu0 0
      %1417 = vmatmul.mubr.bf16.gmra.mxu0 %v869
      %v1418 = vpop.f32.mrf.mxu0
      %v1419 = vadd.f32 %v1258, %v1418
      %v1420 = vpop.f32.mrf.mxu0
      %v1421 = vpop.f32.mrf.mxu0
      %v1422 = vadd.f32 %v1261, %v1421
      %v1423 = vpop.f32.mrf.mxu0
      %1424 = vmatprep.mubr.bf16.mxu0 0
      %1425 = vmatmul.mubr.bf16.gmra.mxu0 %v872
      %v1426 = vpop.f32.mrf.mxu0
      %v1427 = vadd.f32 %v1266, %v1426
      %v1428 = vpop.f32.mrf.mxu0
      %v1429 = vpop.f32.mrf.mxu0
      %v1430 = vadd.f32 %v1269, %v1429
      %v1431 = vpop.f32.mrf.mxu0
      %1432 = vmatprep.mubr.bf16.mxu0 0
      %1433 = vmatmul.mubr.bf16.gmra.mxu0 %v875
      %v1434 = vpop.f32.mrf.mxu0
      %v1435 = vadd.f32 %v1274, %v1434
      %v1436 = vpop.f32.mrf.mxu0
      %v1437 = vpop.f32.mrf.mxu0
      %v1438 = vadd.f32 %v1277, %v1437
      %v1439 = vpop.f32.mrf.mxu0
      %1440 = vmatprep.mubr.bf16.mxu0 0
      %1441 = vmatmul.mubr.bf16.gmra.mxu0 %v878
      %v1442 = vpop.f32.mrf.mxu0
      %v1443 = vadd.f32 %v1282, %v1442
      %v1444 = vpop.f32.mrf.mxu0
      %v1445 = vpop.f32.mrf.mxu0
      %v1446 = vadd.f32 %v1285, %v1445
      %v1447 = vpop.f32.mrf.mxu0
      %1448 = vmatprep.mubr.bf16.mxu0 0
      %1449 = vmatmul.mubr.bf16.gmra.mxu0 %v881
      %v1450 = vpop.f32.mrf.mxu0
      %v1451 = vadd.f32 %v1290, %v1450
      %v1452 = vpop.f32.mrf.mxu0
      %v1453 = vpop.f32.mrf.mxu0
      %v1454 = vadd.f32 %v1293, %v1453
      %v1455 = vpop.f32.mrf.mxu0
      %1456 = vmatprep.mubr.bf16.mxu0 0
      %1457 = vmatmul.mubr.bf16.gmra.mxu0 %v884
      %v1458 = vpop.f32.mrf.mxu0
      %v1459 = vadd.f32 %v1298, %v1458
      %v1460 = vpop.f32.mrf.mxu0
      %v1461 = vpop.f32.mrf.mxu0
      %v1462 = vadd.f32 %v1301, %v1461
      %v1463 = vpop.f32.mrf.mxu0
      %1464 = vmatprep.mubr.bf16.mxu0 0
      %1465 = vmatmul.mubr.bf16.gmra.mxu0 %v887
      %v1466 = vpop.f32.mrf.mxu0
      %v1467 = vadd.f32 %v1306, %v1466
      %v1468 = vpop.f32.mrf.mxu0
      %v1469 = vpop.f32.mrf.mxu0
      %v1470 = vadd.f32 %v1309, %v1469
      %v1471 = vpop.f32.mrf.mxu0
      %1472 = vmatprep.mubr.bf16.mxu0 0
      %1473 = vmatmul.mubr.bf16.gmra.mxu0 %v890
      %v1474 = vpop.f32.mrf.mxu0
      %v1475 = vadd.f32 %v1314, %v1474
      %v1476 = vpop.f32.mrf.mxu0
      %v1477 = vpop.f32.mrf.mxu0
      %v1478 = vadd.f32 %v1317, %v1477
      %v1479 = vpop.f32.mrf.mxu0
      %1480 = vmatprep.mubr.bf16.mxu0 0
      %1481 = vmatmul.mubr.bf16.gmra.mxu0 %v972
      %v1482 = vpop.f32.mrf.mxu0
      %v1483 = vadd.f32 %v1322, %v1482
      %v1484 = vpop.f32.mrf.mxu0
      %v1485 = vpop.f32.mrf.mxu0
      %v1486 = vadd.f32 %v1325, %v1485
      %v1487 = vpop.f32.mrf.mxu0
      %1488 = vdwg.mxu0
      %v1537 = vunpack.c.l.b16 %v907
      %v1538 = vunpack.c.l.b16 %v908
      %v1539 = vunpack.c.l.b16 %v909
      %v1540 = vunpack.c.l.b16 %v910
      %v1541 = vunpack.c.l.b16 %v911
      %v1542 = vunpack.c.l.b16 %v912
      %v1543 = vunpack.c.l.b16 %v913
      %v1544 = vunpack.c.l.b16 %v914
      %v1545 = vunpack.c.l.b16 %v915
      %v1546 = vunpack.c.l.b16 %v916
      %v1547 = vunpack.c.l.b16 %v917
      %v1548 = vunpack.c.l.b16 %v918
      %v1549 = vunpack.c.l.b16 %v919
      %v1550 = vunpack.c.l.b16 %v920
      %v1551 = vunpack.c.l.b16 %v921
      %v1552 = vunpack.c.l.b16 %v922
      %v1553 = vunpack.c.l.b16 %v923
      %v1554 = vunpack.c.l.b16 %v924
      %v1555 = vunpack.c.l.b16 %v925
      %v1556 = vunpack.c.l.b16 %v926
      %v1557 = vunpack.c.l.b16 %v927
      %v1558 = vunpack.c.l.b16 %v928
      %v1559 = vunpack.c.l.b16 %v929
      %v1560 = vunpack.c.l.b16 %v930
      %v1561 = vunpack.c.l.b16 %v931
      %v1562 = vunpack.c.l.b16 %v932
      %v1563 = vunpack.c.l.b16 %v933
      %v1564 = vunpack.c.l.b16 %v934
      %v1565 = vunpack.c.l.b16 %v935
      %v1566 = vunpack.c.l.b16 %v936
      %v1567 = vunpack.c.l.b16 %v937
      %v1568 = vunpack.c.l.b16 %v938
      %v1569 = vunpack.c.l.b16 %v939
      %v1570 = vunpack.c.l.b16 %v940
      %v1571 = vunpack.c.l.b16 %v941
      %v1572 = vunpack.c.l.b16 %v942
      %v1573 = vunpack.c.l.b16 %v943
      %v1574 = vunpack.c.l.b16 %v944
      %v1575 = vunpack.c.l.b16 %v945
      %v1576 = vunpack.c.l.b16 %v946
      %v1577 = vunpack.c.l.b16 %v947
      %v1578 = vunpack.c.l.b16 %v948
      %v1579 = vunpack.c.l.b16 %v949
      %v1580 = vunpack.c.l.b16 %v950
      %v1581 = vunpack.c.l.b16 %v951
      %v1582 = vunpack.c.l.b16 %v952
      %v1583 = vunpack.c.l.b16 %v953
      %v1584 = vunpack.c.l.b16 %v954
      %v1585 = vpack.c.b16 %v1538, %v1537
      %v1586 = vpack.c.b16 %v1540, %v1539
      %v1587 = vpack.c.b16 %v1542, %v1541
      %v1588 = vpack.c.b16 %v1544, %v1543
      %v1589 = vpack.c.b16 %v1546, %v1545
      %v1590 = vpack.c.b16 %v1548, %v1547
      %v1591 = vpack.c.b16 %v1550, %v1549
      %v1592 = vpack.c.b16 %v1552, %v1551
      %v1593 = vpack.c.b16 %v1554, %v1553
      %v1594 = vpack.c.b16 %v1556, %v1555
      %v1595 = vpack.c.b16 %v1558, %v1557
      %v1596 = vpack.c.b16 %v1560, %v1559
      %v1597 = vpack.c.b16 %v1562, %v1561
      %v1598 = vpack.c.b16 %v1564, %v1563
      %v1599 = vpack.c.b16 %v1566, %v1565
      %v1600 = vpack.c.b16 %v1568, %v1567
      %v1601 = vpack.c.b16 %v1570, %v1569
      %v1602 = vpack.c.b16 %v1572, %v1571
      %v1603 = vpack.c.b16 %v1574, %v1573
      %v1604 = vpack.c.b16 %v1576, %v1575
      %v1605 = vpack.c.b16 %v1578, %v1577
      %v1606 = vpack.c.b16 %v1580, %v1579
      %v1607 = vpack.c.b16 %v1582, %v1581
      %v1608 = vpack.c.b16 %v1584, %v1583
      %1633 = vmatprep.subr.bf16.mxu0 0
      %1634 = vmatpush1.bf16.msra.mxu0 %v1592
      %1635 = vmatprep.subr.bf16.mxu0 0
      %1636 = vmatpush1.bf16.msra.mxu0 %v1591
      %1637 = vmatprep.subr.bf16.mxu0 0
      %1638 = vmatpush1.bf16.msra.mxu0 %v1590
      %1639 = vmatprep.subr.bf16.mxu0 0
      %1640 = vmatpush1.bf16.msra.mxu0 %v1589
      %1641 = vmatprep.subr.bf16.mxu0 0
      %1642 = vmatpush1.bf16.msra.mxu0 %v1588
      %1643 = vmatprep.subr.bf16.mxu0 0
      %1644 = vmatpush1.bf16.msra.mxu0 %v1587
      %1645 = vmatprep.subr.bf16.mxu0 0
      %1646 = vmatpush1.bf16.msra.mxu0 %v1586
      %1647 = vmatprep.subr.bf16.mxu0 0
      %1648 = vmatpush1.bf16.msra.mxu0 %v1585
      %1649 = vmatprep.subr.bf16.mxu0 0
      %1650 = vmatpush2.bf16.msra.mxu0 %v1600
      %1651 = vmatprep.subr.bf16.mxu0 0
      %1652 = vmatpush2.bf16.msra.mxu0 %v1599
      %1653 = vmatprep.subr.bf16.mxu0 0
      %1654 = vmatpush2.bf16.msra.mxu0 %v1598
      %1655 = vmatprep.subr.bf16.mxu0 0
      %1656 = vmatpush2.bf16.msra.mxu0 %v1597
      %1657 = vmatprep.subr.bf16.mxu0 0
      %1658 = vmatpush2.bf16.msra.mxu0 %v1596
      %1659 = vmatprep.subr.bf16.mxu0 0
      %1660 = vmatpush2.bf16.msra.mxu0 %v1595
      %1661 = vmatprep.subr.bf16.mxu0 0
      %1662 = vmatpush2.bf16.msra.mxu0 %v1594
      %1663 = vmatprep.subr.bf16.mxu0 0
      %1664 = vmatpush2.bf16.msra.mxu0 %v1593
      %1665 = vmatprep.mubr.bf16.mxu0 %v615
      %1666 = vmatmul.mubr.bf16.gmra.mxu0 0
      %v1667 = vpop.f32.mrf.mxu0
      %v1668 = vadd.f32 %v1363, %v1667
      %v1669 = vpop.f32.mrf.mxu0
      %v1670 = vpop.f32.mrf.mxu0
      %v1671 = vadd.f32 %v1366, %v1670
      %v1672 = vpop.f32.mrf.mxu0
      %1673 = vmatprep.mubr.bf16.mxu0 %v627
      %1674 = vmatmul.mubr.bf16.gmra.mxu0 %v575
      %v1675 = vpop.f32.mrf.mxu0
      %v1676 = vadd.f32 %v1371, %v1675
      %v1677 = vpop.f32.mrf.mxu0
      %v1678 = vpop.f32.mrf.mxu0
      %v1679 = vadd.f32 %v1374, %v1678
      %v1680 = vpop.f32.mrf.mxu0
      %1681 = vmatprep.mubr.bf16.mxu0 %v639
      %1682 = vmatmul.mubr.bf16.gmra.mxu0 %v576
      %v1683 = vpop.f32.mrf.mxu0
      %v1684 = vadd.f32 %v1379, %v1683
      %v1685 = vpop.f32.mrf.mxu0
      %v1686 = vpop.f32.mrf.mxu0
      %v1687 = vadd.f32 %v1382, %v1686
      %v1688 = vpop.f32.mrf.mxu0
      %1689 = vmatprep.mubr.bf16.mxu0 %v651
      %1690 = vmatmul.mubr.bf16.gmra.mxu0 %v577
      %v1691 = vpop.f32.mrf.mxu0
      %v1692 = vadd.f32 %v1387, %v1691
      %v1693 = vpop.f32.mrf.mxu0
      %v1694 = vpop.f32.mrf.mxu0
      %v1695 = vadd.f32 %v1390, %v1694
      %v1696 = vpop.f32.mrf.mxu0
      %1697 = vmatprep.mubr.bf16.mxu0 %v663
      %1698 = vmatmul.mubr.bf16.gmra.mxu0 %v578
      %v1699 = vpop.f32.mrf.mxu0
      %v1700 = vadd.f32 %v1395, %v1699
      %v1701 = vpop.f32.mrf.mxu0
      %v1702 = vpop.f32.mrf.mxu0
      %v1703 = vadd.f32 %v1398, %v1702
      %v1704 = vpop.f32.mrf.mxu0
      %1705 = vmatprep.mubr.bf16.mxu0 %v675
      %1706 = vmatmul.mubr.bf16.gmra.mxu0 %v579
      %v1707 = vpop.f32.mrf.mxu0
      %v1708 = vadd.f32 %v1403, %v1707
      %v1709 = vpop.f32.mrf.mxu0
      %v1710 = vpop.f32.mrf.mxu0
      %v1711 = vadd.f32 %v1406, %v1710
      %v1712 = vpop.f32.mrf.mxu0
      %1713 = vmatprep.mubr.bf16.mxu0 %v687
      %1714 = vmatmul.mubr.bf16.gmra.mxu0 %v580
      %v1715 = vpop.f32.mrf.mxu0
      %v1716 = vadd.f32 %v1411, %v1715
      %v1717 = vpop.f32.mrf.mxu0
      %v1718 = vpop.f32.mrf.mxu0
      %v1719 = vadd.f32 %v1414, %v1718
      %v1720 = vpop.f32.mrf.mxu0
      %1721 = vmatprep.mubr.bf16.mxu0 %v699
      %1722 = vmatmul.mubr.bf16.gmra.mxu0 %v581
      %v1723 = vpop.f32.mrf.mxu0
      %v1724 = vadd.f32 %v1419, %v1723
      %v1725 = vpop.f32.mrf.mxu0
      %v1726 = vpop.f32.mrf.mxu0
      %v1727 = vadd.f32 %v1422, %v1726
      %v1728 = vpop.f32.mrf.mxu0
      %1729 = vmatprep.mubr.bf16.mxu0 %v711
      %1730 = vmatmul.mubr.bf16.gmra.mxu0 %v582
      %v1731 = vpop.f32.mrf.mxu0
      %v1732 = vadd.f32 %v1427, %v1731
      %v1733 = vpop.f32.mrf.mxu0
      %v1734 = vpop.f32.mrf.mxu0
      %v1735 = vadd.f32 %v1430, %v1734
      %v1736 = vpop.f32.mrf.mxu0
      %1737 = vmatprep.mubr.bf16.mxu0 %v723
      %1738 = vmatmul.mubr.bf16.gmra.mxu0 %v583
      %v1739 = vpop.f32.mrf.mxu0
      %v1740 = vadd.f32 %v1435, %v1739
      %v1741 = vpop.f32.mrf.mxu0
      %v1742 = vpop.f32.mrf.mxu0
      %v1743 = vadd.f32 %v1438, %v1742
      %v1744 = vpop.f32.mrf.mxu0
      %1745 = vmatprep.mubr.bf16.mxu0 %v735
      %1746 = vmatmul.mubr.bf16.gmra.mxu0 %v584
      %v1747 = vpop.f32.mrf.mxu0
      %v1748 = vadd.f32 %v1443, %v1747
      %v1749 = vpop.f32.mrf.mxu0
      %v1750 = vpop.f32.mrf.mxu0
      %v1751 = vadd.f32 %v1446, %v1750
      %v1752 = vpop.f32.mrf.mxu0
      %1753 = vmatprep.mubr.bf16.mxu0 %v747
      %1754 = vmatmul.mubr.bf16.gmra.mxu0 %v585
      %v1755 = vpop.f32.mrf.mxu0
      %v1756 = vadd.f32 %v1451, %v1755
      %v1757 = vpop.f32.mrf.mxu0
      %v1758 = vpop.f32.mrf.mxu0
      %v1759 = vadd.f32 %v1454, %v1758
      %v1760 = vpop.f32.mrf.mxu0
      %1761 = vmatprep.mubr.bf16.mxu0 %v759
      %1762 = vmatmul.mubr.bf16.gmra.mxu0 %v586
      %v1763 = vpop.f32.mrf.mxu0
      %v1764 = vadd.f32 %v1459, %v1763
      %v1765 = vpop.f32.mrf.mxu0
      %v1766 = vpop.f32.mrf.mxu0
      %v1767 = vadd.f32 %v1462, %v1766
      %v1768 = vpop.f32.mrf.mxu0
      %1769 = vmatprep.mubr.bf16.mxu0 %v771
      %1770 = vmatmul.mubr.bf16.gmra.mxu0 %v587
      %v1771 = vpop.f32.mrf.mxu0
      %v1772 = vadd.f32 %v1467, %v1771
      %v1773 = vpop.f32.mrf.mxu0
      %v1774 = vpop.f32.mrf.mxu0
      %v1775 = vadd.f32 %v1470, %v1774
      %v1776 = vpop.f32.mrf.mxu0
      %1777 = vmatprep.mubr.bf16.mxu0 %v783
      %1778 = vmatmul.mubr.bf16.gmra.mxu0 %v588
      %v1779 = vpop.f32.mrf.mxu0
      %v1780 = vadd.f32 %v1475, %v1779
      %v1781 = vpop.f32.mrf.mxu0
      %v1782 = vpop.f32.mrf.mxu0
      %v1783 = vadd.f32 %v1478, %v1782
      %v1784 = vpop.f32.mrf.mxu0
      %1785 = vmatprep.mubr.bf16.mxu0 %v795
      %1786 = vmatmul.mubr.bf16.gmra.mxu0 %v589
      %v1787 = vpop.f32.mrf.mxu0
      %v1788 = vadd.f32 %v1483, %v1787
      %v1789 = vpop.f32.mrf.mxu0
      %v1790 = vpop.f32.mrf.mxu0
      %v1791 = vadd.f32 %v1486, %v1790
      %v1792 = vpop.f32.mrf.mxu0
      %1793 = vdwg.mxu0
      %1794 = vmatprep.subr.bf16.mxu0 0
      %1795 = vmatpush1.bf16.msra.mxu0 %v1608
      %1796 = vmatprep.subr.bf16.mxu0 0
      %1797 = vmatpush1.bf16.msra.mxu0 %v1607
      %1798 = vmatprep.subr.bf16.mxu0 0
      %1799 = vmatpush1.bf16.msra.mxu0 %v1606
      %1800 = vmatprep.subr.bf16.mxu0 0
      %1801 = vmatpush1.bf16.msra.mxu0 %v1605
      %1802 = vmatprep.subr.bf16.mxu0 0
      %1803 = vmatpush1.bf16.msra.mxu0 %v1604
      %1804 = vmatprep.subr.bf16.mxu0 0
      %1805 = vmatpush1.bf16.msra.mxu0 %v1603
      %1806 = vmatprep.subr.bf16.mxu0 0
      %1807 = vmatpush1.bf16.msra.mxu0 %v1602
      %1808 = vmatprep.subr.bf16.mxu0 0
      %1809 = vmatpush1.bf16.msra.mxu0 %v1601
      %1810 = vmatprep.subr.bf16.mxu0 0
      %1811 = vmatpush2.bf16.msra.mxu0 0
      %1812 = vmatprep.subr.bf16.mxu0 0
      %1813 = vmatpush2.bf16.msra.mxu0 0
      %1814 = vmatprep.subr.bf16.mxu0 0
      %1815 = vmatpush2.bf16.msra.mxu0 0
      %1816 = vmatprep.subr.bf16.mxu0 0
      %1817 = vmatpush2.bf16.msra.mxu0 0
      %1818 = vmatprep.subr.bf16.mxu0 0
      %1819 = vmatpush2.bf16.msra.mxu0 0
      %1820 = vmatprep.subr.bf16.mxu0 0
      %1821 = vmatpush2.bf16.msra.mxu0 0
      %1822 = vmatprep.subr.bf16.mxu0 0
      %1823 = vmatpush2.bf16.msra.mxu0 0
      %1824 = vmatprep.subr.bf16.mxu0 0
      %1825 = vmatpush2.bf16.msra.mxu0 0
      %1826 = vmatprep.mubr.bf16.mxu0 0
      %1827 = vmatmul.mubr.bf16.gmra.mxu0 %v845
      %v1828 = vpop.f32.mrf.mxu0
      %v1829 = vadd.f32 %v1668, %v1828
      %v1830 = vpop.f32.mrf.mxu0
      %v1831 = vpop.f32.mrf.mxu0
      %v1832 = vadd.f32 %v1671, %v1831
      %v1833 = vpop.f32.mrf.mxu0
      %1834 = vmatprep.mubr.bf16.mxu0 0
      %1835 = vmatmul.mubr.bf16.gmra.mxu0 %v848
      %v1836 = vpop.f32.mrf.mxu0
      %v1837 = vadd.f32 %v1676, %v1836
      %v1838 = vpop.f32.mrf.mxu0
      %v1839 = vpop.f32.mrf.mxu0
      %v1840 = vadd.f32 %v1679, %v1839
      %v1841 = vpop.f32.mrf.mxu0
      %1842 = vmatprep.mubr.bf16.mxu0 0
      %1843 = vmatmul.mubr.bf16.gmra.mxu0 %v851
      %v1844 = vpop.f32.mrf.mxu0
      %v1845 = vadd.f32 %v1684, %v1844
      %v1846 = vpop.f32.mrf.mxu0
      %v1847 = vpop.f32.mrf.mxu0
      %v1848 = vadd.f32 %v1687, %v1847
      %v1849 = vpop.f32.mrf.mxu0
      %1850 = vmatprep.mubr.bf16.mxu0 0
      %1851 = vmatmul.mubr.bf16.gmra.mxu0 %v854
      %v1852 = vpop.f32.mrf.mxu0
      %v1853 = vadd.f32 %v1692, %v1852
      %v1854 = vpop.f32.mrf.mxu0
      %v1855 = vpop.f32.mrf.mxu0
      %v1856 = vadd.f32 %v1695, %v1855
      %v1857 = vpop.f32.mrf.mxu0
      %1858 = vmatprep.mubr.bf16.mxu0 0
      %1859 = vmatmul.mubr.bf16.gmra.mxu0 %v857
      %v1860 = vpop.f32.mrf.mxu0
      %v1861 = vadd.f32 %v1700, %v1860
      %v1862 = vpop.f32.mrf.mxu0
      %v1863 = vpop.f32.mrf.mxu0
      %v1864 = vadd.f32 %v1703, %v1863
      %v1865 = vpop.f32.mrf.mxu0
      %1866 = vmatprep.mubr.bf16.mxu0 0
      %1867 = vmatmul.mubr.bf16.gmra.mxu0 %v860
      %v1868 = vpop.f32.mrf.mxu0
      %v1869 = vadd.f32 %v1708, %v1868
      %v1870 = vpop.f32.mrf.mxu0
      %v1871 = vpop.f32.mrf.mxu0
      %v1872 = vadd.f32 %v1711, %v1871
      %v1873 = vpop.f32.mrf.mxu0
      %1874 = vmatprep.mubr.bf16.mxu0 0
      %1875 = vmatmul.mubr.bf16.gmra.mxu0 %v863
      %v1876 = vpop.f32.mrf.mxu0
      %v1877 = vadd.f32 %v1716, %v1876
      %v1878 = vpop.f32.mrf.mxu0
      %v1879 = vpop.f32.mrf.mxu0
      %v1880 = vadd.f32 %v1719, %v1879
      %v1881 = vpop.f32.mrf.mxu0
      %1882 = vmatprep.mubr.bf16.mxu0 0
      %1883 = vmatmul.mubr.bf16.gmra.mxu0 %v866
      %v1884 = vpop.f32.mrf.mxu0
      %v1885 = vadd.f32 %v1724, %v1884
      %v1886 = vpop.f32.mrf.mxu0
      %v1887 = vpop.f32.mrf.mxu0
      %v1888 = vadd.f32 %v1727, %v1887
      %v1889 = vpop.f32.mrf.mxu0
      %1890 = vmatprep.mubr.bf16.mxu0 0
      %1891 = vmatmul.mubr.bf16.gmra.mxu0 %v869
      %v1892 = vpop.f32.mrf.mxu0
      %v1893 = vadd.f32 %v1732, %v1892
      %v1894 = vpop.f32.mrf.mxu0
      %v1895 = vpop.f32.mrf.mxu0
      %v1896 = vadd.f32 %v1735, %v1895
      %v1897 = vpop.f32.mrf.mxu0
      %1898 = vmatprep.mubr.bf16.mxu0 0
      %1899 = vmatmul.mubr.bf16.gmra.mxu0 %v872
      %v1900 = vpop.f32.mrf.mxu0
      %v1901 = vadd.f32 %v1740, %v1900
      %v1902 = vpop.f32.mrf.mxu0
      %v1903 = vpop.f32.mrf.mxu0
      %v1904 = vadd.f32 %v1743, %v1903
      %v1905 = vpop.f32.mrf.mxu0
      %1906 = vmatprep.mubr.bf16.mxu0 0
      %1907 = vmatmul.mubr.bf16.gmra.mxu0 %v875
      %v1908 = vpop.f32.mrf.mxu0
      %v1909 = vadd.f32 %v1748, %v1908
      %v1910 = vpop.f32.mrf.mxu0
      %v1911 = vpop.f32.mrf.mxu0
      %v1912 = vadd.f32 %v1751, %v1911
      %v1913 = vpop.f32.mrf.mxu0
      %1914 = vmatprep.mubr.bf16.mxu0 0
      %1915 = vmatmul.mubr.bf16.gmra.mxu0 %v878
      %v1916 = vpop.f32.mrf.mxu0
      %v1917 = vadd.f32 %v1756, %v1916
      %v1918 = vpop.f32.mrf.mxu0
      %v1919 = vpop.f32.mrf.mxu0
      %v1920 = vadd.f32 %v1759, %v1919
      %v1921 = vpop.f32.mrf.mxu0
      %1922 = vmatprep.mubr.bf16.mxu0 0
      %1923 = vmatmul.mubr.bf16.gmra.mxu0 %v881
      %v1924 = vpop.f32.mrf.mxu0
      %v1925 = vadd.f32 %v1764, %v1924
      %v1926 = vpop.f32.mrf.mxu0
      %v1927 = vpop.f32.mrf.mxu0
      %v1928 = vadd.f32 %v1767, %v1927
      %v1929 = vpop.f32.mrf.mxu0
      %1930 = vmatprep.mubr.bf16.mxu0 0
      %1931 = vmatmul.mubr.bf16.gmra.mxu0 %v884
      %v1932 = vpop.f32.mrf.mxu0
      %v1933 = vadd.f32 %v1772, %v1932
      %v1934 = vpop.f32.mrf.mxu0
      %v1935 = vpop.f32.mrf.mxu0
      %v1936 = vadd.f32 %v1775, %v1935
      %v1937 = vpop.f32.mrf.mxu0
      %1938 = vmatprep.mubr.bf16.mxu0 0
      %1939 = vmatmul.mubr.bf16.gmra.mxu0 %v887
      %v1940 = vpop.f32.mrf.mxu0
      %v1941 = vadd.f32 %v1780, %v1940
      %v1942 = vpop.f32.mrf.mxu0
      %v1943 = vpop.f32.mrf.mxu0
      %v1944 = vadd.f32 %v1783, %v1943
      %v1945 = vpop.f32.mrf.mxu0
      %1946 = vmatprep.mubr.bf16.mxu0 0
      %1947 = vmatmul.mubr.bf16.gmra.mxu0 %v890
      %v1948 = vpop.f32.mrf.mxu0
      %v1949 = vadd.f32 %v1788, %v1948
      %v1950 = vpop.f32.mrf.mxu0
      %v1951 = vpop.f32.mrf.mxu0
      %v1952 = vadd.f32 %v1791, %v1951
      %v1953 = vpop.f32.mrf.mxu0
      %1954 = vdwg.mxu0
      %s1955 = scalar_lea.vmem %s3, 384
      %v1956 = vld [vmem:[%s1955] sm:$0xf]
      %v1957 = vld [vmem:[%s1955 + $0x4] sm:$0xf]
      %v1958 = vld [vmem:[%s1955 + $0x8] sm:$0xf]
      %v1959 = vld [vmem:[%s1955 + $0xc] sm:$0xf]
      %v1960 = vld [vmem:[%s1955 + $0x10] sm:$0xf]
      %v1961 = vld [vmem:[%s1955 + $0x14] sm:$0xf]
      %v1962 = vld [vmem:[%s1955 + $0x18] sm:$0xf]
      %v1963 = vld [vmem:[%s1955 + $0x1c] sm:$0xf]
      %v1964 = vld [vmem:[%s1955 + $0x20] sm:$0xf]
      %v1965 = vld [vmem:[%s1955 + $0x24] sm:$0xf]
      %v1966 = vld [vmem:[%s1955 + $0x28] sm:$0xf]
      %v1967 = vld [vmem:[%s1955 + $0x2c] sm:$0xf]
      %v1968 = vld [vmem:[%s1955 + $0x30] sm:$0xf]
      %v1969 = vld [vmem:[%s1955 + $0x34] sm:$0xf]
      %v1970 = vld [vmem:[%s1955 + $0x38] sm:$0xf]
      %v1971 = vld [vmem:[%s1955 + $0x3c] sm:$0xf]
      %v1972 = vld [vmem:[%s1955 + $0x40] sm:$0xf]
      %v1973 = vld [vmem:[%s1955 + $0x44] sm:$0xf]
      %v1974 = vld [vmem:[%s1955 + $0x48] sm:$0xf]
      %v1975 = vld [vmem:[%s1955 + $0x4c] sm:$0xf]
      %v1976 = vld [vmem:[%s1955 + $0x50] sm:$0xf]
      %v1977 = vld [vmem:[%s1955 + $0x54] sm:$0xf]
      %v1978 = vld [vmem:[%s1955 + $0x58] sm:$0xf]
      %v1979 = vld [vmem:[%s1955 + $0x5c] sm:$0xf]
      %v1980 = vld [vmem:[%s1955 + $0x60] sm:$0xf]
      %v1981 = vld [vmem:[%s1955 + $0x64] sm:$0xf]
      %v1982 = vld [vmem:[%s1955 + $0x68] sm:$0xf]
      %v1983 = vld [vmem:[%s1955 + $0x6c] sm:$0xf]
      %v1984 = vld [vmem:[%s1955 + $0x70] sm:$0xf]
      %v1985 = vld [vmem:[%s1955 + $0x74] sm:$0xf]
      %v1986 = vld [vmem:[%s1955 + $0x78] sm:$0xf]
      %v1987 = vld [vmem:[%s1955 + $0x7c] sm:$0xf]
      %v1988 = vld [vmem:[%s1955 + $0x80] sm:$0xf]
      %v1989 = vld [vmem:[%s1955 + $0x84] sm:$0xf]
      %v1990 = vld [vmem:[%s1955 + $0x88] sm:$0xf]
      %v1991 = vld [vmem:[%s1955 + $0x8c] sm:$0xf]
      %v1992 = vld [vmem:[%s1955 + $0x90] sm:$0xf]
      %v1993 = vld [vmem:[%s1955 + $0x94] sm:$0xf]
      %v1994 = vld [vmem:[%s1955 + $0x98] sm:$0xf]
      %v1995 = vld [vmem:[%s1955 + $0x9c] sm:$0xf]
      %v1996 = vld [vmem:[%s1955 + $0xa0] sm:$0xf]
      %v1997 = vld [vmem:[%s1955 + $0xa4] sm:$0xf]
      %v1998 = vld [vmem:[%s1955 + $0xa8] sm:$0xf]
      %v1999 = vld [vmem:[%s1955 + $0xac] sm:$0xf]
      %v2000 = vld [vmem:[%s1955 + $0xb0] sm:$0xf]
      %v2001 = vld [vmem:[%s1955 + $0xb4] sm:$0xf]
      %v2002 = vld [vmem:[%s1955 + $0xb8] sm:$0xf]
      %v2003 = vld [vmem:[%s1955 + $0xbc] sm:$0xf]
      %v2052 = vunpack.c.l.b16 %v1956
      %v2053 = vunpack.c.l.b16 %v1957
      %v2054 = vunpack.c.l.b16 %v1958
      %v2055 = vunpack.c.l.b16 %v1959
      %v2056 = vunpack.c.l.b16 %v1960
      %v2057 = vunpack.c.l.b16 %v1961
      %v2058 = vunpack.c.l.b16 %v1962
      %v2059 = vunpack.c.l.b16 %v1963
      %v2060 = vunpack.c.l.b16 %v1964
      %v2061 = vunpack.c.l.b16 %v1965
      %v2062 = vunpack.c.l.b16 %v1966
      %v2063 = vunpack.c.l.b16 %v1967
      %v2064 = vunpack.c.l.b16 %v1968
      %v2065 = vunpack.c.l.b16 %v1969
      %v2066 = vunpack.c.l.b16 %v1970
      %v2067 = vunpack.c.l.b16 %v1971
      %v2068 = vunpack.c.l.b16 %v1972
      %v2069 = vunpack.c.l.b16 %v1973
      %v2070 = vunpack.c.l.b16 %v1974
      %v2071 = vunpack.c.l.b16 %v1975
      %v2072 = vunpack.c.l.b16 %v1976
      %v2073 = vunpack.c.l.b16 %v1977
      %v2074 = vunpack.c.l.b16 %v1978
      %v2075 = vunpack.c.l.b16 %v1979
      %v2076 = vunpack.c.l.b16 %v1980
      %v2077 = vunpack.c.l.b16 %v1981
      %v2078 = vunpack.c.l.b16 %v1982
      %v2079 = vunpack.c.l.b16 %v1983
      %v2080 = vunpack.c.l.b16 %v1984
      %v2081 = vunpack.c.l.b16 %v1985
      %v2082 = vunpack.c.l.b16 %v1986
      %v2083 = vunpack.c.l.b16 %v1987
      %v2084 = vunpack.c.l.b16 %v1988
      %v2085 = vunpack.c.l.b16 %v1989
      %v2086 = vunpack.c.l.b16 %v1990
      %v2087 = vunpack.c.l.b16 %v1991
      %v2088 = vunpack.c.l.b16 %v1992
      %v2089 = vunpack.c.l.b16 %v1993
      %v2090 = vunpack.c.l.b16 %v1994
      %v2091 = vunpack.c.l.b16 %v1995
      %v2092 = vunpack.c.l.b16 %v1996
      %v2093 = vunpack.c.l.b16 %v1997
      %v2094 = vunpack.c.l.b16 %v1998
      %v2095 = vunpack.c.l.b16 %v1999
      %v2096 = vunpack.c.l.b16 %v2000
      %v2097 = vunpack.c.l.b16 %v2001
      %v2098 = vunpack.c.l.b16 %v2002
      %v2099 = vunpack.c.l.b16 %v2003
      %v2100 = vpack.c.b16 %v2053, %v2052
      %v2101 = vpack.c.b16 %v2055, %v2054
      %v2102 = vpack.c.b16 %v2057, %v2056
      %v2103 = vpack.c.b16 %v2059, %v2058
      %v2104 = vpack.c.b16 %v2061, %v2060
      %v2105 = vpack.c.b16 %v2063, %v2062
      %v2106 = vpack.c.b16 %v2065, %v2064
      %v2107 = vpack.c.b16 %v2067, %v2066
      %v2108 = vpack.c.b16 %v2069, %v2068
      %v2109 = vpack.c.b16 %v2071, %v2070
      %v2110 = vpack.c.b16 %v2073, %v2072
      %v2111 = vpack.c.b16 %v2075, %v2074
      %v2112 = vpack.c.b16 %v2077, %v2076
      %v2113 = vpack.c.b16 %v2079, %v2078
      %v2114 = vpack.c.b16 %v2081, %v2080
      %v2115 = vpack.c.b16 %v2083, %v2082
      %v2116 = vpack.c.b16 %v2085, %v2084
      %v2117 = vpack.c.b16 %v2087, %v2086
      %v2118 = vpack.c.b16 %v2089, %v2088
      %v2119 = vpack.c.b16 %v2091, %v2090
      %v2120 = vpack.c.b16 %v2093, %v2092
      %v2121 = vpack.c.b16 %v2095, %v2094
      %v2122 = vpack.c.b16 %v2097, %v2096
      %v2123 = vpack.c.b16 %v2099, %v2098
      %2148 = vmatprep.subr.bf16.mxu0 0
      %2149 = vmatpush1.bf16.msra.mxu0 %v2107
      %2150 = vmatprep.subr.bf16.mxu0 0
      %2151 = vmatpush1.bf16.msra.mxu0 %v2106
      %2152 = vmatprep.subr.bf16.mxu0 0
      %2153 = vmatpush1.bf16.msra.mxu0 %v2105
      %2154 = vmatprep.subr.bf16.mxu0 0
      %2155 = vmatpush1.bf16.msra.mxu0 %v2104
      %2156 = vmatprep.subr.bf16.mxu0 0
      %2157 = vmatpush1.bf16.msra.mxu0 %v2103
      %2158 = vmatprep.subr.bf16.mxu0 0
      %2159 = vmatpush1.bf16.msra.mxu0 %v2102
      %2160 = vmatprep.subr.bf16.mxu0 0
      %2161 = vmatpush1.bf16.msra.mxu0 %v2101
      %2162 = vmatprep.subr.bf16.mxu0 0
      %2163 = vmatpush1.bf16.msra.mxu0 %v2100
      %2164 = vmatprep.subr.bf16.mxu0 0
      %2165 = vmatpush2.bf16.msra.mxu0 %v2115
      %2166 = vmatprep.subr.bf16.mxu0 0
      %2167 = vmatpush2.bf16.msra.mxu0 %v2114
      %2168 = vmatprep.subr.bf16.mxu0 0
      %2169 = vmatpush2.bf16.msra.mxu0 %v2113
      %2170 = vmatprep.subr.bf16.mxu0 0
      %2171 = vmatpush2.bf16.msra.mxu0 %v2112
      %2172 = vmatprep.subr.bf16.mxu0 0
      %2173 = vmatpush2.bf16.msra.mxu0 %v2111
      %2174 = vmatprep.subr.bf16.mxu0 0
      %2175 = vmatpush2.bf16.msra.mxu0 %v2110
      %2176 = vmatprep.subr.bf16.mxu0 0
      %2177 = vmatpush2.bf16.msra.mxu0 %v2109
      %2178 = vmatprep.subr.bf16.mxu0 0
      %2179 = vmatpush2.bf16.msra.mxu0 %v2108
      %2180 = vmatprep.mubr.bf16.mxu0 %v639
      %2181 = vmatmul.mubr.bf16.gmra.mxu0 %v576
      %v2182 = vpop.f32.mrf.mxu0
      %v2183 = vadd.f32 0.0, %v2182
      %v2184 = vpop.f32.mrf.mxu0
      %v2185 = vpop.f32.mrf.mxu0
      %v2186 = vadd.f32 0.0, %v2185
      %v2187 = vpop.f32.mrf.mxu0
      %2188 = vmatprep.mubr.bf16.mxu0 %v651
      %2189 = vmatmul.mubr.bf16.gmra.mxu0 %v577
      %v2190 = vpop.f32.mrf.mxu0
      %v2191 = vadd.f32 0.0, %v2190
      %v2192 = vpop.f32.mrf.mxu0
      %v2193 = vpop.f32.mrf.mxu0
      %v2194 = vadd.f32 0.0, %v2193
      %v2195 = vpop.f32.mrf.mxu0
      %2196 = vmatprep.mubr.bf16.mxu0 %v663
      %2197 = vmatmul.mubr.bf16.gmra.mxu0 %v578
      %v2198 = vpop.f32.mrf.mxu0
      %v2199 = vadd.f32 0.0, %v2198
      %v2200 = vpop.f32.mrf.mxu0
      %v2201 = vpop.f32.mrf.mxu0
      %v2202 = vadd.f32 0.0, %v2201
      %v2203 = vpop.f32.mrf.mxu0
      %2204 = vmatprep.mubr.bf16.mxu0 %v675
      %2205 = vmatmul.mubr.bf16.gmra.mxu0 %v579
      %v2206 = vpop.f32.mrf.mxu0
      %v2207 = vadd.f32 0.0, %v2206
      %v2208 = vpop.f32.mrf.mxu0
      %v2209 = vpop.f32.mrf.mxu0
      %v2210 = vadd.f32 0.0, %v2209
      %v2211 = vpop.f32.mrf.mxu0
      %2212 = vmatprep.mubr.bf16.mxu0 %v687
      %2213 = vmatmul.mubr.bf16.gmra.mxu0 %v580
      %v2214 = vpop.f32.mrf.mxu0
      %v2215 = vadd.f32 0.0, %v2214
      %v2216 = vpop.f32.mrf.mxu0
      %v2217 = vpop.f32.mrf.mxu0
      %v2218 = vadd.f32 0.0, %v2217
      %v2219 = vpop.f32.mrf.mxu0
      %2220 = vmatprep.mubr.bf16.mxu0 %v699
      %2221 = vmatmul.mubr.bf16.gmra.mxu0 %v581
      %v2222 = vpop.f32.mrf.mxu0
      %v2223 = vadd.f32 0.0, %v2222
      %v2224 = vpop.f32.mrf.mxu0
      %v2225 = vpop.f32.mrf.mxu0
      %v2226 = vadd.f32 0.0, %v2225
      %v2227 = vpop.f32.mrf.mxu0
      %2228 = vmatprep.mubr.bf16.mxu0 %v711
      %2229 = vmatmul.mubr.bf16.gmra.mxu0 %v582
      %v2230 = vpop.f32.mrf.mxu0
      %v2231 = vadd.f32 0.0, %v2230
      %v2232 = vpop.f32.mrf.mxu0
      %v2233 = vpop.f32.mrf.mxu0
      %v2234 = vadd.f32 0.0, %v2233
      %v2235 = vpop.f32.mrf.mxu0
      %2236 = vmatprep.mubr.bf16.mxu0 %v723
      %2237 = vmatmul.mubr.bf16.gmra.mxu0 %v583
      %v2238 = vpop.f32.mrf.mxu0
      %v2239 = vadd.f32 0.0, %v2238
      %v2240 = vpop.f32.mrf.mxu0
      %v2241 = vpop.f32.mrf.mxu0
      %v2242 = vadd.f32 0.0, %v2241
      %v2243 = vpop.f32.mrf.mxu0
      %2244 = vmatprep.mubr.bf16.mxu0 %v735
      %2245 = vmatmul.mubr.bf16.gmra.mxu0 %v584
      %v2246 = vpop.f32.mrf.mxu0
      %v2247 = vadd.f32 0.0, %v2246
      %v2248 = vpop.f32.mrf.mxu0
      %v2249 = vpop.f32.mrf.mxu0
      %v2250 = vadd.f32 0.0, %v2249
      %v2251 = vpop.f32.mrf.mxu0
      %2252 = vmatprep.mubr.bf16.mxu0 %v747
      %2253 = vmatmul.mubr.bf16.gmra.mxu0 %v585
      %v2254 = vpop.f32.mrf.mxu0
      %v2255 = vadd.f32 0.0, %v2254
      %v2256 = vpop.f32.mrf.mxu0
      %v2257 = vpop.f32.mrf.mxu0
      %v2258 = vadd.f32 0.0, %v2257
      %v2259 = vpop.f32.mrf.mxu0
      %2260 = vmatprep.mubr.bf16.mxu0 %v759
      %2261 = vmatmul.mubr.bf16.gmra.mxu0 %v586
      %v2262 = vpop.f32.mrf.mxu0
      %v2263 = vadd.f32 0.0, %v2262
      %v2264 = vpop.f32.mrf.mxu0
      %v2265 = vpop.f32.mrf.mxu0
      %v2266 = vadd.f32 0.0, %v2265
      %v2267 = vpop.f32.mrf.mxu0
      %2268 = vmatprep.mubr.bf16.mxu0 %v771
      %2269 = vmatmul.mubr.bf16.gmra.mxu0 %v587
      %v2270 = vpop.f32.mrf.mxu0
      %v2271 = vadd.f32 0.0, %v2270
      %v2272 = vpop.f32.mrf.mxu0
      %v2273 = vpop.f32.mrf.mxu0
      %v2274 = vadd.f32 0.0, %v2273
      %v2275 = vpop.f32.mrf.mxu0
      %2276 = vmatprep.mubr.bf16.mxu0 %v783
      %2277 = vmatmul.mubr.bf16.gmra.mxu0 %v588
      %v2278 = vpop.f32.mrf.mxu0
      %v2279 = vadd.f32 0.0, %v2278
      %v2280 = vpop.f32.mrf.mxu0
      %v2281 = vpop.f32.mrf.mxu0
      %v2282 = vadd.f32 0.0, %v2281
      %v2283 = vpop.f32.mrf.mxu0
      %2284 = vmatprep.mubr.bf16.mxu0 %v795
      %2285 = vmatmul.mubr.bf16.gmra.mxu0 %v589
      %v2286 = vpop.f32.mrf.mxu0
      %v2287 = vadd.f32 0.0, %v2286
      %v2288 = vpop.f32.mrf.mxu0
      %v2289 = vpop.f32.mrf.mxu0
      %v2290 = vadd.f32 0.0, %v2289
      %v2291 = vpop.f32.mrf.mxu0
      %2292 = vmatprep.mubr.bf16.mxu0 %v966
      %2293 = vmatmul.mubr.bf16.gmra.mxu0 %v590
      %v2294 = vpop.f32.mrf.mxu0
      %v2295 = vadd.f32 0.0, %v2294
      %v2296 = vpop.f32.mrf.mxu0
      %v2297 = vpop.f32.mrf.mxu0
      %v2298 = vadd.f32 0.0, %v2297
      %v2299 = vpop.f32.mrf.mxu0
      %2300 = vmatprep.mubr.bf16.mxu0 %v615
      %2301 = vmatmul.mubr.bf16.gmra.mxu0 0
      %v2302 = vpop.f32.mrf.mxu0
      %v2303 = vadd.f32 0.0, %v2302
      %v2304 = vpop.f32.mrf.mxu0
      %v2305 = vpop.f32.mrf.mxu0
      %v2306 = vadd.f32 0.0, %v2305
      %v2307 = vpop.f32.mrf.mxu0
      %2308 = vdwg.mxu0
      %2309 = vmatprep.subr.bf16.mxu0 0
      %2310 = vmatpush1.bf16.msra.mxu0 %v2123
      %2311 = vmatprep.subr.bf16.mxu0 0
      %2312 = vmatpush1.bf16.msra.mxu0 %v2122
      %2313 = vmatprep.subr.bf16.mxu0 0
      %2314 = vmatpush1.bf16.msra.mxu0 %v2121
      %2315 = vmatprep.subr.bf16.mxu0 0
      %2316 = vmatpush1.bf16.msra.mxu0 %v2120
      %2317 = vmatprep.subr.bf16.mxu0 0
      %2318 = vmatpush1.bf16.msra.mxu0 %v2119
      %2319 = vmatprep.subr.bf16.mxu0 0
      %2320 = vmatpush1.bf16.msra.mxu0 %v2118
      %2321 = vmatprep.subr.bf16.mxu0 0
      %2322 = vmatpush1.bf16.msra.mxu0 %v2117
      %2323 = vmatprep.subr.bf16.mxu0 0
      %2324 = vmatpush1.bf16.msra.mxu0 %v2116
      %2325 = vmatprep.subr.bf16.mxu0 0
      %2326 = vmatpush2.bf16.msra.mxu0 0
      %2327 = vmatprep.subr.bf16.mxu0 0
      %2328 = vmatpush2.bf16.msra.mxu0 0
      %2329 = vmatprep.subr.bf16.mxu0 0
      %2330 = vmatpush2.bf16.msra.mxu0 0
      %2331 = vmatprep.subr.bf16.mxu0 0
      %2332 = vmatpush2.bf16.msra.mxu0 0
      %2333 = vmatprep.subr.bf16.mxu0 0
      %2334 = vmatpush2.bf16.msra.mxu0 0
      %2335 = vmatprep.subr.bf16.mxu0 0
      %2336 = vmatpush2.bf16.msra.mxu0 0
      %2337 = vmatprep.subr.bf16.mxu0 0
      %2338 = vmatpush2.bf16.msra.mxu0 0
      %2339 = vmatprep.subr.bf16.mxu0 0
      %2340 = vmatpush2.bf16.msra.mxu0 0
      %2341 = vmatprep.mubr.bf16.mxu0 0
      %2342 = vmatmul.mubr.bf16.gmra.mxu0 %v851
      %v2343 = vpop.f32.mrf.mxu0
      %v2344 = vadd.f32 %v2183, %v2343
      %v2345 = vpop.f32.mrf.mxu0
      %v2346 = vpop.f32.mrf.mxu0
      %v2347 = vadd.f32 %v2186, %v2346
      %v2348 = vpop.f32.mrf.mxu0
      %2349 = vmatprep.mubr.bf16.mxu0 0
      %2350 = vmatmul.mubr.bf16.gmra.mxu0 %v854
      %v2351 = vpop.f32.mrf.mxu0
      %v2352 = vadd.f32 %v2191, %v2351
      %v2353 = vpop.f32.mrf.mxu0
      %v2354 = vpop.f32.mrf.mxu0
      %v2355 = vadd.f32 %v2194, %v2354
      %v2356 = vpop.f32.mrf.mxu0
      %2357 = vmatprep.mubr.bf16.mxu0 0
      %2358 = vmatmul.mubr.bf16.gmra.mxu0 %v857
      %v2359 = vpop.f32.mrf.mxu0
      %v2360 = vadd.f32 %v2199, %v2359
      %v2361 = vpop.f32.mrf.mxu0
      %v2362 = vpop.f32.mrf.mxu0
      %v2363 = vadd.f32 %v2202, %v2362
      %v2364 = vpop.f32.mrf.mxu0
      %2365 = vmatprep.mubr.bf16.mxu0 0
      %2366 = vmatmul.mubr.bf16.gmra.mxu0 %v860
      %v2367 = vpop.f32.mrf.mxu0
      %v2368 = vadd.f32 %v2207, %v2367
      %v2369 = vpop.f32.mrf.mxu0
      %v2370 = vpop.f32.mrf.mxu0
      %v2371 = vadd.f32 %v2210, %v2370
      %v2372 = vpop.f32.mrf.mxu0
      %2373 = vmatprep.mubr.bf16.mxu0 0
      %2374 = vmatmul.mubr.bf16.gmra.mxu0 %v863
      %v2375 = vpop.f32.mrf.mxu0
      %v2376 = vadd.f32 %v2215, %v2375
      %v2377 = vpop.f32.mrf.mxu0
      %v2378 = vpop.f32.mrf.mxu0
      %v2379 = vadd.f32 %v2218, %v2378
      %v2380 = vpop.f32.mrf.mxu0
      %2381 = vmatprep.mubr.bf16.mxu0 0
      %2382 = vmatmul.mubr.bf16.gmra.mxu0 %v866
      %v2383 = vpop.f32.mrf.mxu0
      %v2384 = vadd.f32 %v2223, %v2383
      %v2385 = vpop.f32.mrf.mxu0
      %v2386 = vpop.f32.mrf.mxu0
      %v2387 = vadd.f32 %v2226, %v2386
      %v2388 = vpop.f32.mrf.mxu0
      %2389 = vmatprep.mubr.bf16.mxu0 0
      %2390 = vmatmul.mubr.bf16.gmra.mxu0 %v869
      %v2391 = vpop.f32.mrf.mxu0
      %v2392 = vadd.f32 %v2231, %v2391
      %v2393 = vpop.f32.mrf.mxu0
      %v2394 = vpop.f32.mrf.mxu0
      %v2395 = vadd.f32 %v2234, %v2394
      %v2396 = vpop.f32.mrf.mxu0
      %2397 = vmatprep.mubr.bf16.mxu0 0
      %2398 = vmatmul.mubr.bf16.gmra.mxu0 %v872
      %v2399 = vpop.f32.mrf.mxu0
      %v2400 = vadd.f32 %v2239, %v2399
      %v2401 = vpop.f32.mrf.mxu0
      %v2402 = vpop.f32.mrf.mxu0
      %v2403 = vadd.f32 %v2242, %v2402
      %v2404 = vpop.f32.mrf.mxu0
      %2405 = vmatprep.mubr.bf16.mxu0 0
      %2406 = vmatmul.mubr.bf16.gmra.mxu0 %v875
      %v2407 = vpop.f32.mrf.mxu0
      %v2408 = vadd.f32 %v2247, %v2407
      %v2409 = vpop.f32.mrf.mxu0
      %v2410 = vpop.f32.mrf.mxu0
      %v2411 = vadd.f32 %v2250, %v2410
      %v2412 = vpop.f32.mrf.mxu0
      %2413 = vmatprep.mubr.bf16.mxu0 0
      %2414 = vmatmul.mubr.bf16.gmra.mxu0 %v878
      %v2415 = vpop.f32.mrf.mxu0
      %v2416 = vadd.f32 %v2255, %v2415
      %v2417 = vpop.f32.mrf.mxu0
      %v2418 = vpop.f32.mrf.mxu0
      %v2419 = vadd.f32 %v2258, %v2418
      %v2420 = vpop.f32.mrf.mxu0
      %2421 = vmatprep.mubr.bf16.mxu0 0
      %2422 = vmatmul.mubr.bf16.gmra.mxu0 %v881
      %v2423 = vpop.f32.mrf.mxu0
      %v2424 = vadd.f32 %v2263, %v2423
      %v2425 = vpop.f32.mrf.mxu0
      %v2426 = vpop.f32.mrf.mxu0
      %v2427 = vadd.f32 %v2266, %v2426
      %v2428 = vpop.f32.mrf.mxu0
      %2429 = vmatprep.mubr.bf16.mxu0 0
      %2430 = vmatmul.mubr.bf16.gmra.mxu0 %v884
      %v2431 = vpop.f32.mrf.mxu0
      %v2432 = vadd.f32 %v2271, %v2431
      %v2433 = vpop.f32.mrf.mxu0
      %v2434 = vpop.f32.mrf.mxu0
      %v2435 = vadd.f32 %v2274, %v2434
      %v2436 = vpop.f32.mrf.mxu0
      %2437 = vmatprep.mubr.bf16.mxu0 0
      %2438 = vmatmul.mubr.bf16.gmra.mxu0 %v887
      %v2439 = vpop.f32.mrf.mxu0
      %v2440 = vadd.f32 %v2279, %v2439
      %v2441 = vpop.f32.mrf.mxu0
      %v2442 = vpop.f32.mrf.mxu0
      %v2443 = vadd.f32 %v2282, %v2442
      %v2444 = vpop.f32.mrf.mxu0
      %2445 = vmatprep.mubr.bf16.mxu0 0
      %2446 = vmatmul.mubr.bf16.gmra.mxu0 %v890
      %v2447 = vpop.f32.mrf.mxu0
      %v2448 = vadd.f32 %v2287, %v2447
      %v2449 = vpop.f32.mrf.mxu0
      %v2450 = vpop.f32.mrf.mxu0
      %v2451 = vadd.f32 %v2290, %v2450
      %v2452 = vpop.f32.mrf.mxu0
      %2453 = vmatprep.mubr.bf16.mxu0 0
      %2454 = vmatmul.mubr.bf16.gmra.mxu0 %v972
      %v2455 = vpop.f32.mrf.mxu0
      %v2456 = vadd.f32 %v2295, %v2455
      %v2457 = vpop.f32.mrf.mxu0
      %v2458 = vpop.f32.mrf.mxu0
      %v2459 = vadd.f32 %v2298, %v2458
      %v2460 = vpop.f32.mrf.mxu0
      %2461 = vmatprep.mubr.bf16.mxu0 0
      %2462 = vmatmul.mubr.bf16.gmra.mxu0 %v845
      %v2463 = vpop.f32.mrf.mxu0
      %v2464 = vadd.f32 %v2303, %v2463
      %v2465 = vpop.f32.mrf.mxu0
      %v2466 = vpop.f32.mrf.mxu0
      %v2467 = vadd.f32 %v2306, %v2466
      %v2468 = vpop.f32.mrf.mxu0
      %2469 = vdwg.mxu0
      %v2470 = vadd.f32 %v1829, %v2344
      %v2471 = vadd.f32 %v1832, %v2347
      %v2472 = vadd.f32 %v1837, %v2352
      %v2473 = vadd.f32 %v1840, %v2355
      %v2474 = vadd.f32 %v1845, %v2360
      %v2475 = vadd.f32 %v1848, %v2363
      %v2476 = vadd.f32 %v1853, %v2368
      %v2477 = vadd.f32 %v1856, %v2371
      %v2478 = vadd.f32 %v1861, %v2376
      %v2479 = vadd.f32 %v1864, %v2379
      %v2480 = vadd.f32 %v1869, %v2384
      %v2481 = vadd.f32 %v1872, %v2387
      %v2482 = vadd.f32 %v1877, %v2392
      %v2483 = vadd.f32 %v1880, %v2395
      %v2484 = vadd.f32 %v1885, %v2400
      %v2485 = vadd.f32 %v1888, %v2403
      %v2486 = vadd.f32 %v1893, %v2408
      %v2487 = vadd.f32 %v1896, %v2411
      %v2488 = vadd.f32 %v1901, %v2416
      %v2489 = vadd.f32 %v1904, %v2419
      %v2490 = vadd.f32 %v1909, %v2424
      %v2491 = vadd.f32 %v1912, %v2427
      %v2492 = vadd.f32 %v1917, %v2432
      %v2493 = vadd.f32 %v1920, %v2435
      %v2494 = vadd.f32 %v1925, %v2440
      %v2495 = vadd.f32 %v1928, %v2443
      %v2496 = vadd.f32 %v1933, %v2448
      %v2497 = vadd.f32 %v1936, %v2451
      %v2498 = vadd.f32 %v1941, %v2456
      %v2499 = vadd.f32 %v1944, %v2459
      %v2500 = vadd.f32 %v1949, %v2464
      %v2501 = vadd.f32 %v1952, %v2467
      %v2502 = vpack.c.bf16 %v2471, %v2470
      %v2503 = vpack.c.bf16 %v2473, %v2472
      %v2504 = vpack.c.bf16 %v2475, %v2474
      %v2505 = vpack.c.bf16 %v2477, %v2476
      %v2506 = vpack.c.bf16 %v2479, %v2478
      %v2507 = vpack.c.bf16 %v2481, %v2480
      %v2508 = vpack.c.bf16 %v2483, %v2482
      %v2509 = vpack.c.bf16 %v2485, %v2484
      %v2510 = vpack.c.bf16 %v2487, %v2486
      %v2511 = vpack.c.bf16 %v2489, %v2488
      %v2512 = vpack.c.bf16 %v2491, %v2490
      %v2513 = vpack.c.bf16 %v2493, %v2492
      %v2514 = vpack.c.bf16 %v2495, %v2494
      %v2515 = vpack.c.bf16 %v2497, %v2496
      %v2516 = vpack.c.bf16 %v2499, %v2498
      %v2517 = vpack.c.bf16 %v2501, %v2500
      %v2534 = vunpack.c.l.b16 %v2502
      %v2535 = vunpack.c.h.b16 %v2502
      %v2536 = vunpack.c.l.b16 %v2503
      %v2537 = vunpack.c.h.b16 %v2503
      %v2538 = vunpack.c.l.b16 %v2504
      %v2539 = vunpack.c.h.b16 %v2504
      %v2540 = vunpack.c.l.b16 %v2505
      %v2541 = vunpack.c.h.b16 %v2505
      %v2542 = vunpack.c.l.b16 %v2506
      %v2543 = vunpack.c.h.b16 %v2506
      %v2544 = vunpack.c.l.b16 %v2507
      %v2545 = vunpack.c.h.b16 %v2507
      %v2546 = vunpack.c.l.b16 %v2508
      %v2547 = vunpack.c.h.b16 %v2508
      %v2548 = vunpack.c.l.b16 %v2509
      %v2549 = vunpack.c.h.b16 %v2509
      %v2550 = vunpack.c.l.b16 %v2510
      %v2551 = vunpack.c.h.b16 %v2510
      %v2552 = vunpack.c.l.b16 %v2511
      %v2553 = vunpack.c.h.b16 %v2511
      %v2554 = vunpack.c.l.b16 %v2512
      %v2555 = vunpack.c.h.b16 %v2512
      %v2556 = vunpack.c.l.b16 %v2513
      %v2557 = vunpack.c.h.b16 %v2513
      %v2558 = vunpack.c.l.b16 %v2514
      %v2559 = vunpack.c.h.b16 %v2514
      %v2560 = vunpack.c.l.b16 %v2515
      %v2561 = vunpack.c.h.b16 %v2515
      %v2562 = vunpack.c.l.b16 %v2516
      %v2563 = vunpack.c.h.b16 %v2516
      %v2564 = vunpack.c.l.b16 %v2517
      %v2565 = vunpack.c.h.b16 %v2517
      %v2566 = vpack.c.b16 %v2534, %v2534
      %v2567 = vpack.c.b16 %v2535, %v2535
      %v2568 = vpack.c.b16 %v2536, %v2536
      %v2569 = vpack.c.b16 %v2537, %v2537
      %v2570 = vpack.c.b16 %v2538, %v2538
      %v2571 = vpack.c.b16 %v2539, %v2539
      %v2572 = vpack.c.b16 %v2540, %v2540
      %v2573 = vpack.c.b16 %v2541, %v2541
      %v2574 = vpack.c.b16 %v2542, %v2542
      %v2575 = vpack.c.b16 %v2543, %v2543
      %v2576 = vpack.c.b16 %v2544, %v2544
      %v2577 = vpack.c.b16 %v2545, %v2545
      %v2578 = vpack.c.b16 %v2546, %v2546
      %v2579 = vpack.c.b16 %v2547, %v2547
      %v2580 = vpack.c.b16 %v2548, %v2548
      %v2581 = vpack.c.b16 %v2549, %v2549
      %v2582 = vpack.c.b16 %v2550, %v2550
      %v2583 = vpack.c.b16 %v2551, %v2551
      %v2584 = vpack.c.b16 %v2552, %v2552
      %v2585 = vpack.c.b16 %v2553, %v2553
      %v2586 = vpack.c.b16 %v2554, %v2554
      %v2587 = vpack.c.b16 %v2555, %v2555
      %v2588 = vpack.c.b16 %v2556, %v2556
      %v2589 = vpack.c.b16 %v2557, %v2557
      %v2590 = vpack.c.b16 %v2558, %v2558
      %v2591 = vpack.c.b16 %v2559, %v2559
      %v2592 = vpack.c.b16 %v2560, %v2560
      %v2593 = vpack.c.b16 %v2561, %v2561
      %v2594 = vpack.c.b16 %v2562, %v2562
      %v2595 = vpack.c.b16 %v2563, %v2563
      %v2596 = vpack.c.b16 %v2564, %v2564
      %v2597 = vpack.c.b16 %v2565, %v2565
      %2630 = vst [vmem:[%s231] sm:$0xf] %v2566
      %2631 = vst [vmem:[%s231 + $0x4] sm:$0xf] %v2567
      %2632 = vst [vmem:[%s231 + $0x8] sm:$0xf] %v2568
      %2633 = vst [vmem:[%s231 + $0xc] sm:$0xf] %v2569
      %2634 = vst [vmem:[%s231 + $0x10] sm:$0xf] %v2570
      %2635 = vst [vmem:[%s231 + $0x14] sm:$0xf] %v2571
      %2636 = vst [vmem:[%s231 + $0x18] sm:$0xf] %v2572
      %2637 = vst [vmem:[%s231 + $0x1c] sm:$0xf] %v2573
      %2638 = vst [vmem:[%s231 + $0x20] sm:$0xf] %v2574
      %2639 = vst [vmem:[%s231 + $0x24] sm:$0xf] %v2575
      %2640 = vst [vmem:[%s231 + $0x28] sm:$0xf] %v2576
      %2641 = vst [vmem:[%s231 + $0x2c] sm:$0xf] %v2577
      %2642 = vst [vmem:[%s231 + $0x30] sm:$0xf] %v2578
      %2643 = vst [vmem:[%s231 + $0x34] sm:$0xf] %v2579
      %2644 = vst [vmem:[%s231 + $0x38] sm:$0xf] %v2580
      %2645 = vst [vmem:[%s231 + $0x3c] sm:$0xf] %v2581
      %2646 = vst [vmem:[%s231 + $0x40] sm:$0xf] %v2582
      %2647 = vst [vmem:[%s231 + $0x44] sm:$0xf] %v2583
      %2648 = vst [vmem:[%s231 + $0x48] sm:$0xf] %v2584
      %2649 = vst [vmem:[%s231 + $0x4c] sm:$0xf] %v2585
      %2650 = vst [vmem:[%s231 + $0x50] sm:$0xf] %v2586
      %2651 = vst [vmem:[%s231 + $0x54] sm:$0xf] %v2587
      %2652 = vst [vmem:[%s231 + $0x58] sm:$0xf] %v2588
      %2653 = vst [vmem:[%s231 + $0x5c] sm:$0xf] %v2589
      %2654 = vst [vmem:[%s231 + $0x60] sm:$0xf] %v2590
      %2655 = vst [vmem:[%s231 + $0x64] sm:$0xf] %v2591
      %2656 = vst [vmem:[%s231 + $0x68] sm:$0xf] %v2592
      %2657 = vst [vmem:[%s231 + $0x6c] sm:$0xf] %v2593
      %2658 = vst [vmem:[%s231 + $0x70] sm:$0xf] %v2594
      %2659 = vst [vmem:[%s231 + $0x74] sm:$0xf] %v2595
      %2660 = vst [vmem:[%s231 + $0x78] sm:$0xf] %v2596
      %2661 = vst [vmem:[%s231 + $0x7c] sm:$0xf] %v2597
      %v2662 = vadd.f32 %v2470, %v2471
      %v2663 = vadd.f32 %v2662, %v2472
      %v2664 = vadd.f32 %v2663, %v2473
      %v2665 = vadd.f32 %v2664, %v2474
      %v2666 = vadd.f32 %v2665, %v2475
      %v2667 = vadd.f32 %v2666, %v2476
      %v2668 = vadd.f32 %v2667, %v2477
      %v2669 = vadd.f32 %v2668, %v2478
      %v2670 = vadd.f32 %v2669, %v2479
      %v2671 = vadd.f32 %v2670, %v2480
      %v2672 = vadd.f32 %v2671, %v2481
      %v2673 = vadd.f32 %v2672, %v2482
      %v2674 = vadd.f32 %v2673, %v2483
      %v2675 = vadd.f32 %v2674, %v2484
      %v2676 = vadd.f32 %v2675, %v2485
      %v2677 = vadd.f32 %v2676, %v2486
      %v2678 = vadd.f32 %v2677, %v2487
      %v2679 = vadd.f32 %v2678, %v2488
      %v2680 = vadd.f32 %v2679, %v2489
      %v2681 = vadd.f32 %v2680, %v2490
      %v2682 = vadd.f32 %v2681, %v2491
      %v2683 = vadd.f32 %v2682, %v2492
      %v2684 = vadd.f32 %v2683, %v2493
      %v2685 = vadd.f32 %v2684, %v2494
      %v2686 = vadd.f32 %v2685, %v2495
      %v2687 = vadd.f32 %v2686, %v2496
      %v2688 = vadd.f32 %v2687, %v2497
      %v2689 = vadd.f32 %v2688, %v2498
      %v2690 = vadd.f32 %v2689, %v2499
      %v2691 = vadd.f32 %v2690, %v2500
      %v2692 = vadd.f32 %v2691, %v2501
      %v2693 = vrot.slane %v2692, 4
      %v2694 = vadd.f32 %v2692, %v2693
      %v2695 = vrot.slane %v2694, 2
      %v2696 = vadd.f32 %v2694, %v2695
      %v2697 = vrot.slane %v2696, 1
      %v2698 = vadd.f32 %v2696, %v2697
      %v2699 = vmul.f32 %v2470, %v2470
      %v2700 = vmul.f32 %v2471, %v2471
      %v2701 = vmul.f32 %v2472, %v2472
      %v2702 = vmul.f32 %v2473, %v2473
      %v2703 = vmul.f32 %v2474, %v2474
      %v2704 = vmul.f32 %v2475, %v2475
      %v2705 = vmul.f32 %v2476, %v2476
      %v2706 = vmul.f32 %v2477, %v2477
      %v2707 = vmul.f32 %v2478, %v2478
      %v2708 = vmul.f32 %v2479, %v2479
      %v2709 = vmul.f32 %v2480, %v2480
      %v2710 = vmul.f32 %v2481, %v2481
      %v2711 = vmul.f32 %v2482, %v2482
      %v2712 = vmul.f32 %v2483, %v2483
      %v2713 = vmul.f32 %v2484, %v2484
      %v2714 = vmul.f32 %v2485, %v2485
      %v2715 = vmul.f32 %v2486, %v2486
      %v2716 = vmul.f32 %v2487, %v2487
      %v2717 = vmul.f32 %v2488, %v2488
      %v2718 = vmul.f32 %v2489, %v2489
      %v2719 = vmul.f32 %v2490, %v2490
      %v2720 = vmul.f32 %v2491, %v2491
      %v2721 = vmul.f32 %v2492, %v2492
      %v2722 = vmul.f32 %v2493, %v2493
      %v2723 = vmul.f32 %v2494, %v2494
      %v2724 = vmul.f32 %v2495, %v2495
      %v2725 = vmul.f32 %v2496, %v2496
      %v2726 = vmul.f32 %v2497, %v2497
      %v2727 = vmul.f32 %v2498, %v2498
      %v2728 = vmul.f32 %v2499, %v2499
      %v2729 = vmul.f32 %v2500, %v2500
      %v2730 = vmul.f32 %v2501, %v2501
      %v2731 = vadd.f32 %v2699, %v2700
      %v2732 = vadd.f32 %v2731, %v2701
      %v2733 = vadd.f32 %v2732, %v2702
      %v2734 = vadd.f32 %v2733, %v2703
      %v2735 = vadd.f32 %v2734, %v2704
      %v2736 = vadd.f32 %v2735, %v2705
      %v2737 = vadd.f32 %v2736, %v2706
      %v2738 = vadd.f32 %v2737, %v2707
      %v2739 = vadd.f32 %v2738, %v2708
      %v2740 = vadd.f32 %v2739, %v2709
      %v2741 = vadd.f32 %v2740, %v2710
      %v2742 = vadd.f32 %v2741, %v2711
      %v2743 = vadd.f32 %v2742, %v2712
      %v2744 = vadd.f32 %v2743, %v2713
      %v2745 = vadd.f32 %v2744, %v2714
      %v2746 = vadd.f32 %v2745, %v2715
      %v2747 = vadd.f32 %v2746, %v2716
      %v2748 = vadd.f32 %v2747, %v2717
      %v2749 = vadd.f32 %v2748, %v2718
      %v2750 = vadd.f32 %v2749, %v2719
      %v2751 = vadd.f32 %v2750, %v2720
      %v2752 = vadd.f32 %v2751, %v2721
      %v2753 = vadd.f32 %v2752, %v2722
      %v2754 = vadd.f32 %v2753, %v2723
      %v2755 = vadd.f32 %v2754, %v2724
      %v2756 = vadd.f32 %v2755, %v2725
      %v2757 = vadd.f32 %v2756, %v2726
      %v2758 = vadd.f32 %v2757, %v2727
      %v2759 = vadd.f32 %v2758, %v2728
      %v2760 = vadd.f32 %v2759, %v2729
      %v2761 = vadd.f32 %v2760, %v2730
      %v2762 = vrot.slane %v2761, 4
      %v2763 = vadd.f32 %v2761, %v2762
      %v2764 = vrot.slane %v2763, 2
      %v2765 = vadd.f32 %v2763, %v2764
      %v2766 = vrot.slane %v2765, 1
      %v2767 = vadd.f32 %v2765, %v2766
      %vm2768 = vcmask 1043456
      %v2769 = vsel %vm2768, %v2698, %v2767
      %2770 = vst [vmem:[%s236] sm:$0xff] %v2769
      %s2771 = smul.u32 32, %s17
      %p2772 = scmp.lt.s32.totalorder %s2771, 63
      %s2773 = scalar_select %p2772, %s2771, 63
      %s2774 = smul.addr %s2773, 4
      %s2775 = scalar_lea.vmem %s4, %s2774
      %p2776 = scmp.lt.s32.totalorder %s17, 1
      %s2777 = scalar_select %p2776, %s17, 1
      %s2778 = smul.addr %s2777, 8
      %s2779 = scalar_lea.vmem %s5, %s2778
      // Predicated region
      $region37: #{bottleneck_forward.5} parent=35 // pred_check
        %p2780 = pneg %p124
      $region38: #{bottleneck_forward.5} parent=35 // pred_check_branch
        %2782 = sbr.rel (%p2780) target = $region40
      $region39: #{bottleneck_forward.5} parent=35 // pred_region
        %s2783 = smul.u32 32, %s17
      $region40: #{bottleneck_forward.5} parent=35 // pred_fallthru
        _
      // Predicated region
      $region41: #{bottleneck_forward.5} parent=35 // pred_check
        %p2784 = pneg %p150
      $region42: #{bottleneck_forward.5} parent=35 // pred_check_branch
        %2786 = sbr.rel (%p2784) target = $region44
      $region43: #{bottleneck_forward.5} parent=35 // pred_region
        _
      $region44: #{bottleneck_forward.5} parent=35 // pred_fallthru
        _
    $region36: #{bottleneck_forward.5} parent=5 // pred_fallthru
      _
    %p2787 = scmp.le.s32.totalorder 2, %s12
    // Predicated region
    $region45: #{bottleneck_forward.5} parent=5 // pred_check
      %p2788 = pneg %p2787
    $region46: #{bottleneck_forward.5} parent=5 // pred_check_branch
      %2790 = sbr.rel (%p2788) target = $region48
    $region47: #{bottleneck_forward.5} parent=5 // pred_region
      %s2791 = ssub.s32 %s12, 2
      // Predicated region
      $region49: #{bottleneck_forward.5} parent=47 // pred_check
        %p2792 = pneg %p130
      $region50: #{bottleneck_forward.5} parent=47 // pred_check_branch
        %2794 = sbr.rel (%p2792) target = $region52
      $region51: #{bottleneck_forward.5} parent=47 // pred_region
        %s2795 = smul.u32 32, %s18
        %p2796 = scmp.lt.s32.totalorder %s2795, 63
        %s2797 = scalar_select %p2796, %s2795, 63
        %s2798 = smul.addr %s2797, 4
        %s2799 = scalar_lea.vmem %s4, %s2798
      $region52: #{bottleneck_forward.5} parent=47 // pred_fallthru
        _
      // Predicated region
      $region53: #{bottleneck_forward.5} parent=47 // pred_check
        %p2800 = pneg %p156
      $region54: #{bottleneck_forward.5} parent=47 // pred_check_branch
        %2802 = sbr.rel (%p2800) target = $region56
      $region55: #{bottleneck_forward.5} parent=47 // pred_region
        %p2803 = scmp.lt.s32.totalorder %s18, 1
        %s2804 = scalar_select %p2803, %s18, 1
        %s2805 = smul.addr %s2804, 8
        %s2806 = scalar_lea.vmem %s5, %s2805
      $region56: #{bottleneck_forward.5} parent=47 // pred_fallthru
        _
    $region48: #{bottleneck_forward.5} parent=5 // pred_fallthru
      _
  $region6: #{bottleneck_forward.5} parent=0 // loop_footer
    %s16 = sadd.s32 1, %s12
  $region7: #{bottleneck_forward.5} parent=0 // loop_footer_branch
    %11 = sbr.rel target = $region3
  $region8: #{bottleneck_forward.5} parent=0 // loop_exit
    _

</llo_original>
